<compile_context>
chip_gen: v5e
topology: v5e:2x2
jax: 0.10.0
libtpu: 0.0.40
codegen_flags: <defaults>
</compile_context>

<pallas_src>
import jax
import jax.numpy as jnp
from jax.experimental import pallas as pl
from jax.experimental.pallas import tpu as pltpu


EMBED_DIM = 512
HIDDEN_DIM = 1024
OUTPUT_DIM = 128
NUM_PROXIES = 8
ROW_TILE = 256          # full-height MXU tiles on v6e/v7x; 2x128 passes on v5e


def _round_up(n, m):
    return ((n + m - 1) // m) * m


def _gnn_mlp_kernel(feats_ref, w1_ref, b1_ref, w2_ref, b2_ref, wfc_ref, bfc_ref,
                    preds_ref, feats_out_ref):
    """One row-tile of nodes through Linear->ReLU->Linear->ReLU->Linear(fc).

    Matmuls take bf16 operands (MXU-native), accumulate in f32; bias add and
    ReLU happen in f32; outputs are stored in f32.
    """
    x = feats_ref[...]                                                # (tm, 512) bf16

    # layers[0]: Linear(512, 1024) + ReLU   (Dropout = identity in eval)
    h1 = jnp.dot(x, w1_ref[...], preferred_element_type=jnp.float32)  # (tm, 1024) f32
    h1 = jnp.maximum(h1 + b1_ref[...], 0.0)

    # layers[3]: Linear(1024, 512) + ReLU
    f2 = jnp.dot(h1.astype(jnp.bfloat16), w2_ref[...],
                 preferred_element_type=jnp.float32)                  # (tm, 512) f32
    f2 = jnp.maximum(f2 + b2_ref[...], 0.0)
    feats_out_ref[...] = f2.astype(feats_out_ref.dtype)

    # fc: Linear(512, output_dim)
    p = jnp.dot(f2.astype(jnp.bfloat16), wfc_ref[...],
                preferred_element_type=jnp.float32)                   # (tm, 128) f32
    preds_ref[...] = (p + bfc_ref[...]).astype(preds_ref.dtype)


def gnn_forward(x, params):
    """JAX wrapper reproducing GNNModel.forward(x) (return_proxies=False)."""
    proxies = params["proxies"]                      # (num_proxies, embed_dim)
    num_proxies = proxies.shape[0]
    M = num_proxies + x.shape[0]                     # total rows (proxies + nodes)

    # Row tiling: big tiles for throughput, single full-extent tile when small.
    if _round_up(M, 8) <= ROW_TILE:
        tile = _round_up(M, 8)
        padded_M = tile
    else:
        tile = ROW_TILE
        padded_M = _round_up(M, ROW_TILE)

    # feats = torch.cat([proxies, x]) + row padding, folded into ONE concatenate,
    # cast once to bf16 for the MXU path.
    parts = [proxies.astype(jnp.bfloat16), x.astype(jnp.bfloat16)]
    if padded_M > M:
        parts.append(jnp.zeros((padded_M - M, EMBED_DIM), jnp.bfloat16))
    feats0 = jnp.concatenate(parts, axis=0)          # (padded_M, 512) bf16

    # Weights pre-transposed to (in, out); cast to bf16 (biases stay f32).
    w1 = params["w1"].astype(jnp.bfloat16)           # (512, 1024)
    w2 = params["w2"].astype(jnp.bfloat16)           # (1024, 512)
    wfc = params["wfc"].astype(jnp.bfloat16)         # (512, 128)
    b1, b2, bfc = params["b1"], params["b2"], params["bfc"]

    grid = (padded_M // tile,)
    preds, feats = pl.pallas_call(
        _gnn_mlp_kernel,
        out_shape=(
            jax.ShapeDtypeStruct((padded_M, OUTPUT_DIM), jnp.float32),
            jax.ShapeDtypeStruct((padded_M, EMBED_DIM), jnp.float32),
        ),
        grid_spec=pltpu.PrefetchScalarGridSpec(
            num_scalar_prefetch=0,
            grid=grid,
            in_specs=[
                pl.BlockSpec((tile, EMBED_DIM), lambda i: (i, 0)),        # feats tile
                pl.BlockSpec((EMBED_DIM, HIDDEN_DIM), lambda i: (0, 0)),  # w1 (resident)
                pl.BlockSpec((1, HIDDEN_DIM), lambda i: (0, 0)),          # b1
                pl.BlockSpec((HIDDEN_DIM, EMBED_DIM), lambda i: (0, 0)),  # w2
                pl.BlockSpec((1, EMBED_DIM), lambda i: (0, 0)),           # b2
                pl.BlockSpec((EMBED_DIM, OUTPUT_DIM), lambda i: (0, 0)),  # wfc
                pl.BlockSpec((1, OUTPUT_DIM), lambda i: (0, 0)),          # bfc
            ],
            out_specs=[
                pl.BlockSpec((tile, OUTPUT_DIM), lambda i: (i, 0)),       # preds
                pl.BlockSpec((tile, EMBED_DIM), lambda i: (i, 0)),        # feats out
            ],
        ),
        compiler_params=pltpu.CompilerParams(
            dimension_semantics=("parallel",),        # row axis shards across TCs (v7x)
        ),
    )(feats0, w1, b1, w2, b2, wfc, bfc)

    # return (preds[num_proxies:], feats[num_proxies:]) — also drops row padding.
    return preds[num_proxies:M], feats[num_proxies:M]


def init_params(key):
    """Deterministic parameter init matching the torch module's shapes."""
    ks = jax.random.split(key, 7)

    def linear(kw, fan_in, fan_out):
        # kaiming-uniform-like bound; stored pre-transposed (in, out)
        bound = 1.0 / jnp.sqrt(fan_in)
        return jax.random.uniform(kw, (fan_in, fan_out), jnp.float32, -bound, bound)

    def bias(kb, fan_in, fan_out):
        bound = 1.0 / jnp.sqrt(fan_in)
        return jax.random.uniform(kb, (1, fan_out), jnp.float32, -bound, bound)

    return {
        "proxies": jax.random.normal(ks[0], (NUM_PROXIES, EMBED_DIM), jnp.float32),
        "w1": linear(ks[1], EMBED_DIM, HIDDEN_DIM),
        "b1": bias(ks[2], EMBED_DIM, HIDDEN_DIM),
        "w2": linear(ks[3], HIDDEN_DIM, EMBED_DIM),
        "b2": bias(ks[4], HIDDEN_DIM, EMBED_DIM),
        "wfc": linear(ks[5], EMBED_DIM, OUTPUT_DIM),
        "bfc": bias(ks[6], EMBED_DIM, OUTPUT_DIM),
    }


if __name__ == "__main__":
    key = jax.random.PRNGKey(0)
    k_param, k_x = jax.random.split(key)

    params = init_params(k_param)
    x = jax.random.normal(k_x, (16, EMBED_DIM), jnp.float32)   # 16 nodes, embed_dim=512

    preds, feats = jax.jit(gnn_forward)(x, params)
    jax.block_until_ready((preds, feats))

    # Sanity: pure-JAX reference with the same bf16-matmul / f32-accumulate path.
    f0 = jnp.concatenate([params["proxies"], x], axis=0).astype(jnp.bfloat16)
    w1b = params["w1"].astype(jnp.bfloat16)
    w2b = params["w2"].astype(jnp.bfloat16)
    wfcb = params["wfc"].astype(jnp.bfloat16)
    h1 = jnp.maximum(
        jnp.dot(f0, w1b, preferred_element_type=jnp.float32) + params["b1"], 0.0)
    f2 = jnp.maximum(
        jnp.dot(h1.astype(jnp.bfloat16), w2b,
                preferred_element_type=jnp.float32) + params["b2"], 0.0)
    pr = jnp.dot(f2.astype(jnp.bfloat16), wfcb,
                 preferred_element_type=jnp.float32) + params["bfc"]

    assert preds.shape == (16, OUTPUT_DIM) and feats.shape == (16, EMBED_DIM)
    assert jnp.allclose(preds, pr[NUM_PROXIES:], atol=5e-2, rtol=5e-2)
    assert jnp.allclose(feats, f2[NUM_PROXIES:], atol=5e-2, rtol=5e-2)

    print("KERNEL_OK")
</pallas_src>

<mosaic_0001>
module attributes {stable_mosaic.version = 11 : i64} {
  func.func @_gnn_mlp_kernel(%arg0: i32, %arg1: memref<24x512xbf16, #tpu.memory_space<vmem>>, %arg2: memref<512x1024xbf16, #tpu.memory_space<vmem>>, %arg3: memref<1x1024xf32, #tpu.memory_space<vmem>>, %arg4: memref<1024x512xbf16, #tpu.memory_space<vmem>>, %arg5: memref<1x512xf32, #tpu.memory_space<vmem>>, %arg6: memref<512x128xbf16, #tpu.memory_space<vmem>>, %arg7: memref<1x128xf32, #tpu.memory_space<vmem>>, %arg8: memref<24x128xf32, #tpu.memory_space<vmem>>, %arg9: memref<24x512xf32, #tpu.memory_space<vmem>>) attributes {dimension_semantics = [#tpu.dimension_semantics<parallel>], iteration_bounds = array<i64: 1>, scalar_prefetch = 0 : i64, scratch_operands = 0 : i64, tpu.core_type = #tpu.core_type<tc>, window_params = [{transform_indices = @transform_0, window_bounds = array<i64: 24, 512>}, {pipeline_mode = #tpu.pipeline_mode<synchronous>, transform_indices = @transform_1, window_bounds = array<i64: 512, 1024>}, {pipeline_mode = #tpu.pipeline_mode<synchronous>, transform_indices = @transform_2, window_bounds = array<i64: 1, 1024>}, {pipeline_mode = #tpu.pipeline_mode<synchronous>, transform_indices = @transform_3, window_bounds = array<i64: 1024, 512>}, {pipeline_mode = #tpu.pipeline_mode<synchronous>, transform_indices = @transform_4, window_bounds = array<i64: 1, 512>}, {pipeline_mode = #tpu.pipeline_mode<synchronous>, transform_indices = @transform_5, window_bounds = array<i64: 512, 128>}, {pipeline_mode = #tpu.pipeline_mode<synchronous>, transform_indices = @transform_6, window_bounds = array<i64: 1, 128>}, {transform_indices = @transform_7, window_bounds = array<i64: 24, 128>}, {transform_indices = @transform_8, window_bounds = array<i64: 24, 512>}]} {
    %c0 = arith.constant 0 : index
    %c0_0 = arith.constant 0 : index
    %0 = vector.load %arg1[%c0, %c0_0] : memref<24x512xbf16, #tpu.memory_space<vmem>>, vector<24x512xbf16>
    %c0_1 = arith.constant 0 : index
    %c0_2 = arith.constant 0 : index
    %1 = vector.load %arg2[%c0_1, %c0_2] : memref<512x1024xbf16, #tpu.memory_space<vmem>>, vector<512x1024xbf16>
    %cst = arith.constant dense<0.000000e+00> : vector<24x1024xf32>
    %2 = tpu.matmul %0, %1, %cst {dimension_numbers = #tpu.dot_dimension_numbers<[1], [0], [0], [1], [0, 0, 1, 1], [], []>} : vector<24x512xbf16>, vector<512x1024xbf16>, vector<24x1024xf32> -> vector<24x1024xf32>
    %c0_3 = arith.constant 0 : index
    %c0_4 = arith.constant 0 : index
    %3 = vector.load %arg3[%c0_3, %c0_4] : memref<1x1024xf32, #tpu.memory_space<vmem>>, vector<1x1024xf32>
    %4 = vector.broadcast %3 : vector<1x1024xf32> to vector<24x1024xf32>
    %5 = arith.addf %2, %4 : vector<24x1024xf32>
    %cst_5 = arith.constant 0.000000e+00 : f32
    %6 = vector.broadcast %cst_5 : f32 to vector<24x1024xf32>
    %7 = arith.maximumf %5, %6 : vector<24x1024xf32>
    %8 = arith.truncf %7 : vector<24x1024xf32> to vector<24x1024xbf16>
    %c0_6 = arith.constant 0 : index
    %c0_7 = arith.constant 0 : index
    %9 = vector.load %arg4[%c0_6, %c0_7] : memref<1024x512xbf16, #tpu.memory_space<vmem>>, vector<1024x512xbf16>
    %cst_8 = arith.constant dense<0.000000e+00> : vector<24x512xf32>
    %10 = tpu.matmul %8, %9, %cst_8 {dimension_numbers = #tpu.dot_dimension_numbers<[1], [0], [0], [1], [0, 0, 1, 1], [], []>} : vector<24x1024xbf16>, vector<1024x512xbf16>, vector<24x512xf32> -> vector<24x512xf32>
    %c0_9 = arith.constant 0 : index
    %c0_10 = arith.constant 0 : index
    %11 = vector.load %arg5[%c0_9, %c0_10] : memref<1x512xf32, #tpu.memory_space<vmem>>, vector<1x512xf32>
    %12 = vector.broadcast %11 : vector<1x512xf32> to vector<24x512xf32>
    %13 = arith.addf %10, %12 : vector<24x512xf32>
    %cst_11 = arith.constant 0.000000e+00 : f32
    %14 = vector.broadcast %cst_11 : f32 to vector<24x512xf32>
    %15 = arith.maximumf %13, %14 : vector<24x512xf32>
    %c0_12 = arith.constant 0 : index
    %c0_13 = arith.constant 0 : index
    %16 = vector.load %arg9[%c0_12, %c0_13] : memref<24x512xf32, #tpu.memory_space<vmem>>, vector<24x512xf32>
    tpu.vector_store %arg9[%c0_12, %c0_13], %15 {strides = array<i32>} : memref<24x512xf32, #tpu.memory_space<vmem>>, vector<24x512xf32>,
    %17 = arith.truncf %15 : vector<24x512xf32> to vector<24x512xbf16>
    %c0_14 = arith.constant 0 : index
    %c0_15 = arith.constant 0 : index
    %18 = vector.load %arg6[%c0_14, %c0_15] : memref<512x128xbf16, #tpu.memory_space<vmem>>, vector<512x128xbf16>
    %cst_16 = arith.constant dense<0.000000e+00> : vector<24x128xf32>
    %19 = tpu.matmul %17, %18, %cst_16 {dimension_numbers = #tpu.dot_dimension_numbers<[1], [0], [0], [1], [0, 0, 1, 1], [], []>} : vector<24x512xbf16>, vector<512x128xbf16>, vector<24x128xf32> -> vector<24x128xf32>
    %c0_17 = arith.constant 0 : index
    %c0_18 = arith.constant 0 : index
    %20 = vector.load %arg7[%c0_17, %c0_18] : memref<1x128xf32, #tpu.memory_space<vmem>>, vector<1x128xf32>
    %21 = vector.broadcast %20 : vector<1x128xf32> to vector<24x128xf32>
    %22 = arith.addf %19, %21 : vector<24x128xf32>
    %c0_19 = arith.constant 0 : index
    %c0_20 = arith.constant 0 : index
    %23 = vector.load %arg8[%c0_19, %c0_20] : memref<24x128xf32, #tpu.memory_space<vmem>>, vector<24x128xf32>
    tpu.vector_store %arg8[%c0_19, %c0_20], %22 {strides = array<i32>} : memref<24x128xf32, #tpu.memory_space<vmem>>, vector<24x128xf32>,
    return
  }
  func.func @transform_0(%arg0: i32) -> (i32, i32) {
    %c0_i32 = arith.constant 0 : i32
    %c0_i32_0 = arith.constant 0 : i32
    return %arg0, %c0_i32 : i32, i32
  }
  func.func @transform_1(%arg0: i32) -> (i32, i32) {
    %c0_i32 = arith.constant 0 : i32
    %c0_i32_0 = arith.constant 0 : i32
    %c0_i32_1 = arith.constant 0 : i32
    return %c0_i32, %c0_i32_0 : i32, i32
  }
  func.func @transform_2(%arg0: i32) -> (i32, i32) {
    %c0_i32 = arith.constant 0 : i32
    %c0_i32_0 = arith.constant 0 : i32
    %c0_i32_1 = arith.constant 0 : i32
    return %c0_i32, %c0_i32_0 : i32, i32
  }
  func.func @transform_3(%arg0: i32) -> (i32, i32) {
    %c0_i32 = arith.constant 0 : i32
    %c0_i32_0 = arith.constant 0 : i32
    %c0_i32_1 = arith.constant 0 : i32
    return %c0_i32, %c0_i32_0 : i32, i32
  }
  func.func @transform_4(%arg0: i32) -> (i32, i32) {
    %c0_i32 = arith.constant 0 : i32
    %c0_i32_0 = arith.constant 0 : i32
    %c0_i32_1 = arith.constant 0 : i32
    return %c0_i32, %c0_i32_0 : i32, i32
  }
  func.func @transform_5(%arg0: i32) -> (i32, i32) {
    %c0_i32 = arith.constant 0 : i32
    %c0_i32_0 = arith.constant 0 : i32
    %c0_i32_1 = arith.constant 0 : i32
    return %c0_i32, %c0_i32_0 : i32, i32
  }
  func.func @transform_6(%arg0: i32) -> (i32, i32) {
    %c0_i32 = arith.constant 0 : i32
    %c0_i32_0 = arith.constant 0 : i32
    %c0_i32_1 = arith.constant 0 : i32
    return %c0_i32, %c0_i32_0 : i32, i32
  }
  func.func @transform_7(%arg0: i32) -> (i32, i32) {
    %c0_i32 = arith.constant 0 : i32
    %c0_i32_0 = arith.constant 0 : i32
    return %arg0, %c0_i32 : i32, i32
  }
  func.func @transform_8(%arg0: i32) -> (i32, i32) {
    %c0_i32 = arith.constant 0 : i32
    %c0_i32_0 = arith.constant 0 : i32
    return %arg0, %c0_i32 : i32, i32
  }
}

</mosaic_0001>

<llo_original>
// kernel: gnn_forward.1
$region0: #{gnn_forward.1}
  #allocation0 [shape = 'u32[]', space=smem, size = 0x4, offset = 0x4, fixed_abs, tag = 'smem constant byte address 0x4 - core index']
  #allocation1 [shape = 'u32[72,128]{1,0:T(1,128)}', space=vmem, size = 0x9000, scoped, tag = 'internal scratch']
  %s0 = inlined_call_operand.vmem [shape: bf16[24,512], index: 0, kind: input, shape index: {}]
  %s1 = inlined_call_operand.vmem [shape: bf16[512,1024], index: 1, kind: input, shape index: {}]
  %s2 = inlined_call_operand.vmem [shape: f32[1,1024], index: 2, kind: input, shape index: {}]
  %s3 = inlined_call_operand.vmem [shape: bf16[1024,512], index: 3, kind: input, shape index: {}]
  %s4 = inlined_call_operand.vmem [shape: f32[1,512], index: 4, kind: input, shape index: {}]
  %s5 = inlined_call_operand.vmem [shape: bf16[512,128], index: 5, kind: input, shape index: {}]
  %s6 = inlined_call_operand.vmem [shape: f32[1,128], index: 6, kind: input, shape index: {}]
  %s7 = inlined_call_operand.vmem [shape: f32[24,128], index: 7, kind: output, shape index: {0}]
  %s8 = inlined_call_operand.vmem [shape: f32[24,512], index: 8, kind: output, shape index: {1}]
  %9 = xla_tuple %s7, %s8
  %s10 = sld [smem:[#allocation0]]
  $region46: #{gnn_forward.1} parent=0
    _
  %s12 = ssub.s32 1, %s10
  %s13 = scalar_select 0, %s12, %s10
  // Predicated region
  $region2: #{gnn_forward.1} parent=0 // pred_check
    _
  $region3: #{gnn_forward.1} parent=0 // pred_check_branch
    %15 = sbr.rel (0) target = $region5
  $region4: #{gnn_forward.1} parent=0 // pred_region
    _
  $region5: #{gnn_forward.1} parent=0 // pred_fallthru
    _
  // Predicated region
  $region6: #{gnn_forward.1} parent=0 // pred_check
    _
  $region7: #{gnn_forward.1} parent=0 // pred_check_branch
    %17 = sbr.rel (0) target = $region9
  $region8: #{gnn_forward.1} parent=0 // pred_region
    _
  $region9: #{gnn_forward.1} parent=0 // pred_fallthru
    _
  // Predicated region
  $region10: #{gnn_forward.1} parent=0 // pred_check
    _
  $region11: #{gnn_forward.1} parent=0 // pred_check_branch
    %19 = sbr.rel (0) target = $region13
  $region12: #{gnn_forward.1} parent=0 // pred_region
    _
  $region13: #{gnn_forward.1} parent=0 // pred_fallthru
    _
  // Predicated region
  $region14: #{gnn_forward.1} parent=0 // pred_check
    _
  $region15: #{gnn_forward.1} parent=0 // pred_check_branch
    %21 = sbr.rel (0) target = $region17
  $region16: #{gnn_forward.1} parent=0 // pred_region
    _
  $region17: #{gnn_forward.1} parent=0 // pred_fallthru
    _
  // Predicated region
  $region18: #{gnn_forward.1} parent=0 // pred_check
    _
  $region19: #{gnn_forward.1} parent=0 // pred_check_branch
    %23 = sbr.rel (0) target = $region21
  $region20: #{gnn_forward.1} parent=0 // pred_region
    _
  $region21: #{gnn_forward.1} parent=0 // pred_fallthru
    _
  // Predicated region
  $region22: #{gnn_forward.1} parent=0 // pred_check
    _
  $region23: #{gnn_forward.1} parent=0 // pred_check_branch
    %25 = sbr.rel (0) target = $region25
  $region24: #{gnn_forward.1} parent=0 // pred_region
    _
  $region25: #{gnn_forward.1} parent=0 // pred_fallthru
    _
  // Predicated region
  $region26: #{gnn_forward.1} parent=0 // pred_check
    _
  $region27: #{gnn_forward.1} parent=0 // pred_check_branch
    %27 = sbr.rel (0) target = $region29
  $region28: #{gnn_forward.1} parent=0 // pred_region
    _
  $region29: #{gnn_forward.1} parent=0 // pred_fallthru
    _
  %v28 = vld [vmem:[%s0] sm:$0xff]
  %v29 = vld [vmem:[%s0 + $0x8] sm:$0xff]
  %v30 = vld [vmem:[%s0 + $0x10] sm:$0xff]
  %v31 = vld [vmem:[%s0 + $0x18] sm:$0xff]
  %v32 = vld [vmem:[%s0 + $0x20] sm:$0xff]
  %v33 = vld [vmem:[%s0 + $0x28] sm:$0xff]
  %v34 = vld [vmem:[%s1] sm:$0xff]
  %v35 = vld [vmem:[%s1 + $0x8] sm:$0xff]
  %v36 = vld [vmem:[%s1 + $0x10] sm:$0xff]
  %v37 = vld [vmem:[%s1 + $0x18] sm:$0xff]
  %v38 = vld [vmem:[%s1 + $0x20] sm:$0xff]
  %v39 = vld [vmem:[%s1 + $0x28] sm:$0xff]
  %v40 = vld [vmem:[%s1 + $0x30] sm:$0xff]
  %v41 = vld [vmem:[%s1 + $0x38] sm:$0xff]
  %v42 = vld [vmem:[%s1 + $0x40] sm:$0xff]
  %v43 = vld [vmem:[%s1 + $0x48] sm:$0xff]
  %v44 = vld [vmem:[%s1 + $0x50] sm:$0xff]
  %v45 = vld [vmem:[%s1 + $0x58] sm:$0xff]
  %v46 = vld [vmem:[%s1 + $0x60] sm:$0xff]
  %v47 = vld [vmem:[%s1 + $0x68] sm:$0xff]
  %v48 = vld [vmem:[%s1 + $0x70] sm:$0xff]
  %v49 = vld [vmem:[%s1 + $0x78] sm:$0xff]
  %v50 = vld [vmem:[%s1 + $0x80] sm:$0xff]
  %v51 = vld [vmem:[%s1 + $0x88] sm:$0xff]
  %v52 = vld [vmem:[%s1 + $0x90] sm:$0xff]
  %v53 = vld [vmem:[%s1 + $0x98] sm:$0xff]
  %v54 = vld [vmem:[%s1 + $0xa0] sm:$0xff]
  %v55 = vld [vmem:[%s1 + $0xa8] sm:$0xff]
  %v56 = vld [vmem:[%s1 + $0xb0] sm:$0xff]
  %v57 = vld [vmem:[%s1 + $0xb8] sm:$0xff]
  %v58 = vld [vmem:[%s1 + $0xc0] sm:$0xff]
  %v59 = vld [vmem:[%s1 + $0xc8] sm:$0xff]
  %v60 = vld [vmem:[%s1 + $0xd0] sm:$0xff]
  %v61 = vld [vmem:[%s1 + $0xd8] sm:$0xff]
  %v62 = vld [vmem:[%s1 + $0xe0] sm:$0xff]
  %v63 = vld [vmem:[%s1 + $0xe8] sm:$0xff]
  %v64 = vld [vmem:[%s1 + $0xf0] sm:$0xff]
  %v65 = vld [vmem:[%s1 + $0xf8] sm:$0xff]
  %v66 = vld [vmem:[%s1 + $0x100] sm:$0xff]
  %v67 = vld [vmem:[%s1 + $0x108] sm:$0xff]
  %v68 = vld [vmem:[%s1 + $0x110] sm:$0xff]
  %v69 = vld [vmem:[%s1 + $0x118] sm:$0xff]
  %v70 = vld [vmem:[%s1 + $0x120] sm:$0xff]
  %v71 = vld [vmem:[%s1 + $0x128] sm:$0xff]
  %v72 = vld [vmem:[%s1 + $0x130] sm:$0xff]
  %v73 = vld [vmem:[%s1 + $0x138] sm:$0xff]
  %v74 = vld [vmem:[%s1 + $0x140] sm:$0xff]
  %v75 = vld [vmem:[%s1 + $0x148] sm:$0xff]
  %v76 = vld [vmem:[%s1 + $0x150] sm:$0xff]
  %v77 = vld [vmem:[%s1 + $0x158] sm:$0xff]
  %v78 = vld [vmem:[%s1 + $0x160] sm:$0xff]
  %v79 = vld [vmem:[%s1 + $0x168] sm:$0xff]
  %v80 = vld [vmem:[%s1 + $0x170] sm:$0xff]
  %v81 = vld [vmem:[%s1 + $0x178] sm:$0xff]
  %v82 = vld [vmem:[%s1 + $0x180] sm:$0xff]
  %v83 = vld [vmem:[%s1 + $0x188] sm:$0xff]
  %v84 = vld [vmem:[%s1 + $0x190] sm:$0xff]
  %v85 = vld [vmem:[%s1 + $0x198] sm:$0xff]
  %v86 = vld [vmem:[%s1 + $0x1a0] sm:$0xff]
  %v87 = vld [vmem:[%s1 + $0x1a8] sm:$0xff]
  %v88 = vld [vmem:[%s1 + $0x1b0] sm:$0xff]
  %v89 = vld [vmem:[%s1 + $0x1b8] sm:$0xff]
  %v90 = vld [vmem:[%s1 + $0x1c0] sm:$0xff]
  %v91 = vld [vmem:[%s1 + $0x1c8] sm:$0xff]
  %v92 = vld [vmem:[%s1 + $0x1d0] sm:$0xff]
  %v93 = vld [vmem:[%s1 + $0x1d8] sm:$0xff]
  %v94 = vld [vmem:[%s1 + $0x1e0] sm:$0xff]
  %v95 = vld [vmem:[%s1 + $0x1e8] sm:$0xff]
  %v96 = vld [vmem:[%s1 + $0x1f0] sm:$0xff]
  %v97 = vld [vmem:[%s1 + $0x1f8] sm:$0xff]
  %v98 = vld [vmem:[%s1 + $0x200] sm:$0xff]
  %v99 = vld [vmem:[%s1 + $0x208] sm:$0xff]
  %v100 = vld [vmem:[%s1 + $0x210] sm:$0xff]
  %v101 = vld [vmem:[%s1 + $0x218] sm:$0xff]
  %v102 = vld [vmem:[%s1 + $0x220] sm:$0xff]
  %v103 = vld [vmem:[%s1 + $0x228] sm:$0xff]
  %v104 = vld [vmem:[%s1 + $0x230] sm:$0xff]
  %v105 = vld [vmem:[%s1 + $0x238] sm:$0xff]
  %v106 = vld [vmem:[%s1 + $0x240] sm:$0xff]
  %v107 = vld [vmem:[%s1 + $0x248] sm:$0xff]
  %v108 = vld [vmem:[%s1 + $0x250] sm:$0xff]
  %v109 = vld [vmem:[%s1 + $0x258] sm:$0xff]
  %v110 = vld [vmem:[%s1 + $0x260] sm:$0xff]
  %v111 = vld [vmem:[%s1 + $0x268] sm:$0xff]
  %v112 = vld [vmem:[%s1 + $0x270] sm:$0xff]
  %v113 = vld [vmem:[%s1 + $0x278] sm:$0xff]
  %v114 = vld [vmem:[%s1 + $0x280] sm:$0xff]
  %v115 = vld [vmem:[%s1 + $0x288] sm:$0xff]
  %v116 = vld [vmem:[%s1 + $0x290] sm:$0xff]
  %v117 = vld [vmem:[%s1 + $0x298] sm:$0xff]
  %v118 = vld [vmem:[%s1 + $0x2a0] sm:$0xff]
  %v119 = vld [vmem:[%s1 + $0x2a8] sm:$0xff]
  %v120 = vld [vmem:[%s1 + $0x2b0] sm:$0xff]
  %v121 = vld [vmem:[%s1 + $0x2b8] sm:$0xff]
  %v122 = vld [vmem:[%s1 + $0x2c0] sm:$0xff]
  %v123 = vld [vmem:[%s1 + $0x2c8] sm:$0xff]
  %v124 = vld [vmem:[%s1 + $0x2d0] sm:$0xff]
  %v125 = vld [vmem:[%s1 + $0x2d8] sm:$0xff]
  %v126 = vld [vmem:[%s1 + $0x2e0] sm:$0xff]
  %v127 = vld [vmem:[%s1 + $0x2e8] sm:$0xff]
  %v128 = vld [vmem:[%s1 + $0x2f0] sm:$0xff]
  %v129 = vld [vmem:[%s1 + $0x2f8] sm:$0xff]
  %v130 = vld [vmem:[%s1 + $0x300] sm:$0xff]
  %v131 = vld [vmem:[%s1 + $0x308] sm:$0xff]
  %v132 = vld [vmem:[%s1 + $0x310] sm:$0xff]
  %v133 = vld [vmem:[%s1 + $0x318] sm:$0xff]
  %v134 = vld [vmem:[%s1 + $0x320] sm:$0xff]
  %v135 = vld [vmem:[%s1 + $0x328] sm:$0xff]
  %v136 = vld [vmem:[%s1 + $0x330] sm:$0xff]
  %v137 = vld [vmem:[%s1 + $0x338] sm:$0xff]
  %v138 = vld [vmem:[%s1 + $0x340] sm:$0xff]
  %v139 = vld [vmem:[%s1 + $0x348] sm:$0xff]
  %v140 = vld [vmem:[%s1 + $0x350] sm:$0xff]
  %v141 = vld [vmem:[%s1 + $0x358] sm:$0xff]
  %v142 = vld [vmem:[%s1 + $0x360] sm:$0xff]
  %v143 = vld [vmem:[%s1 + $0x368] sm:$0xff]
  %v144 = vld [vmem:[%s1 + $0x370] sm:$0xff]
  %v145 = vld [vmem:[%s1 + $0x378] sm:$0xff]
  %v146 = vld [vmem:[%s1 + $0x380] sm:$0xff]
  %v147 = vld [vmem:[%s1 + $0x388] sm:$0xff]
  %v148 = vld [vmem:[%s1 + $0x390] sm:$0xff]
  %v149 = vld [vmem:[%s1 + $0x398] sm:$0xff]
  %v150 = vld [vmem:[%s1 + $0x3a0] sm:$0xff]
  %v151 = vld [vmem:[%s1 + $0x3a8] sm:$0xff]
  %v152 = vld [vmem:[%s1 + $0x3b0] sm:$0xff]
  %v153 = vld [vmem:[%s1 + $0x3b8] sm:$0xff]
  %v154 = vld [vmem:[%s1 + $0x3c0] sm:$0xff]
  %v155 = vld [vmem:[%s1 + $0x3c8] sm:$0xff]
  %v156 = vld [vmem:[%s1 + $0x3d0] sm:$0xff]
  %v157 = vld [vmem:[%s1 + $0x3d8] sm:$0xff]
  %v158 = vld [vmem:[%s1 + $0x3e0] sm:$0xff]
  %v159 = vld [vmem:[%s1 + $0x3e8] sm:$0xff]
  %v160 = vld [vmem:[%s1 + $0x3f0] sm:$0xff]
  %v161 = vld [vmem:[%s1 + $0x3f8] sm:$0xff]
  %v162 = vld [vmem:[%s1 + $0x400] sm:$0xff]
  %v163 = vld [vmem:[%s1 + $0x408] sm:$0xff]
  %v164 = vld [vmem:[%s1 + $0x410] sm:$0xff]
  %v165 = vld [vmem:[%s1 + $0x418] sm:$0xff]
  %v166 = vld [vmem:[%s1 + $0x420] sm:$0xff]
  %v167 = vld [vmem:[%s1 + $0x428] sm:$0xff]
  %v168 = vld [vmem:[%s1 + $0x430] sm:$0xff]
  %v169 = vld [vmem:[%s1 + $0x438] sm:$0xff]
  %v170 = vld [vmem:[%s1 + $0x440] sm:$0xff]
  %v171 = vld [vmem:[%s1 + $0x448] sm:$0xff]
  %v172 = vld [vmem:[%s1 + $0x450] sm:$0xff]
  %v173 = vld [vmem:[%s1 + $0x458] sm:$0xff]
  %v174 = vld [vmem:[%s1 + $0x460] sm:$0xff]
  %v175 = vld [vmem:[%s1 + $0x468] sm:$0xff]
  %v176 = vld [vmem:[%s1 + $0x470] sm:$0xff]
  %v177 = vld [vmem:[%s1 + $0x478] sm:$0xff]
  %v178 = vld [vmem:[%s1 + $0x480] sm:$0xff]
  %v179 = vld [vmem:[%s1 + $0x488] sm:$0xff]
  %v180 = vld [vmem:[%s1 + $0x490] sm:$0xff]
  %v181 = vld [vmem:[%s1 + $0x498] sm:$0xff]
  %v182 = vld [vmem:[%s1 + $0x4a0] sm:$0xff]
  %v183 = vld [vmem:[%s1 + $0x4a8] sm:$0xff]
  %v184 = vld [vmem:[%s1 + $0x4b0] sm:$0xff]
  %v185 = vld [vmem:[%s1 + $0x4b8] sm:$0xff]
  %v186 = vld [vmem:[%s1 + $0x4c0] sm:$0xff]
  %v187 = vld [vmem:[%s1 + $0x4c8] sm:$0xff]
  %v188 = vld [vmem:[%s1 + $0x4d0] sm:$0xff]
  %v189 = vld [vmem:[%s1 + $0x4d8] sm:$0xff]
  %v190 = vld [vmem:[%s1 + $0x4e0] sm:$0xff]
  %v191 = vld [vmem:[%s1 + $0x4e8] sm:$0xff]
  %v192 = vld [vmem:[%s1 + $0x4f0] sm:$0xff]
  %v193 = vld [vmem:[%s1 + $0x4f8] sm:$0xff]
  %v194 = vld [vmem:[%s1 + $0x500] sm:$0xff]
  %v195 = vld [vmem:[%s1 + $0x508] sm:$0xff]
  %v196 = vld [vmem:[%s1 + $0x510] sm:$0xff]
  %v197 = vld [vmem:[%s1 + $0x518] sm:$0xff]
  %v198 = vld [vmem:[%s1 + $0x520] sm:$0xff]
  %v199 = vld [vmem:[%s1 + $0x528] sm:$0xff]
  %v200 = vld [vmem:[%s1 + $0x530] sm:$0xff]
  %v201 = vld [vmem:[%s1 + $0x538] sm:$0xff]
  %v202 = vld [vmem:[%s1 + $0x540] sm:$0xff]
  %v203 = vld [vmem:[%s1 + $0x548] sm:$0xff]
  %v204 = vld [vmem:[%s1 + $0x550] sm:$0xff]
  %v205 = vld [vmem:[%s1 + $0x558] sm:$0xff]
  %v206 = vld [vmem:[%s1 + $0x560] sm:$0xff]
  %v207 = vld [vmem:[%s1 + $0x568] sm:$0xff]
  %v208 = vld [vmem:[%s1 + $0x570] sm:$0xff]
  %v209 = vld [vmem:[%s1 + $0x578] sm:$0xff]
  %v210 = vld [vmem:[%s1 + $0x580] sm:$0xff]
  %v211 = vld [vmem:[%s1 + $0x588] sm:$0xff]
  %v212 = vld [vmem:[%s1 + $0x590] sm:$0xff]
  %v213 = vld [vmem:[%s1 + $0x598] sm:$0xff]
  %v214 = vld [vmem:[%s1 + $0x5a0] sm:$0xff]
  %v215 = vld [vmem:[%s1 + $0x5a8] sm:$0xff]
  %v216 = vld [vmem:[%s1 + $0x5b0] sm:$0xff]
  %v217 = vld [vmem:[%s1 + $0x5b8] sm:$0xff]
  %v218 = vld [vmem:[%s1 + $0x5c0] sm:$0xff]
  %v219 = vld [vmem:[%s1 + $0x5c8] sm:$0xff]
  %v220 = vld [vmem:[%s1 + $0x5d0] sm:$0xff]
  %v221 = vld [vmem:[%s1 + $0x5d8] sm:$0xff]
  %v222 = vld [vmem:[%s1 + $0x5e0] sm:$0xff]
  %v223 = vld [vmem:[%s1 + $0x5e8] sm:$0xff]
  %v224 = vld [vmem:[%s1 + $0x5f0] sm:$0xff]
  %v225 = vld [vmem:[%s1 + $0x5f8] sm:$0xff]
  %v226 = vld [vmem:[%s1 + $0x600] sm:$0xff]
  %v227 = vld [vmem:[%s1 + $0x608] sm:$0xff]
  %v228 = vld [vmem:[%s1 + $0x610] sm:$0xff]
  %v229 = vld [vmem:[%s1 + $0x618] sm:$0xff]
  %v230 = vld [vmem:[%s1 + $0x620] sm:$0xff]
  %v231 = vld [vmem:[%s1 + $0x628] sm:$0xff]
  %v232 = vld [vmem:[%s1 + $0x630] sm:$0xff]
  %v233 = vld [vmem:[%s1 + $0x638] sm:$0xff]
  %v234 = vld [vmem:[%s1 + $0x640] sm:$0xff]
  %v235 = vld [vmem:[%s1 + $0x648] sm:$0xff]
  %v236 = vld [vmem:[%s1 + $0x650] sm:$0xff]
  %v237 = vld [vmem:[%s1 + $0x658] sm:$0xff]
  %v238 = vld [vmem:[%s1 + $0x660] sm:$0xff]
  %v239 = vld [vmem:[%s1 + $0x668] sm:$0xff]
  %v240 = vld [vmem:[%s1 + $0x670] sm:$0xff]
  %v241 = vld [vmem:[%s1 + $0x678] sm:$0xff]
  %v242 = vld [vmem:[%s1 + $0x680] sm:$0xff]
  %v243 = vld [vmem:[%s1 + $0x688] sm:$0xff]
  %v244 = vld [vmem:[%s1 + $0x690] sm:$0xff]
  %v245 = vld [vmem:[%s1 + $0x698] sm:$0xff]
  %v246 = vld [vmem:[%s1 + $0x6a0] sm:$0xff]
  %v247 = vld [vmem:[%s1 + $0x6a8] sm:$0xff]
  %v248 = vld [vmem:[%s1 + $0x6b0] sm:$0xff]
  %v249 = vld [vmem:[%s1 + $0x6b8] sm:$0xff]
  %v250 = vld [vmem:[%s1 + $0x6c0] sm:$0xff]
  %v251 = vld [vmem:[%s1 + $0x6c8] sm:$0xff]
  %v252 = vld [vmem:[%s1 + $0x6d0] sm:$0xff]
  %v253 = vld [vmem:[%s1 + $0x6d8] sm:$0xff]
  %v254 = vld [vmem:[%s1 + $0x6e0] sm:$0xff]
  %v255 = vld [vmem:[%s1 + $0x6e8] sm:$0xff]
  %v256 = vld [vmem:[%s1 + $0x6f0] sm:$0xff]
  %v257 = vld [vmem:[%s1 + $0x6f8] sm:$0xff]
  %v258 = vld [vmem:[%s1 + $0x700] sm:$0xff]
  %v259 = vld [vmem:[%s1 + $0x708] sm:$0xff]
  %v260 = vld [vmem:[%s1 + $0x710] sm:$0xff]
  %v261 = vld [vmem:[%s1 + $0x718] sm:$0xff]
  %v262 = vld [vmem:[%s1 + $0x720] sm:$0xff]
  %v263 = vld [vmem:[%s1 + $0x728] sm:$0xff]
  %v264 = vld [vmem:[%s1 + $0x730] sm:$0xff]
  %v265 = vld [vmem:[%s1 + $0x738] sm:$0xff]
  %v266 = vld [vmem:[%s1 + $0x740] sm:$0xff]
  %v267 = vld [vmem:[%s1 + $0x748] sm:$0xff]
  %v268 = vld [vmem:[%s1 + $0x750] sm:$0xff]
  %v269 = vld [vmem:[%s1 + $0x758] sm:$0xff]
  %v270 = vld [vmem:[%s1 + $0x760] sm:$0xff]
  %v271 = vld [vmem:[%s1 + $0x768] sm:$0xff]
  %v272 = vld [vmem:[%s1 + $0x770] sm:$0xff]
  %v273 = vld [vmem:[%s1 + $0x778] sm:$0xff]
  %v274 = vld [vmem:[%s1 + $0x780] sm:$0xff]
  %v275 = vld [vmem:[%s1 + $0x788] sm:$0xff]
  %v276 = vld [vmem:[%s1 + $0x790] sm:$0xff]
  %v277 = vld [vmem:[%s1 + $0x798] sm:$0xff]
  %v278 = vld [vmem:[%s1 + $0x7a0] sm:$0xff]
  %v279 = vld [vmem:[%s1 + $0x7a8] sm:$0xff]
  %v280 = vld [vmem:[%s1 + $0x7b0] sm:$0xff]
  %v281 = vld [vmem:[%s1 + $0x7b8] sm:$0xff]
  %v282 = vld [vmem:[%s1 + $0x7c0] sm:$0xff]
  %v283 = vld [vmem:[%s1 + $0x7c8] sm:$0xff]
  %v284 = vld [vmem:[%s1 + $0x7d0] sm:$0xff]
  %v285 = vld [vmem:[%s1 + $0x7d8] sm:$0xff]
  %v286 = vld [vmem:[%s1 + $0x7e0] sm:$0xff]
  %v287 = vld [vmem:[%s1 + $0x7e8] sm:$0xff]
  %v288 = vld [vmem:[%s1 + $0x7f0] sm:$0xff]
  %v289 = vld [vmem:[%s1 + $0x7f8] sm:$0xff]
  %v290 = vld [vmem:[%s2] sm:$0xff]
  %v292 = vperm.slane %v290, 0
  %v293 = vperm.slane %v290, 1
  %v294 = vperm.slane %v290, 2
  %v295 = vperm.slane %v290, 3
  %v296 = vperm.slane %v290, 4
  %v297 = vperm.slane %v290, 5
  %v298 = vperm.slane %v290, 6
  %v299 = vperm.slane %v290, 7
  %v314 = vunpack.c.l.b16 %v28
  %v315 = vunpack.c.h.b16 %v28
  %v316 = vunpack.c.l.b16 %v29
  %v317 = vunpack.c.h.b16 %v29
  %v318 = vunpack.c.l.b16 %v30
  %v319 = vunpack.c.h.b16 %v30
  %v320 = vunpack.c.l.b16 %v31
  %v321 = vunpack.c.h.b16 %v31
  %v322 = vunpack.c.l.b16 %v32
  %v323 = vunpack.c.h.b16 %v32
  %v324 = vunpack.c.l.b16 %v33
  %v325 = vunpack.c.h.b16 %v33
  %v326 = vpack.c.b16 %v318, %v314
  %v327 = vpack.c.b16 %v319, %v315
  %v328 = vpack.c.b16 %v320, %v316
  %v329 = vpack.c.b16 %v321, %v317
  %v330 = vpack.c.b16 %v322, %v322
  %v331 = vpack.c.b16 %v323, %v323
  %v332 = vpack.c.b16 %v324, %v324
  %v333 = vpack.c.b16 %v325, %v325
  %v598 = vunpack.c.l.b16 %v34
  %v599 = vunpack.c.h.b16 %v34
  %v600 = vunpack.c.l.b16 %v35
  %v601 = vunpack.c.h.b16 %v35
  %v602 = vunpack.c.l.b16 %v36
  %v603 = vunpack.c.h.b16 %v36
  %v604 = vunpack.c.l.b16 %v37
  %v605 = vunpack.c.h.b16 %v37
  %v606 = vunpack.c.l.b16 %v38
  %v607 = vunpack.c.h.b16 %v38
  %v608 = vunpack.c.l.b16 %v39
  %v609 = vunpack.c.h.b16 %v39
  %v610 = vunpack.c.l.b16 %v40
  %v611 = vunpack.c.h.b16 %v40
  %v612 = vunpack.c.l.b16 %v41
  %v613 = vunpack.c.h.b16 %v41
  %v614 = vunpack.c.l.b16 %v42
  %v615 = vunpack.c.h.b16 %v42
  %v616 = vunpack.c.l.b16 %v43
  %v617 = vunpack.c.h.b16 %v43
  %v618 = vunpack.c.l.b16 %v44
  %v619 = vunpack.c.h.b16 %v44
  %v620 = vunpack.c.l.b16 %v45
  %v621 = vunpack.c.h.b16 %v45
  %v622 = vunpack.c.l.b16 %v46
  %v623 = vunpack.c.h.b16 %v46
  %v624 = vunpack.c.l.b16 %v47
  %v625 = vunpack.c.h.b16 %v47
  %v626 = vunpack.c.l.b16 %v48
  %v627 = vunpack.c.h.b16 %v48
  %v628 = vunpack.c.l.b16 %v49
  %v629 = vunpack.c.h.b16 %v49
  %v630 = vunpack.c.l.b16 %v50
  %v631 = vunpack.c.h.b16 %v50
  %v632 = vunpack.c.l.b16 %v51
  %v633 = vunpack.c.h.b16 %v51
  %v634 = vunpack.c.l.b16 %v52
  %v635 = vunpack.c.h.b16 %v52
  %v636 = vunpack.c.l.b16 %v53
  %v637 = vunpack.c.h.b16 %v53
  %v638 = vunpack.c.l.b16 %v54
  %v639 = vunpack.c.h.b16 %v54
  %v640 = vunpack.c.l.b16 %v55
  %v641 = vunpack.c.h.b16 %v55
  %v642 = vunpack.c.l.b16 %v56
  %v643 = vunpack.c.h.b16 %v56
  %v644 = vunpack.c.l.b16 %v57
  %v645 = vunpack.c.h.b16 %v57
  %v646 = vunpack.c.l.b16 %v58
  %v647 = vunpack.c.h.b16 %v58
  %v648 = vunpack.c.l.b16 %v59
  %v649 = vunpack.c.h.b16 %v59
  %v650 = vunpack.c.l.b16 %v60
  %v651 = vunpack.c.h.b16 %v60
  %v652 = vunpack.c.l.b16 %v61
  %v653 = vunpack.c.h.b16 %v61
  %v654 = vunpack.c.l.b16 %v62
  %v655 = vunpack.c.h.b16 %v62
  %v656 = vunpack.c.l.b16 %v63
  %v657 = vunpack.c.h.b16 %v63
  %v658 = vunpack.c.l.b16 %v64
  %v659 = vunpack.c.h.b16 %v64
  %v660 = vunpack.c.l.b16 %v65
  %v661 = vunpack.c.h.b16 %v65
  %v662 = vunpack.c.l.b16 %v66
  %v663 = vunpack.c.h.b16 %v66
  %v664 = vunpack.c.l.b16 %v67
  %v665 = vunpack.c.h.b16 %v67
  %v666 = vunpack.c.l.b16 %v68
  %v667 = vunpack.c.h.b16 %v68
  %v668 = vunpack.c.l.b16 %v69
  %v669 = vunpack.c.h.b16 %v69
  %v670 = vunpack.c.l.b16 %v70
  %v671 = vunpack.c.h.b16 %v70
  %v672 = vunpack.c.l.b16 %v71
  %v673 = vunpack.c.h.b16 %v71
  %v674 = vunpack.c.l.b16 %v72
  %v675 = vunpack.c.h.b16 %v72
  %v676 = vunpack.c.l.b16 %v73
  %v677 = vunpack.c.h.b16 %v73
  %v678 = vunpack.c.l.b16 %v74
  %v679 = vunpack.c.h.b16 %v74
  %v680 = vunpack.c.l.b16 %v75
  %v681 = vunpack.c.h.b16 %v75
  %v682 = vunpack.c.l.b16 %v76
  %v683 = vunpack.c.h.b16 %v76
  %v684 = vunpack.c.l.b16 %v77
  %v685 = vunpack.c.h.b16 %v77
  %v686 = vunpack.c.l.b16 %v78
  %v687 = vunpack.c.h.b16 %v78
  %v688 = vunpack.c.l.b16 %v79
  %v689 = vunpack.c.h.b16 %v79
  %v690 = vunpack.c.l.b16 %v80
  %v691 = vunpack.c.h.b16 %v80
  %v692 = vunpack.c.l.b16 %v81
  %v693 = vunpack.c.h.b16 %v81
  %v694 = vunpack.c.l.b16 %v82
  %v695 = vunpack.c.h.b16 %v82
  %v696 = vunpack.c.l.b16 %v83
  %v697 = vunpack.c.h.b16 %v83
  %v698 = vunpack.c.l.b16 %v84
  %v699 = vunpack.c.h.b16 %v84
  %v700 = vunpack.c.l.b16 %v85
  %v701 = vunpack.c.h.b16 %v85
  %v702 = vunpack.c.l.b16 %v86
  %v703 = vunpack.c.h.b16 %v86
  %v704 = vunpack.c.l.b16 %v87
  %v705 = vunpack.c.h.b16 %v87
  %v706 = vunpack.c.l.b16 %v88
  %v707 = vunpack.c.h.b16 %v88
  %v708 = vunpack.c.l.b16 %v89
  %v709 = vunpack.c.h.b16 %v89
  %v710 = vunpack.c.l.b16 %v90
  %v711 = vunpack.c.h.b16 %v90
  %v712 = vunpack.c.l.b16 %v91
  %v713 = vunpack.c.h.b16 %v91
  %v714 = vunpack.c.l.b16 %v92
  %v715 = vunpack.c.h.b16 %v92
  %v716 = vunpack.c.l.b16 %v93
  %v717 = vunpack.c.h.b16 %v93
  %v718 = vunpack.c.l.b16 %v94
  %v719 = vunpack.c.h.b16 %v94
  %v720 = vunpack.c.l.b16 %v95
  %v721 = vunpack.c.h.b16 %v95
  %v722 = vunpack.c.l.b16 %v96
  %v723 = vunpack.c.h.b16 %v96
  %v724 = vunpack.c.l.b16 %v97
  %v725 = vunpack.c.h.b16 %v97
  %v726 = vunpack.c.l.b16 %v98
  %v727 = vunpack.c.h.b16 %v98
  %v728 = vunpack.c.l.b16 %v99
  %v729 = vunpack.c.h.b16 %v99
  %v730 = vunpack.c.l.b16 %v100
  %v731 = vunpack.c.h.b16 %v100
  %v732 = vunpack.c.l.b16 %v101
  %v733 = vunpack.c.h.b16 %v101
  %v734 = vunpack.c.l.b16 %v102
  %v735 = vunpack.c.h.b16 %v102
  %v736 = vunpack.c.l.b16 %v103
  %v737 = vunpack.c.h.b16 %v103
  %v738 = vunpack.c.l.b16 %v104
  %v739 = vunpack.c.h.b16 %v104
  %v740 = vunpack.c.l.b16 %v105
  %v741 = vunpack.c.h.b16 %v105
  %v742 = vunpack.c.l.b16 %v106
  %v743 = vunpack.c.h.b16 %v106
  %v744 = vunpack.c.l.b16 %v107
  %v745 = vunpack.c.h.b16 %v107
  %v746 = vunpack.c.l.b16 %v108
  %v747 = vunpack.c.h.b16 %v108
  %v748 = vunpack.c.l.b16 %v109
  %v749 = vunpack.c.h.b16 %v109
  %v750 = vunpack.c.l.b16 %v110
  %v751 = vunpack.c.h.b16 %v110
  %v752 = vunpack.c.l.b16 %v111
  %v753 = vunpack.c.h.b16 %v111
  %v754 = vunpack.c.l.b16 %v112
  %v755 = vunpack.c.h.b16 %v112
  %v756 = vunpack.c.l.b16 %v113
  %v757 = vunpack.c.h.b16 %v113
  %v758 = vunpack.c.l.b16 %v114
  %v759 = vunpack.c.h.b16 %v114
  %v760 = vunpack.c.l.b16 %v115
  %v761 = vunpack.c.h.b16 %v115
  %v762 = vunpack.c.l.b16 %v116
  %v763 = vunpack.c.h.b16 %v116
  %v764 = vunpack.c.l.b16 %v117
  %v765 = vunpack.c.h.b16 %v117
  %v766 = vunpack.c.l.b16 %v118
  %v767 = vunpack.c.h.b16 %v118
  %v768 = vunpack.c.l.b16 %v119
  %v769 = vunpack.c.h.b16 %v119
  %v770 = vunpack.c.l.b16 %v120
  %v771 = vunpack.c.h.b16 %v120
  %v772 = vunpack.c.l.b16 %v121
  %v773 = vunpack.c.h.b16 %v121
  %v774 = vunpack.c.l.b16 %v122
  %v775 = vunpack.c.h.b16 %v122
  %v776 = vunpack.c.l.b16 %v123
  %v777 = vunpack.c.h.b16 %v123
  %v778 = vunpack.c.l.b16 %v124
  %v779 = vunpack.c.h.b16 %v124
  %v780 = vunpack.c.l.b16 %v125
  %v781 = vunpack.c.h.b16 %v125
  %v782 = vunpack.c.l.b16 %v126
  %v783 = vunpack.c.h.b16 %v126
  %v784 = vunpack.c.l.b16 %v127
  %v785 = vunpack.c.h.b16 %v127
  %v786 = vunpack.c.l.b16 %v128
  %v787 = vunpack.c.h.b16 %v128
  %v788 = vunpack.c.l.b16 %v129
  %v789 = vunpack.c.h.b16 %v129
  %v790 = vunpack.c.l.b16 %v130
  %v791 = vunpack.c.h.b16 %v130
  %v792 = vunpack.c.l.b16 %v131
  %v793 = vunpack.c.h.b16 %v131
  %v794 = vunpack.c.l.b16 %v132
  %v795 = vunpack.c.h.b16 %v132
  %v796 = vunpack.c.l.b16 %v133
  %v797 = vunpack.c.h.b16 %v133
  %v798 = vunpack.c.l.b16 %v134
  %v799 = vunpack.c.h.b16 %v134
  %v800 = vunpack.c.l.b16 %v135
  %v801 = vunpack.c.h.b16 %v135
  %v802 = vunpack.c.l.b16 %v136
  %v803 = vunpack.c.h.b16 %v136
  %v804 = vunpack.c.l.b16 %v137
  %v805 = vunpack.c.h.b16 %v137
  %v806 = vunpack.c.l.b16 %v138
  %v807 = vunpack.c.h.b16 %v138
  %v808 = vunpack.c.l.b16 %v139
  %v809 = vunpack.c.h.b16 %v139
  %v810 = vunpack.c.l.b16 %v140
  %v811 = vunpack.c.h.b16 %v140
  %v812 = vunpack.c.l.b16 %v141
  %v813 = vunpack.c.h.b16 %v141
  %v814 = vunpack.c.l.b16 %v142
  %v815 = vunpack.c.h.b16 %v142
  %v816 = vunpack.c.l.b16 %v143
  %v817 = vunpack.c.h.b16 %v143
  %v818 = vunpack.c.l.b16 %v144
  %v819 = vunpack.c.h.b16 %v144
  %v820 = vunpack.c.l.b16 %v145
  %v821 = vunpack.c.h.b16 %v145
  %v822 = vunpack.c.l.b16 %v146
  %v823 = vunpack.c.h.b16 %v146
  %v824 = vunpack.c.l.b16 %v147
  %v825 = vunpack.c.h.b16 %v147
  %v826 = vunpack.c.l.b16 %v148
  %v827 = vunpack.c.h.b16 %v148
  %v828 = vunpack.c.l.b16 %v149
  %v829 = vunpack.c.h.b16 %v149
  %v830 = vunpack.c.l.b16 %v150
  %v831 = vunpack.c.h.b16 %v150
  %v832 = vunpack.c.l.b16 %v151
  %v833 = vunpack.c.h.b16 %v151
  %v834 = vunpack.c.l.b16 %v152
  %v835 = vunpack.c.h.b16 %v152
  %v836 = vunpack.c.l.b16 %v153
  %v837 = vunpack.c.h.b16 %v153
  %v838 = vunpack.c.l.b16 %v154
  %v839 = vunpack.c.h.b16 %v154
  %v840 = vunpack.c.l.b16 %v155
  %v841 = vunpack.c.h.b16 %v155
  %v842 = vunpack.c.l.b16 %v156
  %v843 = vunpack.c.h.b16 %v156
  %v844 = vunpack.c.l.b16 %v157
  %v845 = vunpack.c.h.b16 %v157
  %v846 = vunpack.c.l.b16 %v158
  %v847 = vunpack.c.h.b16 %v158
  %v848 = vunpack.c.l.b16 %v159
  %v849 = vunpack.c.h.b16 %v159
  %v850 = vunpack.c.l.b16 %v160
  %v851 = vunpack.c.h.b16 %v160
  %v852 = vunpack.c.l.b16 %v161
  %v853 = vunpack.c.h.b16 %v161
  %v854 = vunpack.c.l.b16 %v162
  %v855 = vunpack.c.h.b16 %v162
  %v856 = vunpack.c.l.b16 %v163
  %v857 = vunpack.c.h.b16 %v163
  %v858 = vunpack.c.l.b16 %v164
  %v859 = vunpack.c.h.b16 %v164
  %v860 = vunpack.c.l.b16 %v165
  %v861 = vunpack.c.h.b16 %v165
  %v862 = vunpack.c.l.b16 %v166
  %v863 = vunpack.c.h.b16 %v166
  %v864 = vunpack.c.l.b16 %v167
  %v865 = vunpack.c.h.b16 %v167
  %v866 = vunpack.c.l.b16 %v168
  %v867 = vunpack.c.h.b16 %v168
  %v868 = vunpack.c.l.b16 %v169
  %v869 = vunpack.c.h.b16 %v169
  %v870 = vunpack.c.l.b16 %v170
  %v871 = vunpack.c.h.b16 %v170
  %v872 = vunpack.c.l.b16 %v171
  %v873 = vunpack.c.h.b16 %v171
  %v874 = vunpack.c.l.b16 %v172
  %v875 = vunpack.c.h.b16 %v172
  %v876 = vunpack.c.l.b16 %v173
  %v877 = vunpack.c.h.b16 %v173
  %v878 = vunpack.c.l.b16 %v174
  %v879 = vunpack.c.h.b16 %v174
  %v880 = vunpack.c.l.b16 %v175
  %v881 = vunpack.c.h.b16 %v175
  %v882 = vunpack.c.l.b16 %v176
  %v883 = vunpack.c.h.b16 %v176
  %v884 = vunpack.c.l.b16 %v177
  %v885 = vunpack.c.h.b16 %v177
  %v886 = vunpack.c.l.b16 %v178
  %v887 = vunpack.c.h.b16 %v178
  %v888 = vunpack.c.l.b16 %v179
  %v889 = vunpack.c.h.b16 %v179
  %v890 = vunpack.c.l.b16 %v180
  %v891 = vunpack.c.h.b16 %v180
  %v892 = vunpack.c.l.b16 %v181
  %v893 = vunpack.c.h.b16 %v181
  %v894 = vunpack.c.l.b16 %v182
  %v895 = vunpack.c.h.b16 %v182
  %v896 = vunpack.c.l.b16 %v183
  %v897 = vunpack.c.h.b16 %v183
  %v898 = vunpack.c.l.b16 %v184
  %v899 = vunpack.c.h.b16 %v184
  %v900 = vunpack.c.l.b16 %v185
  %v901 = vunpack.c.h.b16 %v185
  %v902 = vunpack.c.l.b16 %v186
  %v903 = vunpack.c.h.b16 %v186
  %v904 = vunpack.c.l.b16 %v187
  %v905 = vunpack.c.h.b16 %v187
  %v906 = vunpack.c.l.b16 %v188
  %v907 = vunpack.c.h.b16 %v188
  %v908 = vunpack.c.l.b16 %v189
  %v909 = vunpack.c.h.b16 %v189
  %v910 = vunpack.c.l.b16 %v190
  %v911 = vunpack.c.h.b16 %v190
  %v912 = vunpack.c.l.b16 %v191
  %v913 = vunpack.c.h.b16 %v191
  %v914 = vunpack.c.l.b16 %v192
  %v915 = vunpack.c.h.b16 %v192
  %v916 = vunpack.c.l.b16 %v193
  %v917 = vunpack.c.h.b16 %v193
  %v918 = vunpack.c.l.b16 %v194
  %v919 = vunpack.c.h.b16 %v194
  %v920 = vunpack.c.l.b16 %v195
  %v921 = vunpack.c.h.b16 %v195
  %v922 = vunpack.c.l.b16 %v196
  %v923 = vunpack.c.h.b16 %v196
  %v924 = vunpack.c.l.b16 %v197
  %v925 = vunpack.c.h.b16 %v197
  %v926 = vunpack.c.l.b16 %v198
  %v927 = vunpack.c.h.b16 %v198
  %v928 = vunpack.c.l.b16 %v199
  %v929 = vunpack.c.h.b16 %v199
  %v930 = vunpack.c.l.b16 %v200
  %v931 = vunpack.c.h.b16 %v200
  %v932 = vunpack.c.l.b16 %v201
  %v933 = vunpack.c.h.b16 %v201
  %v934 = vunpack.c.l.b16 %v202
  %v935 = vunpack.c.h.b16 %v202
  %v936 = vunpack.c.l.b16 %v203
  %v937 = vunpack.c.h.b16 %v203
  %v938 = vunpack.c.l.b16 %v204
  %v939 = vunpack.c.h.b16 %v204
  %v940 = vunpack.c.l.b16 %v205
  %v941 = vunpack.c.h.b16 %v205
  %v942 = vunpack.c.l.b16 %v206
  %v943 = vunpack.c.h.b16 %v206
  %v944 = vunpack.c.l.b16 %v207
  %v945 = vunpack.c.h.b16 %v207
  %v946 = vunpack.c.l.b16 %v208
  %v947 = vunpack.c.h.b16 %v208
  %v948 = vunpack.c.l.b16 %v209
  %v949 = vunpack.c.h.b16 %v209
  %v950 = vunpack.c.l.b16 %v210
  %v951 = vunpack.c.h.b16 %v210
  %v952 = vunpack.c.l.b16 %v211
  %v953 = vunpack.c.h.b16 %v211
  %v954 = vunpack.c.l.b16 %v212
  %v955 = vunpack.c.h.b16 %v212
  %v956 = vunpack.c.l.b16 %v213
  %v957 = vunpack.c.h.b16 %v213
  %v958 = vunpack.c.l.b16 %v214
  %v959 = vunpack.c.h.b16 %v214
  %v960 = vunpack.c.l.b16 %v215
  %v961 = vunpack.c.h.b16 %v215
  %v962 = vunpack.c.l.b16 %v216
  %v963 = vunpack.c.h.b16 %v216
  %v964 = vunpack.c.l.b16 %v217
  %v965 = vunpack.c.h.b16 %v217
  %v966 = vunpack.c.l.b16 %v218
  %v967 = vunpack.c.h.b16 %v218
  %v968 = vunpack.c.l.b16 %v219
  %v969 = vunpack.c.h.b16 %v219
  %v970 = vunpack.c.l.b16 %v220
  %v971 = vunpack.c.h.b16 %v220
  %v972 = vunpack.c.l.b16 %v221
  %v973 = vunpack.c.h.b16 %v221
  %v974 = vunpack.c.l.b16 %v222
  %v975 = vunpack.c.h.b16 %v222
  %v976 = vunpack.c.l.b16 %v223
  %v977 = vunpack.c.h.b16 %v223
  %v978 = vunpack.c.l.b16 %v224
  %v979 = vunpack.c.h.b16 %v224
  %v980 = vunpack.c.l.b16 %v225
  %v981 = vunpack.c.h.b16 %v225
  %v982 = vunpack.c.l.b16 %v226
  %v983 = vunpack.c.h.b16 %v226
  %v984 = vunpack.c.l.b16 %v227
  %v985 = vunpack.c.h.b16 %v227
  %v986 = vunpack.c.l.b16 %v228
  %v987 = vunpack.c.h.b16 %v228
  %v988 = vunpack.c.l.b16 %v229
  %v989 = vunpack.c.h.b16 %v229
  %v990 = vunpack.c.l.b16 %v230
  %v991 = vunpack.c.h.b16 %v230
  %v992 = vunpack.c.l.b16 %v231
  %v993 = vunpack.c.h.b16 %v231
  %v994 = vunpack.c.l.b16 %v232
  %v995 = vunpack.c.h.b16 %v232
  %v996 = vunpack.c.l.b16 %v233
  %v997 = vunpack.c.h.b16 %v233
  %v998 = vunpack.c.l.b16 %v234
  %v999 = vunpack.c.h.b16 %v234
  %v1000 = vunpack.c.l.b16 %v235
  %v1001 = vunpack.c.h.b16 %v235
  %v1002 = vunpack.c.l.b16 %v236
  %v1003 = vunpack.c.h.b16 %v236
  %v1004 = vunpack.c.l.b16 %v237
  %v1005 = vunpack.c.h.b16 %v237
  %v1006 = vunpack.c.l.b16 %v238
  %v1007 = vunpack.c.h.b16 %v238
  %v1008 = vunpack.c.l.b16 %v239
  %v1009 = vunpack.c.h.b16 %v239
  %v1010 = vunpack.c.l.b16 %v240
  %v1011 = vunpack.c.h.b16 %v240
  %v1012 = vunpack.c.l.b16 %v241
  %v1013 = vunpack.c.h.b16 %v241
  %v1014 = vunpack.c.l.b16 %v242
  %v1015 = vunpack.c.h.b16 %v242
  %v1016 = vunpack.c.l.b16 %v243
  %v1017 = vunpack.c.h.b16 %v243
  %v1018 = vunpack.c.l.b16 %v244
  %v1019 = vunpack.c.h.b16 %v244
  %v1020 = vunpack.c.l.b16 %v245
  %v1021 = vunpack.c.h.b16 %v245
  %v1022 = vunpack.c.l.b16 %v246
  %v1023 = vunpack.c.h.b16 %v246
  %v1024 = vunpack.c.l.b16 %v247
  %v1025 = vunpack.c.h.b16 %v247
  %v1026 = vunpack.c.l.b16 %v248
  %v1027 = vunpack.c.h.b16 %v248
  %v1028 = vunpack.c.l.b16 %v249
  %v1029 = vunpack.c.h.b16 %v249
  %v1030 = vunpack.c.l.b16 %v250
  %v1031 = vunpack.c.h.b16 %v250
  %v1032 = vunpack.c.l.b16 %v251
  %v1033 = vunpack.c.h.b16 %v251
  %v1034 = vunpack.c.l.b16 %v252
  %v1035 = vunpack.c.h.b16 %v252
  %v1036 = vunpack.c.l.b16 %v253
  %v1037 = vunpack.c.h.b16 %v253
  %v1038 = vunpack.c.l.b16 %v254
  %v1039 = vunpack.c.h.b16 %v254
  %v1040 = vunpack.c.l.b16 %v255
  %v1041 = vunpack.c.h.b16 %v255
  %v1042 = vunpack.c.l.b16 %v256
  %v1043 = vunpack.c.h.b16 %v256
  %v1044 = vunpack.c.l.b16 %v257
  %v1045 = vunpack.c.h.b16 %v257
  %v1046 = vunpack.c.l.b16 %v258
  %v1047 = vunpack.c.h.b16 %v258
  %v1048 = vunpack.c.l.b16 %v259
  %v1049 = vunpack.c.h.b16 %v259
  %v1050 = vunpack.c.l.b16 %v260
  %v1051 = vunpack.c.h.b16 %v260
  %v1052 = vunpack.c.l.b16 %v261
  %v1053 = vunpack.c.h.b16 %v261
  %v1054 = vunpack.c.l.b16 %v262
  %v1055 = vunpack.c.h.b16 %v262
  %v1056 = vunpack.c.l.b16 %v263
  %v1057 = vunpack.c.h.b16 %v263
  %v1058 = vunpack.c.l.b16 %v264
  %v1059 = vunpack.c.h.b16 %v264
  %v1060 = vunpack.c.l.b16 %v265
  %v1061 = vunpack.c.h.b16 %v265
  %v1062 = vunpack.c.l.b16 %v266
  %v1063 = vunpack.c.h.b16 %v266
  %v1064 = vunpack.c.l.b16 %v267
  %v1065 = vunpack.c.h.b16 %v267
  %v1066 = vunpack.c.l.b16 %v268
  %v1067 = vunpack.c.h.b16 %v268
  %v1068 = vunpack.c.l.b16 %v269
  %v1069 = vunpack.c.h.b16 %v269
  %v1070 = vunpack.c.l.b16 %v270
  %v1071 = vunpack.c.h.b16 %v270
  %v1072 = vunpack.c.l.b16 %v271
  %v1073 = vunpack.c.h.b16 %v271
  %v1074 = vunpack.c.l.b16 %v272
  %v1075 = vunpack.c.h.b16 %v272
  %v1076 = vunpack.c.l.b16 %v273
  %v1077 = vunpack.c.h.b16 %v273
  %v1078 = vunpack.c.l.b16 %v274
  %v1079 = vunpack.c.h.b16 %v274
  %v1080 = vunpack.c.l.b16 %v275
  %v1081 = vunpack.c.h.b16 %v275
  %v1082 = vunpack.c.l.b16 %v276
  %v1083 = vunpack.c.h.b16 %v276
  %v1084 = vunpack.c.l.b16 %v277
  %v1085 = vunpack.c.h.b16 %v277
  %v1086 = vunpack.c.l.b16 %v278
  %v1087 = vunpack.c.h.b16 %v278
  %v1088 = vunpack.c.l.b16 %v279
  %v1089 = vunpack.c.h.b16 %v279
  %v1090 = vunpack.c.l.b16 %v280
  %v1091 = vunpack.c.h.b16 %v280
  %v1092 = vunpack.c.l.b16 %v281
  %v1093 = vunpack.c.h.b16 %v281
  %v1094 = vunpack.c.l.b16 %v282
  %v1095 = vunpack.c.h.b16 %v282
  %v1096 = vunpack.c.l.b16 %v283
  %v1097 = vunpack.c.h.b16 %v283
  %v1098 = vunpack.c.l.b16 %v284
  %v1099 = vunpack.c.h.b16 %v284
  %v1100 = vunpack.c.l.b16 %v285
  %v1101 = vunpack.c.h.b16 %v285
  %v1102 = vunpack.c.l.b16 %v286
  %v1103 = vunpack.c.h.b16 %v286
  %v1104 = vunpack.c.l.b16 %v287
  %v1105 = vunpack.c.h.b16 %v287
  %v1106 = vunpack.c.l.b16 %v288
  %v1107 = vunpack.c.h.b16 %v288
  %v1108 = vunpack.c.l.b16 %v289
  %v1109 = vunpack.c.h.b16 %v289
  %v1110 = vpack.c.b16 %v606, %v598
  %v1111 = vpack.c.b16 %v607, %v599
  %v1112 = vpack.c.b16 %v608, %v600
  %v1113 = vpack.c.b16 %v609, %v601
  %v1114 = vpack.c.b16 %v610, %v602
  %v1115 = vpack.c.b16 %v611, %v603
  %v1116 = vpack.c.b16 %v612, %v604
  %v1117 = vpack.c.b16 %v613, %v605
  %v1118 = vpack.c.b16 %v622, %v614
  %v1119 = vpack.c.b16 %v623, %v615
  %v1120 = vpack.c.b16 %v624, %v616
  %v1121 = vpack.c.b16 %v625, %v617
  %v1122 = vpack.c.b16 %v626, %v618
  %v1123 = vpack.c.b16 %v627, %v619
  %v1124 = vpack.c.b16 %v628, %v620
  %v1125 = vpack.c.b16 %v629, %v621
  %v1126 = vpack.c.b16 %v638, %v630
  %v1127 = vpack.c.b16 %v639, %v631
  %v1128 = vpack.c.b16 %v640, %v632
  %v1129 = vpack.c.b16 %v641, %v633
  %v1130 = vpack.c.b16 %v642, %v634
  %v1131 = vpack.c.b16 %v643, %v635
  %v1132 = vpack.c.b16 %v644, %v636
  %v1133 = vpack.c.b16 %v645, %v637
  %v1134 = vpack.c.b16 %v654, %v646
  %v1135 = vpack.c.b16 %v655, %v647
  %v1136 = vpack.c.b16 %v656, %v648
  %v1137 = vpack.c.b16 %v657, %v649
  %v1138 = vpack.c.b16 %v658, %v650
  %v1139 = vpack.c.b16 %v659, %v651
  %v1140 = vpack.c.b16 %v660, %v652
  %v1141 = vpack.c.b16 %v661, %v653
  %v1142 = vpack.c.b16 %v670, %v662
  %v1143 = vpack.c.b16 %v671, %v663
  %v1144 = vpack.c.b16 %v672, %v664
  %v1145 = vpack.c.b16 %v673, %v665
  %v1146 = vpack.c.b16 %v674, %v666
  %v1147 = vpack.c.b16 %v675, %v667
  %v1148 = vpack.c.b16 %v676, %v668
  %v1149 = vpack.c.b16 %v677, %v669
  %v1150 = vpack.c.b16 %v686, %v678
  %v1151 = vpack.c.b16 %v687, %v679
  %v1152 = vpack.c.b16 %v688, %v680
  %v1153 = vpack.c.b16 %v689, %v681
  %v1154 = vpack.c.b16 %v690, %v682
  %v1155 = vpack.c.b16 %v691, %v683
  %v1156 = vpack.c.b16 %v692, %v684
  %v1157 = vpack.c.b16 %v693, %v685
  %v1158 = vpack.c.b16 %v702, %v694
  %v1159 = vpack.c.b16 %v703, %v695
  %v1160 = vpack.c.b16 %v704, %v696
  %v1161 = vpack.c.b16 %v705, %v697
  %v1162 = vpack.c.b16 %v706, %v698
  %v1163 = vpack.c.b16 %v707, %v699
  %v1164 = vpack.c.b16 %v708, %v700
  %v1165 = vpack.c.b16 %v709, %v701
  %v1166 = vpack.c.b16 %v718, %v710
  %v1167 = vpack.c.b16 %v719, %v711
  %v1168 = vpack.c.b16 %v720, %v712
  %v1169 = vpack.c.b16 %v721, %v713
  %v1170 = vpack.c.b16 %v722, %v714
  %v1171 = vpack.c.b16 %v723, %v715
  %v1172 = vpack.c.b16 %v724, %v716
  %v1173 = vpack.c.b16 %v725, %v717
  %v1174 = vpack.c.b16 %v734, %v726
  %v1175 = vpack.c.b16 %v735, %v727
  %v1176 = vpack.c.b16 %v736, %v728
  %v1177 = vpack.c.b16 %v737, %v729
  %v1178 = vpack.c.b16 %v738, %v730
  %v1179 = vpack.c.b16 %v739, %v731
  %v1180 = vpack.c.b16 %v740, %v732
  %v1181 = vpack.c.b16 %v741, %v733
  %v1182 = vpack.c.b16 %v750, %v742
  %v1183 = vpack.c.b16 %v751, %v743
  %v1184 = vpack.c.b16 %v752, %v744
  %v1185 = vpack.c.b16 %v753, %v745
  %v1186 = vpack.c.b16 %v754, %v746
  %v1187 = vpack.c.b16 %v755, %v747
  %v1188 = vpack.c.b16 %v756, %v748
  %v1189 = vpack.c.b16 %v757, %v749
  %v1190 = vpack.c.b16 %v766, %v758
  %v1191 = vpack.c.b16 %v767, %v759
  %v1192 = vpack.c.b16 %v768, %v760
  %v1193 = vpack.c.b16 %v769, %v761
  %v1194 = vpack.c.b16 %v770, %v762
  %v1195 = vpack.c.b16 %v771, %v763
  %v1196 = vpack.c.b16 %v772, %v764
  %v1197 = vpack.c.b16 %v773, %v765
  %v1198 = vpack.c.b16 %v782, %v774
  %v1199 = vpack.c.b16 %v783, %v775
  %v1200 = vpack.c.b16 %v784, %v776
  %v1201 = vpack.c.b16 %v785, %v777
  %v1202 = vpack.c.b16 %v786, %v778
  %v1203 = vpack.c.b16 %v787, %v779
  %v1204 = vpack.c.b16 %v788, %v780
  %v1205 = vpack.c.b16 %v789, %v781
  %v1206 = vpack.c.b16 %v798, %v790
  %v1207 = vpack.c.b16 %v799, %v791
  %v1208 = vpack.c.b16 %v800, %v792
  %v1209 = vpack.c.b16 %v801, %v793
  %v1210 = vpack.c.b16 %v802, %v794
  %v1211 = vpack.c.b16 %v803, %v795
  %v1212 = vpack.c.b16 %v804, %v796
  %v1213 = vpack.c.b16 %v805, %v797
  %v1214 = vpack.c.b16 %v814, %v806
  %v1215 = vpack.c.b16 %v815, %v807
  %v1216 = vpack.c.b16 %v816, %v808
  %v1217 = vpack.c.b16 %v817, %v809
  %v1218 = vpack.c.b16 %v818, %v810
  %v1219 = vpack.c.b16 %v819, %v811
  %v1220 = vpack.c.b16 %v820, %v812
  %v1221 = vpack.c.b16 %v821, %v813
  %v1222 = vpack.c.b16 %v830, %v822
  %v1223 = vpack.c.b16 %v831, %v823
  %v1224 = vpack.c.b16 %v832, %v824
  %v1225 = vpack.c.b16 %v833, %v825
  %v1226 = vpack.c.b16 %v834, %v826
  %v1227 = vpack.c.b16 %v835, %v827
  %v1228 = vpack.c.b16 %v836, %v828
  %v1229 = vpack.c.b16 %v837, %v829
  %v1230 = vpack.c.b16 %v846, %v838
  %v1231 = vpack.c.b16 %v847, %v839
  %v1232 = vpack.c.b16 %v848, %v840
  %v1233 = vpack.c.b16 %v849, %v841
  %v1234 = vpack.c.b16 %v850, %v842
  %v1235 = vpack.c.b16 %v851, %v843
  %v1236 = vpack.c.b16 %v852, %v844
  %v1237 = vpack.c.b16 %v853, %v845
  %v1238 = vpack.c.b16 %v862, %v854
  %v1239 = vpack.c.b16 %v863, %v855
  %v1240 = vpack.c.b16 %v864, %v856
  %v1241 = vpack.c.b16 %v865, %v857
  %v1242 = vpack.c.b16 %v866, %v858
  %v1243 = vpack.c.b16 %v867, %v859
  %v1244 = vpack.c.b16 %v868, %v860
  %v1245 = vpack.c.b16 %v869, %v861
  %v1246 = vpack.c.b16 %v878, %v870
  %v1247 = vpack.c.b16 %v879, %v871
  %v1248 = vpack.c.b16 %v880, %v872
  %v1249 = vpack.c.b16 %v881, %v873
  %v1250 = vpack.c.b16 %v882, %v874
  %v1251 = vpack.c.b16 %v883, %v875
  %v1252 = vpack.c.b16 %v884, %v876
  %v1253 = vpack.c.b16 %v885, %v877
  %v1254 = vpack.c.b16 %v894, %v886
  %v1255 = vpack.c.b16 %v895, %v887
  %v1256 = vpack.c.b16 %v896, %v888
  %v1257 = vpack.c.b16 %v897, %v889
  %v1258 = vpack.c.b16 %v898, %v890
  %v1259 = vpack.c.b16 %v899, %v891
  %v1260 = vpack.c.b16 %v900, %v892
  %v1261 = vpack.c.b16 %v901, %v893
  %v1262 = vpack.c.b16 %v910, %v902
  %v1263 = vpack.c.b16 %v911, %v903
  %v1264 = vpack.c.b16 %v912, %v904
  %v1265 = vpack.c.b16 %v913, %v905
  %v1266 = vpack.c.b16 %v914, %v906
  %v1267 = vpack.c.b16 %v915, %v907
  %v1268 = vpack.c.b16 %v916, %v908
  %v1269 = vpack.c.b16 %v917, %v909
  %v1270 = vpack.c.b16 %v926, %v918
  %v1271 = vpack.c.b16 %v927, %v919
  %v1272 = vpack.c.b16 %v928, %v920
  %v1273 = vpack.c.b16 %v929, %v921
  %v1274 = vpack.c.b16 %v930, %v922
  %v1275 = vpack.c.b16 %v931, %v923
  %v1276 = vpack.c.b16 %v932, %v924
  %v1277 = vpack.c.b16 %v933, %v925
  %v1278 = vpack.c.b16 %v942, %v934
  %v1279 = vpack.c.b16 %v943, %v935
  %v1280 = vpack.c.b16 %v944, %v936
  %v1281 = vpack.c.b16 %v945, %v937
  %v1282 = vpack.c.b16 %v946, %v938
  %v1283 = vpack.c.b16 %v947, %v939
  %v1284 = vpack.c.b16 %v948, %v940
  %v1285 = vpack.c.b16 %v949, %v941
  %v1286 = vpack.c.b16 %v958, %v950
  %v1287 = vpack.c.b16 %v959, %v951
  %v1288 = vpack.c.b16 %v960, %v952
  %v1289 = vpack.c.b16 %v961, %v953
  %v1290 = vpack.c.b16 %v962, %v954
  %v1291 = vpack.c.b16 %v963, %v955
  %v1292 = vpack.c.b16 %v964, %v956
  %v1293 = vpack.c.b16 %v965, %v957
  %v1294 = vpack.c.b16 %v974, %v966
  %v1295 = vpack.c.b16 %v975, %v967
  %v1296 = vpack.c.b16 %v976, %v968
  %v1297 = vpack.c.b16 %v977, %v969
  %v1298 = vpack.c.b16 %v978, %v970
  %v1299 = vpack.c.b16 %v979, %v971
  %v1300 = vpack.c.b16 %v980, %v972
  %v1301 = vpack.c.b16 %v981, %v973
  %v1302 = vpack.c.b16 %v990, %v982
  %v1303 = vpack.c.b16 %v991, %v983
  %v1304 = vpack.c.b16 %v992, %v984
  %v1305 = vpack.c.b16 %v993, %v985
  %v1306 = vpack.c.b16 %v994, %v986
  %v1307 = vpack.c.b16 %v995, %v987
  %v1308 = vpack.c.b16 %v996, %v988
  %v1309 = vpack.c.b16 %v997, %v989
  %v1310 = vpack.c.b16 %v1006, %v998
  %v1311 = vpack.c.b16 %v1007, %v999
  %v1312 = vpack.c.b16 %v1008, %v1000
  %v1313 = vpack.c.b16 %v1009, %v1001
  %v1314 = vpack.c.b16 %v1010, %v1002
  %v1315 = vpack.c.b16 %v1011, %v1003
  %v1316 = vpack.c.b16 %v1012, %v1004
  %v1317 = vpack.c.b16 %v1013, %v1005
  %v1318 = vpack.c.b16 %v1022, %v1014
  %v1319 = vpack.c.b16 %v1023, %v1015
  %v1320 = vpack.c.b16 %v1024, %v1016
  %v1321 = vpack.c.b16 %v1025, %v1017
  %v1322 = vpack.c.b16 %v1026, %v1018
  %v1323 = vpack.c.b16 %v1027, %v1019
  %v1324 = vpack.c.b16 %v1028, %v1020
  %v1325 = vpack.c.b16 %v1029, %v1021
  %v1326 = vpack.c.b16 %v1038, %v1030
  %v1327 = vpack.c.b16 %v1039, %v1031
  %v1328 = vpack.c.b16 %v1040, %v1032
  %v1329 = vpack.c.b16 %v1041, %v1033
  %v1330 = vpack.c.b16 %v1042, %v1034
  %v1331 = vpack.c.b16 %v1043, %v1035
  %v1332 = vpack.c.b16 %v1044, %v1036
  %v1333 = vpack.c.b16 %v1045, %v1037
  %v1334 = vpack.c.b16 %v1054, %v1046
  %v1335 = vpack.c.b16 %v1055, %v1047
  %v1336 = vpack.c.b16 %v1056, %v1048
  %v1337 = vpack.c.b16 %v1057, %v1049
  %v1338 = vpack.c.b16 %v1058, %v1050
  %v1339 = vpack.c.b16 %v1059, %v1051
  %v1340 = vpack.c.b16 %v1060, %v1052
  %v1341 = vpack.c.b16 %v1061, %v1053
  %v1342 = vpack.c.b16 %v1070, %v1062
  %v1343 = vpack.c.b16 %v1071, %v1063
  %v1344 = vpack.c.b16 %v1072, %v1064
  %v1345 = vpack.c.b16 %v1073, %v1065
  %v1346 = vpack.c.b16 %v1074, %v1066
  %v1347 = vpack.c.b16 %v1075, %v1067
  %v1348 = vpack.c.b16 %v1076, %v1068
  %v1349 = vpack.c.b16 %v1077, %v1069
  %v1350 = vpack.c.b16 %v1086, %v1078
  %v1351 = vpack.c.b16 %v1087, %v1079
  %v1352 = vpack.c.b16 %v1088, %v1080
  %v1353 = vpack.c.b16 %v1089, %v1081
  %v1354 = vpack.c.b16 %v1090, %v1082
  %v1355 = vpack.c.b16 %v1091, %v1083
  %v1356 = vpack.c.b16 %v1092, %v1084
  %v1357 = vpack.c.b16 %v1093, %v1085
  %v1358 = vpack.c.b16 %v1102, %v1094
  %v1359 = vpack.c.b16 %v1103, %v1095
  %v1360 = vpack.c.b16 %v1104, %v1096
  %v1361 = vpack.c.b16 %v1105, %v1097
  %v1362 = vpack.c.b16 %v1106, %v1098
  %v1363 = vpack.c.b16 %v1107, %v1099
  %v1364 = vpack.c.b16 %v1108, %v1100
  %v1365 = vpack.c.b16 %v1109, %v1101
  %1622 = vmatpush.bf16.msra.mxu0 %v1166
  %1623 = vmatpush.bf16.msra.mxu0 %v1158
  %1624 = vmatpush.bf16.msra.mxu0 %v1150
  %1625 = vmatpush.bf16.msra.mxu0 %v1142
  %1626 = vmatpush.bf16.msra.mxu0 %v1134
  %1627 = vmatpush.bf16.msra.mxu0 %v1126
  %1628 = vmatpush.bf16.msra.mxu0 %v1118
  %1629 = vmatpush.bf16.msra.mxu0 %v1110
  %1630 = vmatmul.bf16.gmra.mxu0 %v326
  %v1631 = vpop.f32.mrf.mxu0
  %v1632 = vadd.f32 %v292, %v1631
  %v1633 = vpop.f32.mrf.mxu0
  %v1634 = vadd.f32 %v292, %v1633
  %1635 = vmatmul.bf16.gmra.mxu0 %v330
  %v1636 = vpop.f32.mrf.mxu0
  %v1637 = vadd.f32 %v292, %v1636
  %v1638 = vpop.f32.mrf.mxu0
  %1639 = vdwg.mxu0
  %1640 = vmatpush.bf16.msra.mxu0 %v1230
  %1641 = vmatpush.bf16.msra.mxu0 %v1222
  %1642 = vmatpush.bf16.msra.mxu0 %v1214
  %1643 = vmatpush.bf16.msra.mxu0 %v1206
  %1644 = vmatpush.bf16.msra.mxu0 %v1198
  %1645 = vmatpush.bf16.msra.mxu0 %v1190
  %1646 = vmatpush.bf16.msra.mxu0 %v1182
  %1647 = vmatpush.bf16.msra.mxu0 %v1174
  %1648 = vmatmul.bf16.gmra.mxu0 %v327
  %v1649 = vpop.f32.mrf.mxu0
  %v1650 = vadd.f32 %v1632, %v1649
  %v1651 = vpop.f32.mrf.mxu0
  %v1652 = vadd.f32 %v1634, %v1651
  %1653 = vmatmul.bf16.gmra.mxu0 %v331
  %v1654 = vpop.f32.mrf.mxu0
  %v1655 = vadd.f32 %v1637, %v1654
  %v1656 = vpop.f32.mrf.mxu0
  %1657 = vdwg.mxu0
  %1658 = vmatpush.bf16.msra.mxu0 %v1294
  %1659 = vmatpush.bf16.msra.mxu0 %v1286
  %1660 = vmatpush.bf16.msra.mxu0 %v1278
  %1661 = vmatpush.bf16.msra.mxu0 %v1270
  %1662 = vmatpush.bf16.msra.mxu0 %v1262
  %1663 = vmatpush.bf16.msra.mxu0 %v1254
  %1664 = vmatpush.bf16.msra.mxu0 %v1246
  %1665 = vmatpush.bf16.msra.mxu0 %v1238
  %1666 = vmatmul.bf16.gmra.mxu0 %v328
  %v1667 = vpop.f32.mrf.mxu0
  %v1668 = vadd.f32 %v1650, %v1667
  %v1669 = vpop.f32.mrf.mxu0
  %v1670 = vadd.f32 %v1652, %v1669
  %1671 = vmatmul.bf16.gmra.mxu0 %v332
  %v1672 = vpop.f32.mrf.mxu0
  %v1673 = vadd.f32 %v1655, %v1672
  %v1674 = vpop.f32.mrf.mxu0
  %1675 = vdwg.mxu0
  %1676 = vmatpush.bf16.msra.mxu0 %v1358
  %1677 = vmatpush.bf16.msra.mxu0 %v1350
  %1678 = vmatpush.bf16.msra.mxu0 %v1342
  %1679 = vmatpush.bf16.msra.mxu0 %v1334
  %1680 = vmatpush.bf16.msra.mxu0 %v1326
  %1681 = vmatpush.bf16.msra.mxu0 %v1318
  %1682 = vmatpush.bf16.msra.mxu0 %v1310
  %1683 = vmatpush.bf16.msra.mxu0 %v1302
  %1684 = vmatmul.bf16.gmra.mxu0 %v329
  %v1685 = vpop.f32.mrf.mxu0
  %v1686 = vadd.f32 %v1668, %v1685
  %v1687 = vpop.f32.mrf.mxu0
  %v1688 = vadd.f32 %v1670, %v1687
  %1689 = vmatmul.bf16.gmra.mxu0 %v333
  %v1690 = vpop.f32.mrf.mxu0
  %v1691 = vadd.f32 %v1673, %v1690
  %v1692 = vpop.f32.mrf.mxu0
  %1693 = vdwg.mxu0
  %1694 = vmatpush.bf16.msra.mxu0 %v1167
  %1695 = vmatpush.bf16.msra.mxu0 %v1159
  %1696 = vmatpush.bf16.msra.mxu0 %v1151
  %1697 = vmatpush.bf16.msra.mxu0 %v1143
  %1698 = vmatpush.bf16.msra.mxu0 %v1135
  %1699 = vmatpush.bf16.msra.mxu0 %v1127
  %1700 = vmatpush.bf16.msra.mxu0 %v1119
  %1701 = vmatpush.bf16.msra.mxu0 %v1111
  %1702 = vmatmul.bf16.gmra.mxu0 %v326
  %v1703 = vpop.f32.mrf.mxu0
  %v1704 = vadd.f32 %v293, %v1703
  %v1705 = vpop.f32.mrf.mxu0
  %v1706 = vadd.f32 %v293, %v1705
  %1707 = vmatmul.bf16.gmra.mxu0 %v330
  %v1708 = vpop.f32.mrf.mxu0
  %v1709 = vadd.f32 %v293, %v1708
  %v1710 = vpop.f32.mrf.mxu0
  %1711 = vdwg.mxu0
  %1712 = vmatpush.bf16.msra.mxu0 %v1231
  %1713 = vmatpush.bf16.msra.mxu0 %v1223
  %1714 = vmatpush.bf16.msra.mxu0 %v1215
  %1715 = vmatpush.bf16.msra.mxu0 %v1207
  %1716 = vmatpush.bf16.msra.mxu0 %v1199
  %1717 = vmatpush.bf16.msra.mxu0 %v1191
  %1718 = vmatpush.bf16.msra.mxu0 %v1183
  %1719 = vmatpush.bf16.msra.mxu0 %v1175
  %1720 = vmatmul.bf16.gmra.mxu0 %v327
  %v1721 = vpop.f32.mrf.mxu0
  %v1722 = vadd.f32 %v1704, %v1721
  %v1723 = vpop.f32.mrf.mxu0
  %v1724 = vadd.f32 %v1706, %v1723
  %1725 = vmatmul.bf16.gmra.mxu0 %v331
  %v1726 = vpop.f32.mrf.mxu0
  %v1727 = vadd.f32 %v1709, %v1726
  %v1728 = vpop.f32.mrf.mxu0
  %1729 = vdwg.mxu0
  %1730 = vmatpush.bf16.msra.mxu0 %v1295
  %1731 = vmatpush.bf16.msra.mxu0 %v1287
  %1732 = vmatpush.bf16.msra.mxu0 %v1279
  %1733 = vmatpush.bf16.msra.mxu0 %v1271
  %1734 = vmatpush.bf16.msra.mxu0 %v1263
  %1735 = vmatpush.bf16.msra.mxu0 %v1255
  %1736 = vmatpush.bf16.msra.mxu0 %v1247
  %1737 = vmatpush.bf16.msra.mxu0 %v1239
  %1738 = vmatmul.bf16.gmra.mxu0 %v328
  %v1739 = vpop.f32.mrf.mxu0
  %v1740 = vadd.f32 %v1722, %v1739
  %v1741 = vpop.f32.mrf.mxu0
  %v1742 = vadd.f32 %v1724, %v1741
  %1743 = vmatmul.bf16.gmra.mxu0 %v332
  %v1744 = vpop.f32.mrf.mxu0
  %v1745 = vadd.f32 %v1727, %v1744
  %v1746 = vpop.f32.mrf.mxu0
  %1747 = vdwg.mxu0
  %1748 = vmatpush.bf16.msra.mxu0 %v1359
  %1749 = vmatpush.bf16.msra.mxu0 %v1351
  %1750 = vmatpush.bf16.msra.mxu0 %v1343
  %1751 = vmatpush.bf16.msra.mxu0 %v1335
  %1752 = vmatpush.bf16.msra.mxu0 %v1327
  %1753 = vmatpush.bf16.msra.mxu0 %v1319
  %1754 = vmatpush.bf16.msra.mxu0 %v1311
  %1755 = vmatpush.bf16.msra.mxu0 %v1303
  %1756 = vmatmul.bf16.gmra.mxu0 %v329
  %v1757 = vpop.f32.mrf.mxu0
  %v1758 = vadd.f32 %v1740, %v1757
  %v1759 = vpop.f32.mrf.mxu0
  %v1760 = vadd.f32 %v1742, %v1759
  %1761 = vmatmul.bf16.gmra.mxu0 %v333
  %v1762 = vpop.f32.mrf.mxu0
  %v1763 = vadd.f32 %v1745, %v1762
  %v1764 = vpop.f32.mrf.mxu0
  %1765 = vdwg.mxu0
  %1766 = vmatpush.bf16.msra.mxu0 %v1168
  %1767 = vmatpush.bf16.msra.mxu0 %v1160
  %1768 = vmatpush.bf16.msra.mxu0 %v1152
  %1769 = vmatpush.bf16.msra.mxu0 %v1144
  %1770 = vmatpush.bf16.msra.mxu0 %v1136
  %1771 = vmatpush.bf16.msra.mxu0 %v1128
  %1772 = vmatpush.bf16.msra.mxu0 %v1120
  %1773 = vmatpush.bf16.msra.mxu0 %v1112
  %1774 = vmatmul.bf16.gmra.mxu0 %v326
  %v1775 = vpop.f32.mrf.mxu0
  %v1776 = vadd.f32 %v294, %v1775
  %v1777 = vpop.f32.mrf.mxu0
  %v1778 = vadd.f32 %v294, %v1777
  %1779 = vmatmul.bf16.gmra.mxu0 %v330
  %v1780 = vpop.f32.mrf.mxu0
  %v1781 = vadd.f32 %v294, %v1780
  %v1782 = vpop.f32.mrf.mxu0
  %1783 = vdwg.mxu0
  %1784 = vmatpush.bf16.msra.mxu0 %v1232
  %1785 = vmatpush.bf16.msra.mxu0 %v1224
  %1786 = vmatpush.bf16.msra.mxu0 %v1216
  %1787 = vmatpush.bf16.msra.mxu0 %v1208
  %1788 = vmatpush.bf16.msra.mxu0 %v1200
  %1789 = vmatpush.bf16.msra.mxu0 %v1192
  %1790 = vmatpush.bf16.msra.mxu0 %v1184
  %1791 = vmatpush.bf16.msra.mxu0 %v1176
  %1792 = vmatmul.bf16.gmra.mxu0 %v327
  %v1793 = vpop.f32.mrf.mxu0
  %v1794 = vadd.f32 %v1776, %v1793
  %v1795 = vpop.f32.mrf.mxu0
  %v1796 = vadd.f32 %v1778, %v1795
  %1797 = vmatmul.bf16.gmra.mxu0 %v331
  %v1798 = vpop.f32.mrf.mxu0
  %v1799 = vadd.f32 %v1781, %v1798
  %v1800 = vpop.f32.mrf.mxu0
  %1801 = vdwg.mxu0
  %1802 = vmatpush.bf16.msra.mxu0 %v1296
  %1803 = vmatpush.bf16.msra.mxu0 %v1288
  %1804 = vmatpush.bf16.msra.mxu0 %v1280
  %1805 = vmatpush.bf16.msra.mxu0 %v1272
  %1806 = vmatpush.bf16.msra.mxu0 %v1264
  %1807 = vmatpush.bf16.msra.mxu0 %v1256
  %1808 = vmatpush.bf16.msra.mxu0 %v1248
  %1809 = vmatpush.bf16.msra.mxu0 %v1240
  %1810 = vmatmul.bf16.gmra.mxu0 %v328
  %v1811 = vpop.f32.mrf.mxu0
  %v1812 = vadd.f32 %v1794, %v1811
  %v1813 = vpop.f32.mrf.mxu0
  %v1814 = vadd.f32 %v1796, %v1813
  %1815 = vmatmul.bf16.gmra.mxu0 %v332
  %v1816 = vpop.f32.mrf.mxu0
  %v1817 = vadd.f32 %v1799, %v1816
  %v1818 = vpop.f32.mrf.mxu0
  %1819 = vdwg.mxu0
  %1820 = vmatpush.bf16.msra.mxu0 %v1360
  %1821 = vmatpush.bf16.msra.mxu0 %v1352
  %1822 = vmatpush.bf16.msra.mxu0 %v1344
  %1823 = vmatpush.bf16.msra.mxu0 %v1336
  %1824 = vmatpush.bf16.msra.mxu0 %v1328
  %1825 = vmatpush.bf16.msra.mxu0 %v1320
  %1826 = vmatpush.bf16.msra.mxu0 %v1312
  %1827 = vmatpush.bf16.msra.mxu0 %v1304
  %1828 = vmatmul.bf16.gmra.mxu0 %v329
  %v1829 = vpop.f32.mrf.mxu0
  %v1830 = vadd.f32 %v1812, %v1829
  %v1831 = vpop.f32.mrf.mxu0
  %v1832 = vadd.f32 %v1814, %v1831
  %1833 = vmatmul.bf16.gmra.mxu0 %v333
  %v1834 = vpop.f32.mrf.mxu0
  %v1835 = vadd.f32 %v1817, %v1834
  %v1836 = vpop.f32.mrf.mxu0
  %1837 = vdwg.mxu0
  %1838 = vmatpush.bf16.msra.mxu0 %v1169
  %1839 = vmatpush.bf16.msra.mxu0 %v1161
  %1840 = vmatpush.bf16.msra.mxu0 %v1153
  %1841 = vmatpush.bf16.msra.mxu0 %v1145
  %1842 = vmatpush.bf16.msra.mxu0 %v1137
  %1843 = vmatpush.bf16.msra.mxu0 %v1129
  %1844 = vmatpush.bf16.msra.mxu0 %v1121
  %1845 = vmatpush.bf16.msra.mxu0 %v1113
  %1846 = vmatmul.bf16.gmra.mxu0 %v326
  %v1847 = vpop.f32.mrf.mxu0
  %v1848 = vadd.f32 %v295, %v1847
  %v1849 = vpop.f32.mrf.mxu0
  %v1850 = vadd.f32 %v295, %v1849
  %1851 = vmatmul.bf16.gmra.mxu0 %v330
  %v1852 = vpop.f32.mrf.mxu0
  %v1853 = vadd.f32 %v295, %v1852
  %v1854 = vpop.f32.mrf.mxu0
  %1855 = vdwg.mxu0
  %1856 = vmatpush.bf16.msra.mxu0 %v1233
  %1857 = vmatpush.bf16.msra.mxu0 %v1225
  %1858 = vmatpush.bf16.msra.mxu0 %v1217
  %1859 = vmatpush.bf16.msra.mxu0 %v1209
  %1860 = vmatpush.bf16.msra.mxu0 %v1201
  %1861 = vmatpush.bf16.msra.mxu0 %v1193
  %1862 = vmatpush.bf16.msra.mxu0 %v1185
  %1863 = vmatpush.bf16.msra.mxu0 %v1177
  %1864 = vmatmul.bf16.gmra.mxu0 %v327
  %v1865 = vpop.f32.mrf.mxu0
  %v1866 = vadd.f32 %v1848, %v1865
  %v1867 = vpop.f32.mrf.mxu0
  %v1868 = vadd.f32 %v1850, %v1867
  %1869 = vmatmul.bf16.gmra.mxu0 %v331
  %v1870 = vpop.f32.mrf.mxu0
  %v1871 = vadd.f32 %v1853, %v1870
  %v1872 = vpop.f32.mrf.mxu0
  %1873 = vdwg.mxu0
  %1874 = vmatpush.bf16.msra.mxu0 %v1297
  %1875 = vmatpush.bf16.msra.mxu0 %v1289
  %1876 = vmatpush.bf16.msra.mxu0 %v1281
  %1877 = vmatpush.bf16.msra.mxu0 %v1273
  %1878 = vmatpush.bf16.msra.mxu0 %v1265
  %1879 = vmatpush.bf16.msra.mxu0 %v1257
  %1880 = vmatpush.bf16.msra.mxu0 %v1249
  %1881 = vmatpush.bf16.msra.mxu0 %v1241
  %1882 = vmatmul.bf16.gmra.mxu0 %v328
  %v1883 = vpop.f32.mrf.mxu0
  %v1884 = vadd.f32 %v1866, %v1883
  %v1885 = vpop.f32.mrf.mxu0
  %v1886 = vadd.f32 %v1868, %v1885
  %1887 = vmatmul.bf16.gmra.mxu0 %v332
  %v1888 = vpop.f32.mrf.mxu0
  %v1889 = vadd.f32 %v1871, %v1888
  %v1890 = vpop.f32.mrf.mxu0
  %1891 = vdwg.mxu0
  %1892 = vmatpush.bf16.msra.mxu0 %v1361
  %1893 = vmatpush.bf16.msra.mxu0 %v1353
  %1894 = vmatpush.bf16.msra.mxu0 %v1345
  %1895 = vmatpush.bf16.msra.mxu0 %v1337
  %1896 = vmatpush.bf16.msra.mxu0 %v1329
  %1897 = vmatpush.bf16.msra.mxu0 %v1321
  %1898 = vmatpush.bf16.msra.mxu0 %v1313
  %1899 = vmatpush.bf16.msra.mxu0 %v1305
  %1900 = vmatmul.bf16.gmra.mxu0 %v329
  %v1901 = vpop.f32.mrf.mxu0
  %v1902 = vadd.f32 %v1884, %v1901
  %v1903 = vpop.f32.mrf.mxu0
  %v1904 = vadd.f32 %v1886, %v1903
  %1905 = vmatmul.bf16.gmra.mxu0 %v333
  %v1906 = vpop.f32.mrf.mxu0
  %v1907 = vadd.f32 %v1889, %v1906
  %v1908 = vpop.f32.mrf.mxu0
  %1909 = vdwg.mxu0
  %1910 = vmatpush.bf16.msra.mxu0 %v1170
  %1911 = vmatpush.bf16.msra.mxu0 %v1162
  %1912 = vmatpush.bf16.msra.mxu0 %v1154
  %1913 = vmatpush.bf16.msra.mxu0 %v1146
  %1914 = vmatpush.bf16.msra.mxu0 %v1138
  %1915 = vmatpush.bf16.msra.mxu0 %v1130
  %1916 = vmatpush.bf16.msra.mxu0 %v1122
  %1917 = vmatpush.bf16.msra.mxu0 %v1114
  %1918 = vmatmul.bf16.gmra.mxu0 %v326
  %v1919 = vpop.f32.mrf.mxu0
  %v1920 = vadd.f32 %v296, %v1919
  %v1921 = vpop.f32.mrf.mxu0
  %v1922 = vadd.f32 %v296, %v1921
  %1923 = vmatmul.bf16.gmra.mxu0 %v330
  %v1924 = vpop.f32.mrf.mxu0
  %v1925 = vadd.f32 %v296, %v1924
  %v1926 = vpop.f32.mrf.mxu0
  %1927 = vdwg.mxu0
  %1928 = vmatpush.bf16.msra.mxu0 %v1234
  %1929 = vmatpush.bf16.msra.mxu0 %v1226
  %1930 = vmatpush.bf16.msra.mxu0 %v1218
  %1931 = vmatpush.bf16.msra.mxu0 %v1210
  %1932 = vmatpush.bf16.msra.mxu0 %v1202
  %1933 = vmatpush.bf16.msra.mxu0 %v1194
  %1934 = vmatpush.bf16.msra.mxu0 %v1186
  %1935 = vmatpush.bf16.msra.mxu0 %v1178
  %1936 = vmatmul.bf16.gmra.mxu0 %v327
  %v1937 = vpop.f32.mrf.mxu0
  %v1938 = vadd.f32 %v1920, %v1937
  %v1939 = vpop.f32.mrf.mxu0
  %v1940 = vadd.f32 %v1922, %v1939
  %1941 = vmatmul.bf16.gmra.mxu0 %v331
  %v1942 = vpop.f32.mrf.mxu0
  %v1943 = vadd.f32 %v1925, %v1942
  %v1944 = vpop.f32.mrf.mxu0
  %1945 = vdwg.mxu0
  %1946 = vmatpush.bf16.msra.mxu0 %v1298
  %1947 = vmatpush.bf16.msra.mxu0 %v1290
  %1948 = vmatpush.bf16.msra.mxu0 %v1282
  %1949 = vmatpush.bf16.msra.mxu0 %v1274
  %1950 = vmatpush.bf16.msra.mxu0 %v1266
  %1951 = vmatpush.bf16.msra.mxu0 %v1258
  %1952 = vmatpush.bf16.msra.mxu0 %v1250
  %1953 = vmatpush.bf16.msra.mxu0 %v1242
  %1954 = vmatmul.bf16.gmra.mxu0 %v328
  %v1955 = vpop.f32.mrf.mxu0
  %v1956 = vadd.f32 %v1938, %v1955
  %v1957 = vpop.f32.mrf.mxu0
  %v1958 = vadd.f32 %v1940, %v1957
  %1959 = vmatmul.bf16.gmra.mxu0 %v332
  %v1960 = vpop.f32.mrf.mxu0
  %v1961 = vadd.f32 %v1943, %v1960
  %v1962 = vpop.f32.mrf.mxu0
  %1963 = vdwg.mxu0
  %1964 = vmatpush.bf16.msra.mxu0 %v1362
  %1965 = vmatpush.bf16.msra.mxu0 %v1354
  %1966 = vmatpush.bf16.msra.mxu0 %v1346
  %1967 = vmatpush.bf16.msra.mxu0 %v1338
  %1968 = vmatpush.bf16.msra.mxu0 %v1330
  %1969 = vmatpush.bf16.msra.mxu0 %v1322
  %1970 = vmatpush.bf16.msra.mxu0 %v1314
  %1971 = vmatpush.bf16.msra.mxu0 %v1306
  %1972 = vmatmul.bf16.gmra.mxu0 %v329
  %v1973 = vpop.f32.mrf.mxu0
  %v1974 = vadd.f32 %v1956, %v1973
  %v1975 = vpop.f32.mrf.mxu0
  %v1976 = vadd.f32 %v1958, %v1975
  %1977 = vmatmul.bf16.gmra.mxu0 %v333
  %v1978 = vpop.f32.mrf.mxu0
  %v1979 = vadd.f32 %v1961, %v1978
  %v1980 = vpop.f32.mrf.mxu0
  %1981 = vdwg.mxu0
  %1982 = vmatpush.bf16.msra.mxu0 %v1171
  %1983 = vmatpush.bf16.msra.mxu0 %v1163
  %1984 = vmatpush.bf16.msra.mxu0 %v1155
  %1985 = vmatpush.bf16.msra.mxu0 %v1147
  %1986 = vmatpush.bf16.msra.mxu0 %v1139
  %1987 = vmatpush.bf16.msra.mxu0 %v1131
  %1988 = vmatpush.bf16.msra.mxu0 %v1123
  %1989 = vmatpush.bf16.msra.mxu0 %v1115
  %1990 = vmatmul.bf16.gmra.mxu0 %v326
  %v1991 = vpop.f32.mrf.mxu0
  %v1992 = vadd.f32 %v297, %v1991
  %v1993 = vpop.f32.mrf.mxu0
  %v1994 = vadd.f32 %v297, %v1993
  %1995 = vmatmul.bf16.gmra.mxu0 %v330
  %v1996 = vpop.f32.mrf.mxu0
  %v1997 = vadd.f32 %v297, %v1996
  %v1998 = vpop.f32.mrf.mxu0
  %1999 = vdwg.mxu0
  %2000 = vmatpush.bf16.msra.mxu0 %v1235
  %2001 = vmatpush.bf16.msra.mxu0 %v1227
  %2002 = vmatpush.bf16.msra.mxu0 %v1219
  %2003 = vmatpush.bf16.msra.mxu0 %v1211
  %2004 = vmatpush.bf16.msra.mxu0 %v1203
  %2005 = vmatpush.bf16.msra.mxu0 %v1195
  %2006 = vmatpush.bf16.msra.mxu0 %v1187
  %2007 = vmatpush.bf16.msra.mxu0 %v1179
  %2008 = vmatmul.bf16.gmra.mxu0 %v327
  %v2009 = vpop.f32.mrf.mxu0
  %v2010 = vadd.f32 %v1992, %v2009
  %v2011 = vpop.f32.mrf.mxu0
  %v2012 = vadd.f32 %v1994, %v2011
  %2013 = vmatmul.bf16.gmra.mxu0 %v331
  %v2014 = vpop.f32.mrf.mxu0
  %v2015 = vadd.f32 %v1997, %v2014
  %v2016 = vpop.f32.mrf.mxu0
  %2017 = vdwg.mxu0
  %2018 = vmatpush.bf16.msra.mxu0 %v1299
  %2019 = vmatpush.bf16.msra.mxu0 %v1291
  %2020 = vmatpush.bf16.msra.mxu0 %v1283
  %2021 = vmatpush.bf16.msra.mxu0 %v1275
  %2022 = vmatpush.bf16.msra.mxu0 %v1267
  %2023 = vmatpush.bf16.msra.mxu0 %v1259
  %2024 = vmatpush.bf16.msra.mxu0 %v1251
  %2025 = vmatpush.bf16.msra.mxu0 %v1243
  %2026 = vmatmul.bf16.gmra.mxu0 %v328
  %v2027 = vpop.f32.mrf.mxu0
  %v2028 = vadd.f32 %v2010, %v2027
  %v2029 = vpop.f32.mrf.mxu0
  %v2030 = vadd.f32 %v2012, %v2029
  %2031 = vmatmul.bf16.gmra.mxu0 %v332
  %v2032 = vpop.f32.mrf.mxu0
  %v2033 = vadd.f32 %v2015, %v2032
  %v2034 = vpop.f32.mrf.mxu0
  %2035 = vdwg.mxu0
  %2036 = vmatpush.bf16.msra.mxu0 %v1363
  %2037 = vmatpush.bf16.msra.mxu0 %v1355
  %2038 = vmatpush.bf16.msra.mxu0 %v1347
  %2039 = vmatpush.bf16.msra.mxu0 %v1339
  %2040 = vmatpush.bf16.msra.mxu0 %v1331
  %2041 = vmatpush.bf16.msra.mxu0 %v1323
  %2042 = vmatpush.bf16.msra.mxu0 %v1315
  %2043 = vmatpush.bf16.msra.mxu0 %v1307
  %2044 = vmatmul.bf16.gmra.mxu0 %v329
  %v2045 = vpop.f32.mrf.mxu0
  %v2046 = vadd.f32 %v2028, %v2045
  %v2047 = vpop.f32.mrf.mxu0
  %v2048 = vadd.f32 %v2030, %v2047
  %2049 = vmatmul.bf16.gmra.mxu0 %v333
  %v2050 = vpop.f32.mrf.mxu0
  %v2051 = vadd.f32 %v2033, %v2050
  %v2052 = vpop.f32.mrf.mxu0
  %2053 = vdwg.mxu0
  %2054 = vmatpush.bf16.msra.mxu0 %v1172
  %2055 = vmatpush.bf16.msra.mxu0 %v1164
  %2056 = vmatpush.bf16.msra.mxu0 %v1156
  %2057 = vmatpush.bf16.msra.mxu0 %v1148
  %2058 = vmatpush.bf16.msra.mxu0 %v1140
  %2059 = vmatpush.bf16.msra.mxu0 %v1132
  %2060 = vmatpush.bf16.msra.mxu0 %v1124
  %2061 = vmatpush.bf16.msra.mxu0 %v1116
  %2062 = vmatmul.bf16.gmra.mxu0 %v326
  %v2063 = vpop.f32.mrf.mxu0
  %v2064 = vadd.f32 %v298, %v2063
  %v2065 = vpop.f32.mrf.mxu0
  %v2066 = vadd.f32 %v298, %v2065
  %2067 = vmatmul.bf16.gmra.mxu0 %v330
  %v2068 = vpop.f32.mrf.mxu0
  %v2069 = vadd.f32 %v298, %v2068
  %v2070 = vpop.f32.mrf.mxu0
  %2071 = vdwg.mxu0
  %2072 = vmatpush.bf16.msra.mxu0 %v1236
  %2073 = vmatpush.bf16.msra.mxu0 %v1228
  %2074 = vmatpush.bf16.msra.mxu0 %v1220
  %2075 = vmatpush.bf16.msra.mxu0 %v1212
  %2076 = vmatpush.bf16.msra.mxu0 %v1204
  %2077 = vmatpush.bf16.msra.mxu0 %v1196
  %2078 = vmatpush.bf16.msra.mxu0 %v1188
  %2079 = vmatpush.bf16.msra.mxu0 %v1180
  %2080 = vmatmul.bf16.gmra.mxu0 %v327
  %v2081 = vpop.f32.mrf.mxu0
  %v2082 = vadd.f32 %v2064, %v2081
  %v2083 = vpop.f32.mrf.mxu0
  %v2084 = vadd.f32 %v2066, %v2083
  %2085 = vmatmul.bf16.gmra.mxu0 %v331
  %v2086 = vpop.f32.mrf.mxu0
  %v2087 = vadd.f32 %v2069, %v2086
  %v2088 = vpop.f32.mrf.mxu0
  %2089 = vdwg.mxu0
  %2090 = vmatpush.bf16.msra.mxu0 %v1300
  %2091 = vmatpush.bf16.msra.mxu0 %v1292
  %2092 = vmatpush.bf16.msra.mxu0 %v1284
  %2093 = vmatpush.bf16.msra.mxu0 %v1276
  %2094 = vmatpush.bf16.msra.mxu0 %v1268
  %2095 = vmatpush.bf16.msra.mxu0 %v1260
  %2096 = vmatpush.bf16.msra.mxu0 %v1252
  %2097 = vmatpush.bf16.msra.mxu0 %v1244
  %2098 = vmatmul.bf16.gmra.mxu0 %v328
  %v2099 = vpop.f32.mrf.mxu0
  %v2100 = vadd.f32 %v2082, %v2099
  %v2101 = vpop.f32.mrf.mxu0
  %v2102 = vadd.f32 %v2084, %v2101
  %2103 = vmatmul.bf16.gmra.mxu0 %v332
  %v2104 = vpop.f32.mrf.mxu0
  %v2105 = vadd.f32 %v2087, %v2104
  %v2106 = vpop.f32.mrf.mxu0
  %2107 = vdwg.mxu0
  %2108 = vmatpush.bf16.msra.mxu0 %v1364
  %2109 = vmatpush.bf16.msra.mxu0 %v1356
  %2110 = vmatpush.bf16.msra.mxu0 %v1348
  %2111 = vmatpush.bf16.msra.mxu0 %v1340
  %2112 = vmatpush.bf16.msra.mxu0 %v1332
  %2113 = vmatpush.bf16.msra.mxu0 %v1324
  %2114 = vmatpush.bf16.msra.mxu0 %v1316
  %2115 = vmatpush.bf16.msra.mxu0 %v1308
  %2116 = vmatmul.bf16.gmra.mxu0 %v329
  %v2117 = vpop.f32.mrf.mxu0
  %v2118 = vadd.f32 %v2100, %v2117
  %v2119 = vpop.f32.mrf.mxu0
  %v2120 = vadd.f32 %v2102, %v2119
  %2121 = vmatmul.bf16.gmra.mxu0 %v333
  %v2122 = vpop.f32.mrf.mxu0
  %v2123 = vadd.f32 %v2105, %v2122
  %v2124 = vpop.f32.mrf.mxu0
  %2125 = vdwg.mxu0
  %2126 = vmatpush.bf16.msra.mxu0 %v1173
  %2127 = vmatpush.bf16.msra.mxu0 %v1165
  %2128 = vmatpush.bf16.msra.mxu0 %v1157
  %2129 = vmatpush.bf16.msra.mxu0 %v1149
  %2130 = vmatpush.bf16.msra.mxu0 %v1141
  %2131 = vmatpush.bf16.msra.mxu0 %v1133
  %2132 = vmatpush.bf16.msra.mxu0 %v1125
  %2133 = vmatpush.bf16.msra.mxu0 %v1117
  %2134 = vmatmul.bf16.gmra.mxu0 %v326
  %v2135 = vpop.f32.mrf.mxu0
  %v2136 = vadd.f32 %v299, %v2135
  %v2137 = vpop.f32.mrf.mxu0
  %v2138 = vadd.f32 %v299, %v2137
  %2139 = vmatmul.bf16.gmra.mxu0 %v330
  %v2140 = vpop.f32.mrf.mxu0
  %v2141 = vadd.f32 %v299, %v2140
  %v2142 = vpop.f32.mrf.mxu0
  %2143 = vdwg.mxu0
  %2144 = vmatpush.bf16.msra.mxu0 %v1237
  %2145 = vmatpush.bf16.msra.mxu0 %v1229
  %2146 = vmatpush.bf16.msra.mxu0 %v1221
  %2147 = vmatpush.bf16.msra.mxu0 %v1213
  %2148 = vmatpush.bf16.msra.mxu0 %v1205
  %2149 = vmatpush.bf16.msra.mxu0 %v1197
  %2150 = vmatpush.bf16.msra.mxu0 %v1189
  %2151 = vmatpush.bf16.msra.mxu0 %v1181
  %2152 = vmatmul.bf16.gmra.mxu0 %v327
  %v2153 = vpop.f32.mrf.mxu0
  %v2154 = vadd.f32 %v2136, %v2153
  %v2155 = vpop.f32.mrf.mxu0
  %v2156 = vadd.f32 %v2138, %v2155
  %2157 = vmatmul.bf16.gmra.mxu0 %v331
  %v2158 = vpop.f32.mrf.mxu0
  %v2159 = vadd.f32 %v2141, %v2158
  %v2160 = vpop.f32.mrf.mxu0
  %2161 = vdwg.mxu0
  %2162 = vmatpush.bf16.msra.mxu0 %v1301
  %2163 = vmatpush.bf16.msra.mxu0 %v1293
  %2164 = vmatpush.bf16.msra.mxu0 %v1285
  %2165 = vmatpush.bf16.msra.mxu0 %v1277
  %2166 = vmatpush.bf16.msra.mxu0 %v1269
  %2167 = vmatpush.bf16.msra.mxu0 %v1261
  %2168 = vmatpush.bf16.msra.mxu0 %v1253
  %2169 = vmatpush.bf16.msra.mxu0 %v1245
  %2170 = vmatmul.bf16.gmra.mxu0 %v328
  %v2171 = vpop.f32.mrf.mxu0
  %v2172 = vadd.f32 %v2154, %v2171
  %v2173 = vpop.f32.mrf.mxu0
  %v2174 = vadd.f32 %v2156, %v2173
  %2175 = vmatmul.bf16.gmra.mxu0 %v332
  %v2176 = vpop.f32.mrf.mxu0
  %v2177 = vadd.f32 %v2159, %v2176
  %v2178 = vpop.f32.mrf.mxu0
  %2179 = vdwg.mxu0
  %2180 = vmatpush.bf16.msra.mxu0 %v1365
  %2181 = vmatpush.bf16.msra.mxu0 %v1357
  %2182 = vmatpush.bf16.msra.mxu0 %v1349
  %2183 = vmatpush.bf16.msra.mxu0 %v1341
  %2184 = vmatpush.bf16.msra.mxu0 %v1333
  %2185 = vmatpush.bf16.msra.mxu0 %v1325
  %2186 = vmatpush.bf16.msra.mxu0 %v1317
  %2187 = vmatpush.bf16.msra.mxu0 %v1309
  %2188 = vmatmul.bf16.gmra.mxu0 %v329
  %v2189 = vpop.f32.mrf.mxu0
  %v2190 = vadd.f32 %v2172, %v2189
  %v2191 = vpop.f32.mrf.mxu0
  %v2192 = vadd.f32 %v2174, %v2191
  %2193 = vmatmul.bf16.gmra.mxu0 %v333
  %v2194 = vpop.f32.mrf.mxu0
  %v2195 = vadd.f32 %v2177, %v2194
  %v2196 = vpop.f32.mrf.mxu0
  %2197 = vdwg.mxu0
  %v2198 = vmax.f32 %v1686, 0.0
  %v2199 = vmax.f32 %v1758, 0.0
  %v2200 = vmax.f32 %v1830, 0.0
  %v2201 = vmax.f32 %v1902, 0.0
  %v2202 = vmax.f32 %v1974, 0.0
  %v2203 = vmax.f32 %v2046, 0.0
  %v2204 = vmax.f32 %v2118, 0.0
  %v2205 = vmax.f32 %v2190, 0.0
  %v2206 = vmax.f32 %v1688, 0.0
  %v2207 = vmax.f32 %v1760, 0.0
  %v2208 = vmax.f32 %v1832, 0.0
  %v2209 = vmax.f32 %v1904, 0.0
  %v2210 = vmax.f32 %v1976, 0.0
  %v2211 = vmax.f32 %v2048, 0.0
  %v2212 = vmax.f32 %v2120, 0.0
  %v2213 = vmax.f32 %v2192, 0.0
  %v2214 = vmax.f32 %v1691, 0.0
  %v2215 = vmax.f32 %v1763, 0.0
  %v2216 = vmax.f32 %v1835, 0.0
  %v2217 = vmax.f32 %v1907, 0.0
  %v2218 = vmax.f32 %v1979, 0.0
  %v2219 = vmax.f32 %v2051, 0.0
  %v2220 = vmax.f32 %v2123, 0.0
  %v2221 = vmax.f32 %v2195, 0.0
  %v2222 = vpack.c.bf16 %v2206, %v2198
  %v2223 = vpack.c.bf16 %v2207, %v2199
  %v2224 = vpack.c.bf16 %v2208, %v2200
  %v2225 = vpack.c.bf16 %v2209, %v2201
  %v2226 = vpack.c.bf16 %v2210, %v2202
  %v2227 = vpack.c.bf16 %v2211, %v2203
  %v2228 = vpack.c.bf16 %v2212, %v2204
  %v2229 = vpack.c.bf16 %v2213, %v2205
  %v2230 = vpack.c.bf16 %v2214, %v2214
  %v2231 = vpack.c.bf16 %v2215, %v2215
  %v2232 = vpack.c.bf16 %v2216, %v2216
  %v2233 = vpack.c.bf16 %v2217, %v2217
  %v2234 = vpack.c.bf16 %v2218, %v2218
  %v2235 = vpack.c.bf16 %v2219, %v2219
  %v2236 = vpack.c.bf16 %v2220, %v2220
  %v2237 = vpack.c.bf16 %v2221, %v2221
  %v2238 = vld [vmem:[%s3] sm:$0xff]
  %v2239 = vld [vmem:[%s3 + $0x8] sm:$0xff]
  %v2240 = vld [vmem:[%s3 + $0x10] sm:$0xff]
  %v2241 = vld [vmem:[%s3 + $0x18] sm:$0xff]
  %v2242 = vld [vmem:[%s3 + $0x20] sm:$0xff]
  %v2243 = vld [vmem:[%s3 + $0x28] sm:$0xff]
  %v2244 = vld [vmem:[%s3 + $0x30] sm:$0xff]
  %v2245 = vld [vmem:[%s3 + $0x38] sm:$0xff]
  %v2246 = vld [vmem:[%s3 + $0x40] sm:$0xff]
  %v2247 = vld [vmem:[%s3 + $0x48] sm:$0xff]
  %v2248 = vld [vmem:[%s3 + $0x50] sm:$0xff]
  %v2249 = vld [vmem:[%s3 + $0x58] sm:$0xff]
  %v2250 = vld [vmem:[%s3 + $0x60] sm:$0xff]
  %v2251 = vld [vmem:[%s3 + $0x68] sm:$0xff]
  %v2252 = vld [vmem:[%s3 + $0x70] sm:$0xff]
  %v2253 = vld [vmem:[%s3 + $0x78] sm:$0xff]
  %v2254 = vld [vmem:[%s3 + $0x80] sm:$0xff]
  %v2255 = vld [vmem:[%s3 + $0x88] sm:$0xff]
  %v2256 = vld [vmem:[%s3 + $0x90] sm:$0xff]
  %v2257 = vld [vmem:[%s3 + $0x98] sm:$0xff]
  %v2258 = vld [vmem:[%s3 + $0xa0] sm:$0xff]
  %v2259 = vld [vmem:[%s3 + $0xa8] sm:$0xff]
  %v2260 = vld [vmem:[%s3 + $0xb0] sm:$0xff]
  %v2261 = vld [vmem:[%s3 + $0xb8] sm:$0xff]
  %v2262 = vld [vmem:[%s3 + $0xc0] sm:$0xff]
  %v2263 = vld [vmem:[%s3 + $0xc8] sm:$0xff]
  %v2264 = vld [vmem:[%s3 + $0xd0] sm:$0xff]
  %v2265 = vld [vmem:[%s3 + $0xd8] sm:$0xff]
  %v2266 = vld [vmem:[%s3 + $0xe0] sm:$0xff]
  %v2267 = vld [vmem:[%s3 + $0xe8] sm:$0xff]
  %v2268 = vld [vmem:[%s3 + $0xf0] sm:$0xff]
  %v2269 = vld [vmem:[%s3 + $0xf8] sm:$0xff]
  %v2270 = vld [vmem:[%s3 + $0x100] sm:$0xff]
  %v2271 = vld [vmem:[%s3 + $0x108] sm:$0xff]
  %v2272 = vld [vmem:[%s3 + $0x110] sm:$0xff]
  %v2273 = vld [vmem:[%s3 + $0x118] sm:$0xff]
  %v2274 = vld [vmem:[%s3 + $0x120] sm:$0xff]
  %v2275 = vld [vmem:[%s3 + $0x128] sm:$0xff]
  %v2276 = vld [vmem:[%s3 + $0x130] sm:$0xff]
  %v2277 = vld [vmem:[%s3 + $0x138] sm:$0xff]
  %v2278 = vld [vmem:[%s3 + $0x140] sm:$0xff]
  %v2279 = vld [vmem:[%s3 + $0x148] sm:$0xff]
  %v2280 = vld [vmem:[%s3 + $0x150] sm:$0xff]
  %v2281 = vld [vmem:[%s3 + $0x158] sm:$0xff]
  %v2282 = vld [vmem:[%s3 + $0x160] sm:$0xff]
  %v2283 = vld [vmem:[%s3 + $0x168] sm:$0xff]
  %v2284 = vld [vmem:[%s3 + $0x170] sm:$0xff]
  %v2285 = vld [vmem:[%s3 + $0x178] sm:$0xff]
  %v2286 = vld [vmem:[%s3 + $0x180] sm:$0xff]
  %v2287 = vld [vmem:[%s3 + $0x188] sm:$0xff]
  %v2288 = vld [vmem:[%s3 + $0x190] sm:$0xff]
  %v2289 = vld [vmem:[%s3 + $0x198] sm:$0xff]
  %v2290 = vld [vmem:[%s3 + $0x1a0] sm:$0xff]
  %v2291 = vld [vmem:[%s3 + $0x1a8] sm:$0xff]
  %v2292 = vld [vmem:[%s3 + $0x1b0] sm:$0xff]
  %v2293 = vld [vmem:[%s3 + $0x1b8] sm:$0xff]
  %v2294 = vld [vmem:[%s3 + $0x1c0] sm:$0xff]
  %v2295 = vld [vmem:[%s3 + $0x1c8] sm:$0xff]
  %v2296 = vld [vmem:[%s3 + $0x1d0] sm:$0xff]
  %v2297 = vld [vmem:[%s3 + $0x1d8] sm:$0xff]
  %v2298 = vld [vmem:[%s3 + $0x1e0] sm:$0xff]
  %v2299 = vld [vmem:[%s3 + $0x1e8] sm:$0xff]
  %v2300 = vld [vmem:[%s3 + $0x1f0] sm:$0xff]
  %v2301 = vld [vmem:[%s3 + $0x1f8] sm:$0xff]
  %v2302 = vld [vmem:[%s3 + $0x200] sm:$0xff]
  %v2303 = vld [vmem:[%s3 + $0x208] sm:$0xff]
  %v2304 = vld [vmem:[%s3 + $0x210] sm:$0xff]
  %v2305 = vld [vmem:[%s3 + $0x218] sm:$0xff]
  %v2306 = vld [vmem:[%s3 + $0x220] sm:$0xff]
  %v2307 = vld [vmem:[%s3 + $0x228] sm:$0xff]
  %v2308 = vld [vmem:[%s3 + $0x230] sm:$0xff]
  %v2309 = vld [vmem:[%s3 + $0x238] sm:$0xff]
  %v2310 = vld [vmem:[%s3 + $0x240] sm:$0xff]
  %v2311 = vld [vmem:[%s3 + $0x248] sm:$0xff]
  %v2312 = vld [vmem:[%s3 + $0x250] sm:$0xff]
  %v2313 = vld [vmem:[%s3 + $0x258] sm:$0xff]
  %v2314 = vld [vmem:[%s3 + $0x260] sm:$0xff]
  %v2315 = vld [vmem:[%s3 + $0x268] sm:$0xff]
  %v2316 = vld [vmem:[%s3 + $0x270] sm:$0xff]
  %v2317 = vld [vmem:[%s3 + $0x278] sm:$0xff]
  %v2318 = vld [vmem:[%s3 + $0x280] sm:$0xff]
  %v2319 = vld [vmem:[%s3 + $0x288] sm:$0xff]
  %v2320 = vld [vmem:[%s3 + $0x290] sm:$0xff]
  %v2321 = vld [vmem:[%s3 + $0x298] sm:$0xff]
  %v2322 = vld [vmem:[%s3 + $0x2a0] sm:$0xff]
  %v2323 = vld [vmem:[%s3 + $0x2a8] sm:$0xff]
  %v2324 = vld [vmem:[%s3 + $0x2b0] sm:$0xff]
  %v2325 = vld [vmem:[%s3 + $0x2b8] sm:$0xff]
  %v2326 = vld [vmem:[%s3 + $0x2c0] sm:$0xff]
  %v2327 = vld [vmem:[%s3 + $0x2c8] sm:$0xff]
  %v2328 = vld [vmem:[%s3 + $0x2d0] sm:$0xff]
  %v2329 = vld [vmem:[%s3 + $0x2d8] sm:$0xff]
  %v2330 = vld [vmem:[%s3 + $0x2e0] sm:$0xff]
  %v2331 = vld [vmem:[%s3 + $0x2e8] sm:$0xff]
  %v2332 = vld [vmem:[%s3 + $0x2f0] sm:$0xff]
  %v2333 = vld [vmem:[%s3 + $0x2f8] sm:$0xff]
  %v2334 = vld [vmem:[%s3 + $0x300] sm:$0xff]
  %v2335 = vld [vmem:[%s3 + $0x308] sm:$0xff]
  %v2336 = vld [vmem:[%s3 + $0x310] sm:$0xff]
  %v2337 = vld [vmem:[%s3 + $0x318] sm:$0xff]
  %v2338 = vld [vmem:[%s3 + $0x320] sm:$0xff]
  %v2339 = vld [vmem:[%s3 + $0x328] sm:$0xff]
  %v2340 = vld [vmem:[%s3 + $0x330] sm:$0xff]
  %v2341 = vld [vmem:[%s3 + $0x338] sm:$0xff]
  %v2342 = vld [vmem:[%s3 + $0x340] sm:$0xff]
  %v2343 = vld [vmem:[%s3 + $0x348] sm:$0xff]
  %v2344 = vld [vmem:[%s3 + $0x350] sm:$0xff]
  %v2345 = vld [vmem:[%s3 + $0x358] sm:$0xff]
  %v2346 = vld [vmem:[%s3 + $0x360] sm:$0xff]
  %v2347 = vld [vmem:[%s3 + $0x368] sm:$0xff]
  %v2348 = vld [vmem:[%s3 + $0x370] sm:$0xff]
  %v2349 = vld [vmem:[%s3 + $0x378] sm:$0xff]
  %v2350 = vld [vmem:[%s3 + $0x380] sm:$0xff]
  %v2351 = vld [vmem:[%s3 + $0x388] sm:$0xff]
  %v2352 = vld [vmem:[%s3 + $0x390] sm:$0xff]
  %v2353 = vld [vmem:[%s3 + $0x398] sm:$0xff]
  %v2354 = vld [vmem:[%s3 + $0x3a0] sm:$0xff]
  %v2355 = vld [vmem:[%s3 + $0x3a8] sm:$0xff]
  %v2356 = vld [vmem:[%s3 + $0x3b0] sm:$0xff]
  %v2357 = vld [vmem:[%s3 + $0x3b8] sm:$0xff]
  %v2358 = vld [vmem:[%s3 + $0x3c0] sm:$0xff]
  %v2359 = vld [vmem:[%s3 + $0x3c8] sm:$0xff]
  %v2360 = vld [vmem:[%s3 + $0x3d0] sm:$0xff]
  %v2361 = vld [vmem:[%s3 + $0x3d8] sm:$0xff]
  %v2362 = vld [vmem:[%s3 + $0x3e0] sm:$0xff]
  %v2363 = vld [vmem:[%s3 + $0x3e8] sm:$0xff]
  %v2364 = vld [vmem:[%s3 + $0x3f0] sm:$0xff]
  %v2365 = vld [vmem:[%s3 + $0x3f8] sm:$0xff]
  %v2366 = vld [vmem:[%s3 + $0x400] sm:$0xff]
  %v2367 = vld [vmem:[%s3 + $0x408] sm:$0xff]
  %v2368 = vld [vmem:[%s3 + $0x410] sm:$0xff]
  %v2369 = vld [vmem:[%s3 + $0x418] sm:$0xff]
  %v2370 = vld [vmem:[%s3 + $0x420] sm:$0xff]
  %v2371 = vld [vmem:[%s3 + $0x428] sm:$0xff]
  %v2372 = vld [vmem:[%s3 + $0x430] sm:$0xff]
  %v2373 = vld [vmem:[%s3 + $0x438] sm:$0xff]
  %v2374 = vld [vmem:[%s3 + $0x440] sm:$0xff]
  %v2375 = vld [vmem:[%s3 + $0x448] sm:$0xff]
  %v2376 = vld [vmem:[%s3 + $0x450] sm:$0xff]
  %v2377 = vld [vmem:[%s3 + $0x458] sm:$0xff]
  %v2378 = vld [vmem:[%s3 + $0x460] sm:$0xff]
  %v2379 = vld [vmem:[%s3 + $0x468] sm:$0xff]
  %v2380 = vld [vmem:[%s3 + $0x470] sm:$0xff]
  %v2381 = vld [vmem:[%s3 + $0x478] sm:$0xff]
  %v2382 = vld [vmem:[%s3 + $0x480] sm:$0xff]
  %v2383 = vld [vmem:[%s3 + $0x488] sm:$0xff]
  %v2384 = vld [vmem:[%s3 + $0x490] sm:$0xff]
  %v2385 = vld [vmem:[%s3 + $0x498] sm:$0xff]
  %v2386 = vld [vmem:[%s3 + $0x4a0] sm:$0xff]
  %v2387 = vld [vmem:[%s3 + $0x4a8] sm:$0xff]
  %v2388 = vld [vmem:[%s3 + $0x4b0] sm:$0xff]
  %v2389 = vld [vmem:[%s3 + $0x4b8] sm:$0xff]
  %v2390 = vld [vmem:[%s3 + $0x4c0] sm:$0xff]
  %v2391 = vld [vmem:[%s3 + $0x4c8] sm:$0xff]
  %v2392 = vld [vmem:[%s3 + $0x4d0] sm:$0xff]
  %v2393 = vld [vmem:[%s3 + $0x4d8] sm:$0xff]
  %v2394 = vld [vmem:[%s3 + $0x4e0] sm:$0xff]
  %v2395 = vld [vmem:[%s3 + $0x4e8] sm:$0xff]
  %v2396 = vld [vmem:[%s3 + $0x4f0] sm:$0xff]
  %v2397 = vld [vmem:[%s3 + $0x4f8] sm:$0xff]
  %v2398 = vld [vmem:[%s3 + $0x500] sm:$0xff]
  %v2399 = vld [vmem:[%s3 + $0x508] sm:$0xff]
  %v2400 = vld [vmem:[%s3 + $0x510] sm:$0xff]
  %v2401 = vld [vmem:[%s3 + $0x518] sm:$0xff]
  %v2402 = vld [vmem:[%s3 + $0x520] sm:$0xff]
  %v2403 = vld [vmem:[%s3 + $0x528] sm:$0xff]
  %v2404 = vld [vmem:[%s3 + $0x530] sm:$0xff]
  %v2405 = vld [vmem:[%s3 + $0x538] sm:$0xff]
  %v2406 = vld [vmem:[%s3 + $0x540] sm:$0xff]
  %v2407 = vld [vmem:[%s3 + $0x548] sm:$0xff]
  %v2408 = vld [vmem:[%s3 + $0x550] sm:$0xff]
  %v2409 = vld [vmem:[%s3 + $0x558] sm:$0xff]
  %v2410 = vld [vmem:[%s3 + $0x560] sm:$0xff]
  %v2411 = vld [vmem:[%s3 + $0x568] sm:$0xff]
  %v2412 = vld [vmem:[%s3 + $0x570] sm:$0xff]
  %v2413 = vld [vmem:[%s3 + $0x578] sm:$0xff]
  %v2414 = vld [vmem:[%s3 + $0x580] sm:$0xff]
  %v2415 = vld [vmem:[%s3 + $0x588] sm:$0xff]
  %v2416 = vld [vmem:[%s3 + $0x590] sm:$0xff]
  %v2417 = vld [vmem:[%s3 + $0x598] sm:$0xff]
  %v2418 = vld [vmem:[%s3 + $0x5a0] sm:$0xff]
  %v2419 = vld [vmem:[%s3 + $0x5a8] sm:$0xff]
  %v2420 = vld [vmem:[%s3 + $0x5b0] sm:$0xff]
  %v2421 = vld [vmem:[%s3 + $0x5b8] sm:$0xff]
  %v2422 = vld [vmem:[%s3 + $0x5c0] sm:$0xff]
  %v2423 = vld [vmem:[%s3 + $0x5c8] sm:$0xff]
  %v2424 = vld [vmem:[%s3 + $0x5d0] sm:$0xff]
  %v2425 = vld [vmem:[%s3 + $0x5d8] sm:$0xff]
  %v2426 = vld [vmem:[%s3 + $0x5e0] sm:$0xff]
  %v2427 = vld [vmem:[%s3 + $0x5e8] sm:$0xff]
  %v2428 = vld [vmem:[%s3 + $0x5f0] sm:$0xff]
  %v2429 = vld [vmem:[%s3 + $0x5f8] sm:$0xff]
  %v2430 = vld [vmem:[%s3 + $0x600] sm:$0xff]
  %v2431 = vld [vmem:[%s3 + $0x608] sm:$0xff]
  %v2432 = vld [vmem:[%s3 + $0x610] sm:$0xff]
  %v2433 = vld [vmem:[%s3 + $0x618] sm:$0xff]
  %v2434 = vld [vmem:[%s3 + $0x620] sm:$0xff]
  %v2435 = vld [vmem:[%s3 + $0x628] sm:$0xff]
  %v2436 = vld [vmem:[%s3 + $0x630] sm:$0xff]
  %v2437 = vld [vmem:[%s3 + $0x638] sm:$0xff]
  %v2438 = vld [vmem:[%s3 + $0x640] sm:$0xff]
  %v2439 = vld [vmem:[%s3 + $0x648] sm:$0xff]
  %v2440 = vld [vmem:[%s3 + $0x650] sm:$0xff]
  %v2441 = vld [vmem:[%s3 + $0x658] sm:$0xff]
  %v2442 = vld [vmem:[%s3 + $0x660] sm:$0xff]
  %v2443 = vld [vmem:[%s3 + $0x668] sm:$0xff]
  %v2444 = vld [vmem:[%s3 + $0x670] sm:$0xff]
  %v2445 = vld [vmem:[%s3 + $0x678] sm:$0xff]
  %v2446 = vld [vmem:[%s3 + $0x680] sm:$0xff]
  %v2447 = vld [vmem:[%s3 + $0x688] sm:$0xff]
  %v2448 = vld [vmem:[%s3 + $0x690] sm:$0xff]
  %v2449 = vld [vmem:[%s3 + $0x698] sm:$0xff]
  %v2450 = vld [vmem:[%s3 + $0x6a0] sm:$0xff]
  %v2451 = vld [vmem:[%s3 + $0x6a8] sm:$0xff]
  %v2452 = vld [vmem:[%s3 + $0x6b0] sm:$0xff]
  %v2453 = vld [vmem:[%s3 + $0x6b8] sm:$0xff]
  %v2454 = vld [vmem:[%s3 + $0x6c0] sm:$0xff]
  %v2455 = vld [vmem:[%s3 + $0x6c8] sm:$0xff]
  %v2456 = vld [vmem:[%s3 + $0x6d0] sm:$0xff]
  %v2457 = vld [vmem:[%s3 + $0x6d8] sm:$0xff]
  %v2458 = vld [vmem:[%s3 + $0x6e0] sm:$0xff]
  %v2459 = vld [vmem:[%s3 + $0x6e8] sm:$0xff]
  %v2460 = vld [vmem:[%s3 + $0x6f0] sm:$0xff]
  %v2461 = vld [vmem:[%s3 + $0x6f8] sm:$0xff]
  %v2462 = vld [vmem:[%s3 + $0x700] sm:$0xff]
  %v2463 = vld [vmem:[%s3 + $0x708] sm:$0xff]
  %v2464 = vld [vmem:[%s3 + $0x710] sm:$0xff]
  %v2465 = vld [vmem:[%s3 + $0x718] sm:$0xff]
  %v2466 = vld [vmem:[%s3 + $0x720] sm:$0xff]
  %v2467 = vld [vmem:[%s3 + $0x728] sm:$0xff]
  %v2468 = vld [vmem:[%s3 + $0x730] sm:$0xff]
  %v2469 = vld [vmem:[%s3 + $0x738] sm:$0xff]
  %v2470 = vld [vmem:[%s3 + $0x740] sm:$0xff]
  %v2471 = vld [vmem:[%s3 + $0x748] sm:$0xff]
  %v2472 = vld [vmem:[%s3 + $0x750] sm:$0xff]
  %v2473 = vld [vmem:[%s3 + $0x758] sm:$0xff]
  %v2474 = vld [vmem:[%s3 + $0x760] sm:$0xff]
  %v2475 = vld [vmem:[%s3 + $0x768] sm:$0xff]
  %v2476 = vld [vmem:[%s3 + $0x770] sm:$0xff]
  %v2477 = vld [vmem:[%s3 + $0x778] sm:$0xff]
  %v2478 = vld [vmem:[%s3 + $0x780] sm:$0xff]
  %v2479 = vld [vmem:[%s3 + $0x788] sm:$0xff]
  %v2480 = vld [vmem:[%s3 + $0x790] sm:$0xff]
  %v2481 = vld [vmem:[%s3 + $0x798] sm:$0xff]
  %v2482 = vld [vmem:[%s3 + $0x7a0] sm:$0xff]
  %v2483 = vld [vmem:[%s3 + $0x7a8] sm:$0xff]
  %v2484 = vld [vmem:[%s3 + $0x7b0] sm:$0xff]
  %v2485 = vld [vmem:[%s3 + $0x7b8] sm:$0xff]
  %v2486 = vld [vmem:[%s3 + $0x7c0] sm:$0xff]
  %v2487 = vld [vmem:[%s3 + $0x7c8] sm:$0xff]
  %v2488 = vld [vmem:[%s3 + $0x7d0] sm:$0xff]
  %v2489 = vld [vmem:[%s3 + $0x7d8] sm:$0xff]
  %v2490 = vld [vmem:[%s3 + $0x7e0] sm:$0xff]
  %v2491 = vld [vmem:[%s3 + $0x7e8] sm:$0xff]
  %v2492 = vld [vmem:[%s3 + $0x7f0] sm:$0xff]
  %v2493 = vld [vmem:[%s3 + $0x7f8] sm:$0xff]
  %v2494 = vld [vmem:[%s4] sm:$0xf]
  %v2496 = vperm.slane %v2494, 0
  %v2497 = vperm.slane %v2494, 1
  %v2498 = vperm.slane %v2494, 2
  %v2499 = vperm.slane %v2494, 3
  %v2760 = vunpack.c.l.b16 %v2238
  %v2761 = vunpack.c.h.b16 %v2238
  %v2762 = vunpack.c.l.b16 %v2239
  %v2763 = vunpack.c.h.b16 %v2239
  %v2764 = vunpack.c.l.b16 %v2240
  %v2765 = vunpack.c.h.b16 %v2240
  %v2766 = vunpack.c.l.b16 %v2241
  %v2767 = vunpack.c.h.b16 %v2241
  %v2768 = vunpack.c.l.b16 %v2242
  %v2769 = vunpack.c.h.b16 %v2242
  %v2770 = vunpack.c.l.b16 %v2243
  %v2771 = vunpack.c.h.b16 %v2243
  %v2772 = vunpack.c.l.b16 %v2244
  %v2773 = vunpack.c.h.b16 %v2244
  %v2774 = vunpack.c.l.b16 %v2245
  %v2775 = vunpack.c.h.b16 %v2245
  %v2776 = vunpack.c.l.b16 %v2246
  %v2777 = vunpack.c.h.b16 %v2246
  %v2778 = vunpack.c.l.b16 %v2247
  %v2779 = vunpack.c.h.b16 %v2247
  %v2780 = vunpack.c.l.b16 %v2248
  %v2781 = vunpack.c.h.b16 %v2248
  %v2782 = vunpack.c.l.b16 %v2249
  %v2783 = vunpack.c.h.b16 %v2249
  %v2784 = vunpack.c.l.b16 %v2250
  %v2785 = vunpack.c.h.b16 %v2250
  %v2786 = vunpack.c.l.b16 %v2251
  %v2787 = vunpack.c.h.b16 %v2251
  %v2788 = vunpack.c.l.b16 %v2252
  %v2789 = vunpack.c.h.b16 %v2252
  %v2790 = vunpack.c.l.b16 %v2253
  %v2791 = vunpack.c.h.b16 %v2253
  %v2792 = vunpack.c.l.b16 %v2254
  %v2793 = vunpack.c.h.b16 %v2254
  %v2794 = vunpack.c.l.b16 %v2255
  %v2795 = vunpack.c.h.b16 %v2255
  %v2796 = vunpack.c.l.b16 %v2256
  %v2797 = vunpack.c.h.b16 %v2256
  %v2798 = vunpack.c.l.b16 %v2257
  %v2799 = vunpack.c.h.b16 %v2257
  %v2800 = vunpack.c.l.b16 %v2258
  %v2801 = vunpack.c.h.b16 %v2258
  %v2802 = vunpack.c.l.b16 %v2259
  %v2803 = vunpack.c.h.b16 %v2259
  %v2804 = vunpack.c.l.b16 %v2260
  %v2805 = vunpack.c.h.b16 %v2260
  %v2806 = vunpack.c.l.b16 %v2261
  %v2807 = vunpack.c.h.b16 %v2261
  %v2808 = vunpack.c.l.b16 %v2262
  %v2809 = vunpack.c.h.b16 %v2262
  %v2810 = vunpack.c.l.b16 %v2263
  %v2811 = vunpack.c.h.b16 %v2263
  %v2812 = vunpack.c.l.b16 %v2264
  %v2813 = vunpack.c.h.b16 %v2264
  %v2814 = vunpack.c.l.b16 %v2265
  %v2815 = vunpack.c.h.b16 %v2265
  %v2816 = vunpack.c.l.b16 %v2266
  %v2817 = vunpack.c.h.b16 %v2266
  %v2818 = vunpack.c.l.b16 %v2267
  %v2819 = vunpack.c.h.b16 %v2267
  %v2820 = vunpack.c.l.b16 %v2268
  %v2821 = vunpack.c.h.b16 %v2268
  %v2822 = vunpack.c.l.b16 %v2269
  %v2823 = vunpack.c.h.b16 %v2269
  %v2824 = vunpack.c.l.b16 %v2270
  %v2825 = vunpack.c.h.b16 %v2270
  %v2826 = vunpack.c.l.b16 %v2271
  %v2827 = vunpack.c.h.b16 %v2271
  %v2828 = vunpack.c.l.b16 %v2272
  %v2829 = vunpack.c.h.b16 %v2272
  %v2830 = vunpack.c.l.b16 %v2273
  %v2831 = vunpack.c.h.b16 %v2273
  %v2832 = vunpack.c.l.b16 %v2274
  %v2833 = vunpack.c.h.b16 %v2274
  %v2834 = vunpack.c.l.b16 %v2275
  %v2835 = vunpack.c.h.b16 %v2275
  %v2836 = vunpack.c.l.b16 %v2276
  %v2837 = vunpack.c.h.b16 %v2276
  %v2838 = vunpack.c.l.b16 %v2277
  %v2839 = vunpack.c.h.b16 %v2277
  %v2840 = vunpack.c.l.b16 %v2278
  %v2841 = vunpack.c.h.b16 %v2278
  %v2842 = vunpack.c.l.b16 %v2279
  %v2843 = vunpack.c.h.b16 %v2279
  %v2844 = vunpack.c.l.b16 %v2280
  %v2845 = vunpack.c.h.b16 %v2280
  %v2846 = vunpack.c.l.b16 %v2281
  %v2847 = vunpack.c.h.b16 %v2281
  %v2848 = vunpack.c.l.b16 %v2282
  %v2849 = vunpack.c.h.b16 %v2282
  %v2850 = vunpack.c.l.b16 %v2283
  %v2851 = vunpack.c.h.b16 %v2283
  %v2852 = vunpack.c.l.b16 %v2284
  %v2853 = vunpack.c.h.b16 %v2284
  %v2854 = vunpack.c.l.b16 %v2285
  %v2855 = vunpack.c.h.b16 %v2285
  %v2856 = vunpack.c.l.b16 %v2286
  %v2857 = vunpack.c.h.b16 %v2286
  %v2858 = vunpack.c.l.b16 %v2287
  %v2859 = vunpack.c.h.b16 %v2287
  %v2860 = vunpack.c.l.b16 %v2288
  %v2861 = vunpack.c.h.b16 %v2288
  %v2862 = vunpack.c.l.b16 %v2289
  %v2863 = vunpack.c.h.b16 %v2289
  %v2864 = vunpack.c.l.b16 %v2290
  %v2865 = vunpack.c.h.b16 %v2290
  %v2866 = vunpack.c.l.b16 %v2291
  %v2867 = vunpack.c.h.b16 %v2291
  %v2868 = vunpack.c.l.b16 %v2292
  %v2869 = vunpack.c.h.b16 %v2292
  %v2870 = vunpack.c.l.b16 %v2293
  %v2871 = vunpack.c.h.b16 %v2293
  %v2872 = vunpack.c.l.b16 %v2294
  %v2873 = vunpack.c.h.b16 %v2294
  %v2874 = vunpack.c.l.b16 %v2295
  %v2875 = vunpack.c.h.b16 %v2295
  %v2876 = vunpack.c.l.b16 %v2296
  %v2877 = vunpack.c.h.b16 %v2296
  %v2878 = vunpack.c.l.b16 %v2297
  %v2879 = vunpack.c.h.b16 %v2297
  %v2880 = vunpack.c.l.b16 %v2298
  %v2881 = vunpack.c.h.b16 %v2298
  %v2882 = vunpack.c.l.b16 %v2299
  %v2883 = vunpack.c.h.b16 %v2299
  %v2884 = vunpack.c.l.b16 %v2300
  %v2885 = vunpack.c.h.b16 %v2300
  %v2886 = vunpack.c.l.b16 %v2301
  %v2887 = vunpack.c.h.b16 %v2301
  %v2888 = vunpack.c.l.b16 %v2302
  %v2889 = vunpack.c.h.b16 %v2302
  %v2890 = vunpack.c.l.b16 %v2303
  %v2891 = vunpack.c.h.b16 %v2303
  %v2892 = vunpack.c.l.b16 %v2304
  %v2893 = vunpack.c.h.b16 %v2304
  %v2894 = vunpack.c.l.b16 %v2305
  %v2895 = vunpack.c.h.b16 %v2305
  %v2896 = vunpack.c.l.b16 %v2306
  %v2897 = vunpack.c.h.b16 %v2306
  %v2898 = vunpack.c.l.b16 %v2307
  %v2899 = vunpack.c.h.b16 %v2307
  %v2900 = vunpack.c.l.b16 %v2308
  %v2901 = vunpack.c.h.b16 %v2308
  %v2902 = vunpack.c.l.b16 %v2309
  %v2903 = vunpack.c.h.b16 %v2309
  %v2904 = vunpack.c.l.b16 %v2310
  %v2905 = vunpack.c.h.b16 %v2310
  %v2906 = vunpack.c.l.b16 %v2311
  %v2907 = vunpack.c.h.b16 %v2311
  %v2908 = vunpack.c.l.b16 %v2312
  %v2909 = vunpack.c.h.b16 %v2312
  %v2910 = vunpack.c.l.b16 %v2313
  %v2911 = vunpack.c.h.b16 %v2313
  %v2912 = vunpack.c.l.b16 %v2314
  %v2913 = vunpack.c.h.b16 %v2314
  %v2914 = vunpack.c.l.b16 %v2315
  %v2915 = vunpack.c.h.b16 %v2315
  %v2916 = vunpack.c.l.b16 %v2316
  %v2917 = vunpack.c.h.b16 %v2316
  %v2918 = vunpack.c.l.b16 %v2317
  %v2919 = vunpack.c.h.b16 %v2317
  %v2920 = vunpack.c.l.b16 %v2318
  %v2921 = vunpack.c.h.b16 %v2318
  %v2922 = vunpack.c.l.b16 %v2319
  %v2923 = vunpack.c.h.b16 %v2319
  %v2924 = vunpack.c.l.b16 %v2320
  %v2925 = vunpack.c.h.b16 %v2320
  %v2926 = vunpack.c.l.b16 %v2321
  %v2927 = vunpack.c.h.b16 %v2321
  %v2928 = vunpack.c.l.b16 %v2322
  %v2929 = vunpack.c.h.b16 %v2322
  %v2930 = vunpack.c.l.b16 %v2323
  %v2931 = vunpack.c.h.b16 %v2323
  %v2932 = vunpack.c.l.b16 %v2324
  %v2933 = vunpack.c.h.b16 %v2324
  %v2934 = vunpack.c.l.b16 %v2325
  %v2935 = vunpack.c.h.b16 %v2325
  %v2936 = vunpack.c.l.b16 %v2326
  %v2937 = vunpack.c.h.b16 %v2326
  %v2938 = vunpack.c.l.b16 %v2327
  %v2939 = vunpack.c.h.b16 %v2327
  %v2940 = vunpack.c.l.b16 %v2328
  %v2941 = vunpack.c.h.b16 %v2328
  %v2942 = vunpack.c.l.b16 %v2329
  %v2943 = vunpack.c.h.b16 %v2329
  %v2944 = vunpack.c.l.b16 %v2330
  %v2945 = vunpack.c.h.b16 %v2330
  %v2946 = vunpack.c.l.b16 %v2331
  %v2947 = vunpack.c.h.b16 %v2331
  %v2948 = vunpack.c.l.b16 %v2332
  %v2949 = vunpack.c.h.b16 %v2332
  %v2950 = vunpack.c.l.b16 %v2333
  %v2951 = vunpack.c.h.b16 %v2333
  %v2952 = vunpack.c.l.b16 %v2334
  %v2953 = vunpack.c.h.b16 %v2334
  %v2954 = vunpack.c.l.b16 %v2335
  %v2955 = vunpack.c.h.b16 %v2335
  %v2956 = vunpack.c.l.b16 %v2336
  %v2957 = vunpack.c.h.b16 %v2336
  %v2958 = vunpack.c.l.b16 %v2337
  %v2959 = vunpack.c.h.b16 %v2337
  %v2960 = vunpack.c.l.b16 %v2338
  %v2961 = vunpack.c.h.b16 %v2338
  %v2962 = vunpack.c.l.b16 %v2339
  %v2963 = vunpack.c.h.b16 %v2339
  %v2964 = vunpack.c.l.b16 %v2340
  %v2965 = vunpack.c.h.b16 %v2340
  %v2966 = vunpack.c.l.b16 %v2341
  %v2967 = vunpack.c.h.b16 %v2341
  %v2968 = vunpack.c.l.b16 %v2342
  %v2969 = vunpack.c.h.b16 %v2342
  %v2970 = vunpack.c.l.b16 %v2343
  %v2971 = vunpack.c.h.b16 %v2343
  %v2972 = vunpack.c.l.b16 %v2344
  %v2973 = vunpack.c.h.b16 %v2344
  %v2974 = vunpack.c.l.b16 %v2345
  %v2975 = vunpack.c.h.b16 %v2345
  %v2976 = vunpack.c.l.b16 %v2346
  %v2977 = vunpack.c.h.b16 %v2346
  %v2978 = vunpack.c.l.b16 %v2347
  %v2979 = vunpack.c.h.b16 %v2347
  %v2980 = vunpack.c.l.b16 %v2348
  %v2981 = vunpack.c.h.b16 %v2348
  %v2982 = vunpack.c.l.b16 %v2349
  %v2983 = vunpack.c.h.b16 %v2349
  %v2984 = vunpack.c.l.b16 %v2350
  %v2985 = vunpack.c.h.b16 %v2350
  %v2986 = vunpack.c.l.b16 %v2351
  %v2987 = vunpack.c.h.b16 %v2351
  %v2988 = vunpack.c.l.b16 %v2352
  %v2989 = vunpack.c.h.b16 %v2352
  %v2990 = vunpack.c.l.b16 %v2353
  %v2991 = vunpack.c.h.b16 %v2353
  %v2992 = vunpack.c.l.b16 %v2354
  %v2993 = vunpack.c.h.b16 %v2354
  %v2994 = vunpack.c.l.b16 %v2355
  %v2995 = vunpack.c.h.b16 %v2355
  %v2996 = vunpack.c.l.b16 %v2356
  %v2997 = vunpack.c.h.b16 %v2356
  %v2998 = vunpack.c.l.b16 %v2357
  %v2999 = vunpack.c.h.b16 %v2357
  %v3000 = vunpack.c.l.b16 %v2358
  %v3001 = vunpack.c.h.b16 %v2358
  %v3002 = vunpack.c.l.b16 %v2359
  %v3003 = vunpack.c.h.b16 %v2359
  %v3004 = vunpack.c.l.b16 %v2360
  %v3005 = vunpack.c.h.b16 %v2360
  %v3006 = vunpack.c.l.b16 %v2361
  %v3007 = vunpack.c.h.b16 %v2361
  %v3008 = vunpack.c.l.b16 %v2362
  %v3009 = vunpack.c.h.b16 %v2362
  %v3010 = vunpack.c.l.b16 %v2363
  %v3011 = vunpack.c.h.b16 %v2363
  %v3012 = vunpack.c.l.b16 %v2364
  %v3013 = vunpack.c.h.b16 %v2364
  %v3014 = vunpack.c.l.b16 %v2365
  %v3015 = vunpack.c.h.b16 %v2365
  %v3016 = vunpack.c.l.b16 %v2366
  %v3017 = vunpack.c.h.b16 %v2366
  %v3018 = vunpack.c.l.b16 %v2367
  %v3019 = vunpack.c.h.b16 %v2367
  %v3020 = vunpack.c.l.b16 %v2368
  %v3021 = vunpack.c.h.b16 %v2368
  %v3022 = vunpack.c.l.b16 %v2369
  %v3023 = vunpack.c.h.b16 %v2369
  %v3024 = vunpack.c.l.b16 %v2370
  %v3025 = vunpack.c.h.b16 %v2370
  %v3026 = vunpack.c.l.b16 %v2371
  %v3027 = vunpack.c.h.b16 %v2371
  %v3028 = vunpack.c.l.b16 %v2372
  %v3029 = vunpack.c.h.b16 %v2372
  %v3030 = vunpack.c.l.b16 %v2373
  %v3031 = vunpack.c.h.b16 %v2373
  %v3032 = vunpack.c.l.b16 %v2374
  %v3033 = vunpack.c.h.b16 %v2374
  %v3034 = vunpack.c.l.b16 %v2375
  %v3035 = vunpack.c.h.b16 %v2375
  %v3036 = vunpack.c.l.b16 %v2376
  %v3037 = vunpack.c.h.b16 %v2376
  %v3038 = vunpack.c.l.b16 %v2377
  %v3039 = vunpack.c.h.b16 %v2377
  %v3040 = vunpack.c.l.b16 %v2378
  %v3041 = vunpack.c.h.b16 %v2378
  %v3042 = vunpack.c.l.b16 %v2379
  %v3043 = vunpack.c.h.b16 %v2379
  %v3044 = vunpack.c.l.b16 %v2380
  %v3045 = vunpack.c.h.b16 %v2380
  %v3046 = vunpack.c.l.b16 %v2381
  %v3047 = vunpack.c.h.b16 %v2381
  %v3048 = vunpack.c.l.b16 %v2382
  %v3049 = vunpack.c.h.b16 %v2382
  %v3050 = vunpack.c.l.b16 %v2383
  %v3051 = vunpack.c.h.b16 %v2383
  %v3052 = vunpack.c.l.b16 %v2384
  %v3053 = vunpack.c.h.b16 %v2384
  %v3054 = vunpack.c.l.b16 %v2385
  %v3055 = vunpack.c.h.b16 %v2385
  %v3056 = vunpack.c.l.b16 %v2386
  %v3057 = vunpack.c.h.b16 %v2386
  %v3058 = vunpack.c.l.b16 %v2387
  %v3059 = vunpack.c.h.b16 %v2387
  %v3060 = vunpack.c.l.b16 %v2388
  %v3061 = vunpack.c.h.b16 %v2388
  %v3062 = vunpack.c.l.b16 %v2389
  %v3063 = vunpack.c.h.b16 %v2389
  %v3064 = vunpack.c.l.b16 %v2390
  %v3065 = vunpack.c.h.b16 %v2390
  %v3066 = vunpack.c.l.b16 %v2391
  %v3067 = vunpack.c.h.b16 %v2391
  %v3068 = vunpack.c.l.b16 %v2392
  %v3069 = vunpack.c.h.b16 %v2392
  %v3070 = vunpack.c.l.b16 %v2393
  %v3071 = vunpack.c.h.b16 %v2393
  %v3072 = vunpack.c.l.b16 %v2394
  %v3073 = vunpack.c.h.b16 %v2394
  %v3074 = vunpack.c.l.b16 %v2395
  %v3075 = vunpack.c.h.b16 %v2395
  %v3076 = vunpack.c.l.b16 %v2396
  %v3077 = vunpack.c.h.b16 %v2396
  %v3078 = vunpack.c.l.b16 %v2397
  %v3079 = vunpack.c.h.b16 %v2397
  %v3080 = vunpack.c.l.b16 %v2398
  %v3081 = vunpack.c.h.b16 %v2398
  %v3082 = vunpack.c.l.b16 %v2399
  %v3083 = vunpack.c.h.b16 %v2399
  %v3084 = vunpack.c.l.b16 %v2400
  %v3085 = vunpack.c.h.b16 %v2400
  %v3086 = vunpack.c.l.b16 %v2401
  %v3087 = vunpack.c.h.b16 %v2401
  %v3088 = vunpack.c.l.b16 %v2402
  %v3089 = vunpack.c.h.b16 %v2402
  %v3090 = vunpack.c.l.b16 %v2403
  %v3091 = vunpack.c.h.b16 %v2403
  %v3092 = vunpack.c.l.b16 %v2404
  %v3093 = vunpack.c.h.b16 %v2404
  %v3094 = vunpack.c.l.b16 %v2405
  %v3095 = vunpack.c.h.b16 %v2405
  %v3096 = vunpack.c.l.b16 %v2406
  %v3097 = vunpack.c.h.b16 %v2406
  %v3098 = vunpack.c.l.b16 %v2407
  %v3099 = vunpack.c.h.b16 %v2407
  %v3100 = vunpack.c.l.b16 %v2408
  %v3101 = vunpack.c.h.b16 %v2408
  %v3102 = vunpack.c.l.b16 %v2409
  %v3103 = vunpack.c.h.b16 %v2409
  %v3104 = vunpack.c.l.b16 %v2410
  %v3105 = vunpack.c.h.b16 %v2410
  %v3106 = vunpack.c.l.b16 %v2411
  %v3107 = vunpack.c.h.b16 %v2411
  %v3108 = vunpack.c.l.b16 %v2412
  %v3109 = vunpack.c.h.b16 %v2412
  %v3110 = vunpack.c.l.b16 %v2413
  %v3111 = vunpack.c.h.b16 %v2413
  %v3112 = vunpack.c.l.b16 %v2414
  %v3113 = vunpack.c.h.b16 %v2414
  %v3114 = vunpack.c.l.b16 %v2415
  %v3115 = vunpack.c.h.b16 %v2415
  %v3116 = vunpack.c.l.b16 %v2416
  %v3117 = vunpack.c.h.b16 %v2416
  %v3118 = vunpack.c.l.b16 %v2417
  %v3119 = vunpack.c.h.b16 %v2417
  %v3120 = vunpack.c.l.b16 %v2418
  %v3121 = vunpack.c.h.b16 %v2418
  %v3122 = vunpack.c.l.b16 %v2419
  %v3123 = vunpack.c.h.b16 %v2419
  %v3124 = vunpack.c.l.b16 %v2420
  %v3125 = vunpack.c.h.b16 %v2420
  %v3126 = vunpack.c.l.b16 %v2421
  %v3127 = vunpack.c.h.b16 %v2421
  %v3128 = vunpack.c.l.b16 %v2422
  %v3129 = vunpack.c.h.b16 %v2422
  %v3130 = vunpack.c.l.b16 %v2423
  %v3131 = vunpack.c.h.b16 %v2423
  %v3132 = vunpack.c.l.b16 %v2424
  %v3133 = vunpack.c.h.b16 %v2424
  %v3134 = vunpack.c.l.b16 %v2425
  %v3135 = vunpack.c.h.b16 %v2425
  %v3136 = vunpack.c.l.b16 %v2426
  %v3137 = vunpack.c.h.b16 %v2426
  %v3138 = vunpack.c.l.b16 %v2427
  %v3139 = vunpack.c.h.b16 %v2427
  %v3140 = vunpack.c.l.b16 %v2428
  %v3141 = vunpack.c.h.b16 %v2428
  %v3142 = vunpack.c.l.b16 %v2429
  %v3143 = vunpack.c.h.b16 %v2429
  %v3144 = vunpack.c.l.b16 %v2430
  %v3145 = vunpack.c.h.b16 %v2430
  %v3146 = vunpack.c.l.b16 %v2431
  %v3147 = vunpack.c.h.b16 %v2431
  %v3148 = vunpack.c.l.b16 %v2432
  %v3149 = vunpack.c.h.b16 %v2432
  %v3150 = vunpack.c.l.b16 %v2433
  %v3151 = vunpack.c.h.b16 %v2433
  %v3152 = vunpack.c.l.b16 %v2434
  %v3153 = vunpack.c.h.b16 %v2434
  %v3154 = vunpack.c.l.b16 %v2435
  %v3155 = vunpack.c.h.b16 %v2435
  %v3156 = vunpack.c.l.b16 %v2436
  %v3157 = vunpack.c.h.b16 %v2436
  %v3158 = vunpack.c.l.b16 %v2437
  %v3159 = vunpack.c.h.b16 %v2437
  %v3160 = vunpack.c.l.b16 %v2438
  %v3161 = vunpack.c.h.b16 %v2438
  %v3162 = vunpack.c.l.b16 %v2439
  %v3163 = vunpack.c.h.b16 %v2439
  %v3164 = vunpack.c.l.b16 %v2440
  %v3165 = vunpack.c.h.b16 %v2440
  %v3166 = vunpack.c.l.b16 %v2441
  %v3167 = vunpack.c.h.b16 %v2441
  %v3168 = vunpack.c.l.b16 %v2442
  %v3169 = vunpack.c.h.b16 %v2442
  %v3170 = vunpack.c.l.b16 %v2443
  %v3171 = vunpack.c.h.b16 %v2443
  %v3172 = vunpack.c.l.b16 %v2444
  %v3173 = vunpack.c.h.b16 %v2444
  %v3174 = vunpack.c.l.b16 %v2445
  %v3175 = vunpack.c.h.b16 %v2445
  %v3176 = vunpack.c.l.b16 %v2446
  %v3177 = vunpack.c.h.b16 %v2446
  %v3178 = vunpack.c.l.b16 %v2447
  %v3179 = vunpack.c.h.b16 %v2447
  %v3180 = vunpack.c.l.b16 %v2448
  %v3181 = vunpack.c.h.b16 %v2448
  %v3182 = vunpack.c.l.b16 %v2449
  %v3183 = vunpack.c.h.b16 %v2449
  %v3184 = vunpack.c.l.b16 %v2450
  %v3185 = vunpack.c.h.b16 %v2450
  %v3186 = vunpack.c.l.b16 %v2451
  %v3187 = vunpack.c.h.b16 %v2451
  %v3188 = vunpack.c.l.b16 %v2452
  %v3189 = vunpack.c.h.b16 %v2452
  %v3190 = vunpack.c.l.b16 %v2453
  %v3191 = vunpack.c.h.b16 %v2453
  %v3192 = vunpack.c.l.b16 %v2454
  %v3193 = vunpack.c.h.b16 %v2454
  %v3194 = vunpack.c.l.b16 %v2455
  %v3195 = vunpack.c.h.b16 %v2455
  %v3196 = vunpack.c.l.b16 %v2456
  %v3197 = vunpack.c.h.b16 %v2456
  %v3198 = vunpack.c.l.b16 %v2457
  %v3199 = vunpack.c.h.b16 %v2457
  %v3200 = vunpack.c.l.b16 %v2458
  %v3201 = vunpack.c.h.b16 %v2458
  %v3202 = vunpack.c.l.b16 %v2459
  %v3203 = vunpack.c.h.b16 %v2459
  %v3204 = vunpack.c.l.b16 %v2460
  %v3205 = vunpack.c.h.b16 %v2460
  %v3206 = vunpack.c.l.b16 %v2461
  %v3207 = vunpack.c.h.b16 %v2461
  %v3208 = vunpack.c.l.b16 %v2462
  %v3209 = vunpack.c.h.b16 %v2462
  %v3210 = vunpack.c.l.b16 %v2463
  %v3211 = vunpack.c.h.b16 %v2463
  %v3212 = vunpack.c.l.b16 %v2464
  %v3213 = vunpack.c.h.b16 %v2464
  %v3214 = vunpack.c.l.b16 %v2465
  %v3215 = vunpack.c.h.b16 %v2465
  %v3216 = vunpack.c.l.b16 %v2466
  %v3217 = vunpack.c.h.b16 %v2466
  %v3218 = vunpack.c.l.b16 %v2467
  %v3219 = vunpack.c.h.b16 %v2467
  %v3220 = vunpack.c.l.b16 %v2468
  %v3221 = vunpack.c.h.b16 %v2468
  %v3222 = vunpack.c.l.b16 %v2469
  %v3223 = vunpack.c.h.b16 %v2469
  %v3224 = vunpack.c.l.b16 %v2470
  %v3225 = vunpack.c.h.b16 %v2470
  %v3226 = vunpack.c.l.b16 %v2471
  %v3227 = vunpack.c.h.b16 %v2471
  %v3228 = vunpack.c.l.b16 %v2472
  %v3229 = vunpack.c.h.b16 %v2472
  %v3230 = vunpack.c.l.b16 %v2473
  %v3231 = vunpack.c.h.b16 %v2473
  %v3232 = vunpack.c.l.b16 %v2474
  %v3233 = vunpack.c.h.b16 %v2474
  %v3234 = vunpack.c.l.b16 %v2475
  %v3235 = vunpack.c.h.b16 %v2475
  %v3236 = vunpack.c.l.b16 %v2476
  %v3237 = vunpack.c.h.b16 %v2476
  %v3238 = vunpack.c.l.b16 %v2477
  %v3239 = vunpack.c.h.b16 %v2477
  %v3240 = vunpack.c.l.b16 %v2478
  %v3241 = vunpack.c.h.b16 %v2478
  %v3242 = vunpack.c.l.b16 %v2479
  %v3243 = vunpack.c.h.b16 %v2479
  %v3244 = vunpack.c.l.b16 %v2480
  %v3245 = vunpack.c.h.b16 %v2480
  %v3246 = vunpack.c.l.b16 %v2481
  %v3247 = vunpack.c.h.b16 %v2481
  %v3248 = vunpack.c.l.b16 %v2482
  %v3249 = vunpack.c.h.b16 %v2482
  %v3250 = vunpack.c.l.b16 %v2483
  %v3251 = vunpack.c.h.b16 %v2483
  %v3252 = vunpack.c.l.b16 %v2484
  %v3253 = vunpack.c.h.b16 %v2484
  %v3254 = vunpack.c.l.b16 %v2485
  %v3255 = vunpack.c.h.b16 %v2485
  %v3256 = vunpack.c.l.b16 %v2486
  %v3257 = vunpack.c.h.b16 %v2486
  %v3258 = vunpack.c.l.b16 %v2487
  %v3259 = vunpack.c.h.b16 %v2487
  %v3260 = vunpack.c.l.b16 %v2488
  %v3261 = vunpack.c.h.b16 %v2488
  %v3262 = vunpack.c.l.b16 %v2489
  %v3263 = vunpack.c.h.b16 %v2489
  %v3264 = vunpack.c.l.b16 %v2490
  %v3265 = vunpack.c.h.b16 %v2490
  %v3266 = vunpack.c.l.b16 %v2491
  %v3267 = vunpack.c.h.b16 %v2491
  %v3268 = vunpack.c.l.b16 %v2492
  %v3269 = vunpack.c.h.b16 %v2492
  %v3270 = vunpack.c.l.b16 %v2493
  %v3271 = vunpack.c.h.b16 %v2493
  %v3272 = vpack.c.b16 %v2764, %v2760
  %v3273 = vpack.c.b16 %v2765, %v2761
  %v3274 = vpack.c.b16 %v2766, %v2762
  %v3275 = vpack.c.b16 %v2767, %v2763
  %v3276 = vpack.c.b16 %v2772, %v2768
  %v3277 = vpack.c.b16 %v2773, %v2769
  %v3278 = vpack.c.b16 %v2774, %v2770
  %v3279 = vpack.c.b16 %v2775, %v2771
  %v3280 = vpack.c.b16 %v2780, %v2776
  %v3281 = vpack.c.b16 %v2781, %v2777
  %v3282 = vpack.c.b16 %v2782, %v2778
  %v3283 = vpack.c.b16 %v2783, %v2779
  %v3284 = vpack.c.b16 %v2788, %v2784
  %v3285 = vpack.c.b16 %v2789, %v2785
  %v3286 = vpack.c.b16 %v2790, %v2786
  %v3287 = vpack.c.b16 %v2791, %v2787
  %v3288 = vpack.c.b16 %v2796, %v2792
  %v3289 = vpack.c.b16 %v2797, %v2793
  %v3290 = vpack.c.b16 %v2798, %v2794
  %v3291 = vpack.c.b16 %v2799, %v2795
  %v3292 = vpack.c.b16 %v2804, %v2800
  %v3293 = vpack.c.b16 %v2805, %v2801
  %v3294 = vpack.c.b16 %v2806, %v2802
  %v3295 = vpack.c.b16 %v2807, %v2803
  %v3296 = vpack.c.b16 %v2812, %v2808
  %v3297 = vpack.c.b16 %v2813, %v2809
  %v3298 = vpack.c.b16 %v2814, %v2810
  %v3299 = vpack.c.b16 %v2815, %v2811
  %v3300 = vpack.c.b16 %v2820, %v2816
  %v3301 = vpack.c.b16 %v2821, %v2817
  %v3302 = vpack.c.b16 %v2822, %v2818
  %v3303 = vpack.c.b16 %v2823, %v2819
  %v3304 = vpack.c.b16 %v2828, %v2824
  %v3305 = vpack.c.b16 %v2829, %v2825
  %v3306 = vpack.c.b16 %v2830, %v2826
  %v3307 = vpack.c.b16 %v2831, %v2827
  %v3308 = vpack.c.b16 %v2836, %v2832
  %v3309 = vpack.c.b16 %v2837, %v2833
  %v3310 = vpack.c.b16 %v2838, %v2834
  %v3311 = vpack.c.b16 %v2839, %v2835
  %v3312 = vpack.c.b16 %v2844, %v2840
  %v3313 = vpack.c.b16 %v2845, %v2841
  %v3314 = vpack.c.b16 %v2846, %v2842
  %v3315 = vpack.c.b16 %v2847, %v2843
  %v3316 = vpack.c.b16 %v2852, %v2848
  %v3317 = vpack.c.b16 %v2853, %v2849
  %v3318 = vpack.c.b16 %v2854, %v2850
  %v3319 = vpack.c.b16 %v2855, %v2851
  %v3320 = vpack.c.b16 %v2860, %v2856
  %v3321 = vpack.c.b16 %v2861, %v2857
  %v3322 = vpack.c.b16 %v2862, %v2858
  %v3323 = vpack.c.b16 %v2863, %v2859
  %v3324 = vpack.c.b16 %v2868, %v2864
  %v3325 = vpack.c.b16 %v2869, %v2865
  %v3326 = vpack.c.b16 %v2870, %v2866
  %v3327 = vpack.c.b16 %v2871, %v2867
  %v3328 = vpack.c.b16 %v2876, %v2872
  %v3329 = vpack.c.b16 %v2877, %v2873
  %v3330 = vpack.c.b16 %v2878, %v2874
  %v3331 = vpack.c.b16 %v2879, %v2875
  %v3332 = vpack.c.b16 %v2884, %v2880
  %v3333 = vpack.c.b16 %v2885, %v2881
  %v3334 = vpack.c.b16 %v2886, %v2882
  %v3335 = vpack.c.b16 %v2887, %v2883
  %v3336 = vpack.c.b16 %v2892, %v2888
  %v3337 = vpack.c.b16 %v2893, %v2889
  %v3338 = vpack.c.b16 %v2894, %v2890
  %v3339 = vpack.c.b16 %v2895, %v2891
  %v3340 = vpack.c.b16 %v2900, %v2896
  %v3341 = vpack.c.b16 %v2901, %v2897
  %v3342 = vpack.c.b16 %v2902, %v2898
  %v3343 = vpack.c.b16 %v2903, %v2899
  %v3344 = vpack.c.b16 %v2908, %v2904
  %v3345 = vpack.c.b16 %v2909, %v2905
  %v3346 = vpack.c.b16 %v2910, %v2906
  %v3347 = vpack.c.b16 %v2911, %v2907
  %v3348 = vpack.c.b16 %v2916, %v2912
  %v3349 = vpack.c.b16 %v2917, %v2913
  %v3350 = vpack.c.b16 %v2918, %v2914
  %v3351 = vpack.c.b16 %v2919, %v2915
  %v3352 = vpack.c.b16 %v2924, %v2920
  %v3353 = vpack.c.b16 %v2925, %v2921
  %v3354 = vpack.c.b16 %v2926, %v2922
  %v3355 = vpack.c.b16 %v2927, %v2923
  %v3356 = vpack.c.b16 %v2932, %v2928
  %v3357 = vpack.c.b16 %v2933, %v2929
  %v3358 = vpack.c.b16 %v2934, %v2930
  %v3359 = vpack.c.b16 %v2935, %v2931
  %v3360 = vpack.c.b16 %v2940, %v2936
  %v3361 = vpack.c.b16 %v2941, %v2937
  %v3362 = vpack.c.b16 %v2942, %v2938
  %v3363 = vpack.c.b16 %v2943, %v2939
  %v3364 = vpack.c.b16 %v2948, %v2944
  %v3365 = vpack.c.b16 %v2949, %v2945
  %v3366 = vpack.c.b16 %v2950, %v2946
  %v3367 = vpack.c.b16 %v2951, %v2947
  %v3368 = vpack.c.b16 %v2956, %v2952
  %v3369 = vpack.c.b16 %v2957, %v2953
  %v3370 = vpack.c.b16 %v2958, %v2954
  %v3371 = vpack.c.b16 %v2959, %v2955
  %v3372 = vpack.c.b16 %v2964, %v2960
  %v3373 = vpack.c.b16 %v2965, %v2961
  %v3374 = vpack.c.b16 %v2966, %v2962
  %v3375 = vpack.c.b16 %v2967, %v2963
  %v3376 = vpack.c.b16 %v2972, %v2968
  %v3377 = vpack.c.b16 %v2973, %v2969
  %v3378 = vpack.c.b16 %v2974, %v2970
  %v3379 = vpack.c.b16 %v2975, %v2971
  %v3380 = vpack.c.b16 %v2980, %v2976
  %v3381 = vpack.c.b16 %v2981, %v2977
  %v3382 = vpack.c.b16 %v2982, %v2978
  %v3383 = vpack.c.b16 %v2983, %v2979
  %v3384 = vpack.c.b16 %v2988, %v2984
  %v3385 = vpack.c.b16 %v2989, %v2985
  %v3386 = vpack.c.b16 %v2990, %v2986
  %v3387 = vpack.c.b16 %v2991, %v2987
  %v3388 = vpack.c.b16 %v2996, %v2992
  %v3389 = vpack.c.b16 %v2997, %v2993
  %v3390 = vpack.c.b16 %v2998, %v2994
  %v3391 = vpack.c.b16 %v2999, %v2995
  %v3392 = vpack.c.b16 %v3004, %v3000
  %v3393 = vpack.c.b16 %v3005, %v3001
  %v3394 = vpack.c.b16 %v3006, %v3002
  %v3395 = vpack.c.b16 %v3007, %v3003
  %v3396 = vpack.c.b16 %v3012, %v3008
  %v3397 = vpack.c.b16 %v3013, %v3009
  %v3398 = vpack.c.b16 %v3014, %v3010
  %v3399 = vpack.c.b16 %v3015, %v3011
  %v3400 = vpack.c.b16 %v3020, %v3016
  %v3401 = vpack.c.b16 %v3021, %v3017
  %v3402 = vpack.c.b16 %v3022, %v3018
  %v3403 = vpack.c.b16 %v3023, %v3019
  %v3404 = vpack.c.b16 %v3028, %v3024
  %v3405 = vpack.c.b16 %v3029, %v3025
  %v3406 = vpack.c.b16 %v3030, %v3026
  %v3407 = vpack.c.b16 %v3031, %v3027
  %v3408 = vpack.c.b16 %v3036, %v3032
  %v3409 = vpack.c.b16 %v3037, %v3033
  %v3410 = vpack.c.b16 %v3038, %v3034
  %v3411 = vpack.c.b16 %v3039, %v3035
  %v3412 = vpack.c.b16 %v3044, %v3040
  %v3413 = vpack.c.b16 %v3045, %v3041
  %v3414 = vpack.c.b16 %v3046, %v3042
  %v3415 = vpack.c.b16 %v3047, %v3043
  %v3416 = vpack.c.b16 %v3052, %v3048
  %v3417 = vpack.c.b16 %v3053, %v3049
  %v3418 = vpack.c.b16 %v3054, %v3050
  %v3419 = vpack.c.b16 %v3055, %v3051
  %v3420 = vpack.c.b16 %v3060, %v3056
  %v3421 = vpack.c.b16 %v3061, %v3057
  %v3422 = vpack.c.b16 %v3062, %v3058
  %v3423 = vpack.c.b16 %v3063, %v3059
  %v3424 = vpack.c.b16 %v3068, %v3064
  %v3425 = vpack.c.b16 %v3069, %v3065
  %v3426 = vpack.c.b16 %v3070, %v3066
  %v3427 = vpack.c.b16 %v3071, %v3067
  %v3428 = vpack.c.b16 %v3076, %v3072
  %v3429 = vpack.c.b16 %v3077, %v3073
  %v3430 = vpack.c.b16 %v3078, %v3074
  %v3431 = vpack.c.b16 %v3079, %v3075
  %v3432 = vpack.c.b16 %v3084, %v3080
  %v3433 = vpack.c.b16 %v3085, %v3081
  %v3434 = vpack.c.b16 %v3086, %v3082
  %v3435 = vpack.c.b16 %v3087, %v3083
  %v3436 = vpack.c.b16 %v3092, %v3088
  %v3437 = vpack.c.b16 %v3093, %v3089
  %v3438 = vpack.c.b16 %v3094, %v3090
  %v3439 = vpack.c.b16 %v3095, %v3091
  %v3440 = vpack.c.b16 %v3100, %v3096
  %v3441 = vpack.c.b16 %v3101, %v3097
  %v3442 = vpack.c.b16 %v3102, %v3098
  %v3443 = vpack.c.b16 %v3103, %v3099
  %v3444 = vpack.c.b16 %v3108, %v3104
  %v3445 = vpack.c.b16 %v3109, %v3105
  %v3446 = vpack.c.b16 %v3110, %v3106
  %v3447 = vpack.c.b16 %v3111, %v3107
  %v3448 = vpack.c.b16 %v3116, %v3112
  %v3449 = vpack.c.b16 %v3117, %v3113
  %v3450 = vpack.c.b16 %v3118, %v3114
  %v3451 = vpack.c.b16 %v3119, %v3115
  %v3452 = vpack.c.b16 %v3124, %v3120
  %v3453 = vpack.c.b16 %v3125, %v3121
  %v3454 = vpack.c.b16 %v3126, %v3122
  %v3455 = vpack.c.b16 %v3127, %v3123
  %v3456 = vpack.c.b16 %v3132, %v3128
  %v3457 = vpack.c.b16 %v3133, %v3129
  %v3458 = vpack.c.b16 %v3134, %v3130
  %v3459 = vpack.c.b16 %v3135, %v3131
  %v3460 = vpack.c.b16 %v3140, %v3136
  %v3461 = vpack.c.b16 %v3141, %v3137
  %v3462 = vpack.c.b16 %v3142, %v3138
  %v3463 = vpack.c.b16 %v3143, %v3139
  %v3464 = vpack.c.b16 %v3148, %v3144
  %v3465 = vpack.c.b16 %v3149, %v3145
  %v3466 = vpack.c.b16 %v3150, %v3146
  %v3467 = vpack.c.b16 %v3151, %v3147
  %v3468 = vpack.c.b16 %v3156, %v3152
  %v3469 = vpack.c.b16 %v3157, %v3153
  %v3470 = vpack.c.b16 %v3158, %v3154
  %v3471 = vpack.c.b16 %v3159, %v3155
  %v3472 = vpack.c.b16 %v3164, %v3160
  %v3473 = vpack.c.b16 %v3165, %v3161
  %v3474 = vpack.c.b16 %v3166, %v3162
  %v3475 = vpack.c.b16 %v3167, %v3163
  %v3476 = vpack.c.b16 %v3172, %v3168
  %v3477 = vpack.c.b16 %v3173, %v3169
  %v3478 = vpack.c.b16 %v3174, %v3170
  %v3479 = vpack.c.b16 %v3175, %v3171
  %v3480 = vpack.c.b16 %v3180, %v3176
  %v3481 = vpack.c.b16 %v3181, %v3177
  %v3482 = vpack.c.b16 %v3182, %v3178
  %v3483 = vpack.c.b16 %v3183, %v3179
  %v3484 = vpack.c.b16 %v3188, %v3184
  %v3485 = vpack.c.b16 %v3189, %v3185
  %v3486 = vpack.c.b16 %v3190, %v3186
  %v3487 = vpack.c.b16 %v3191, %v3187
  %v3488 = vpack.c.b16 %v3196, %v3192
  %v3489 = vpack.c.b16 %v3197, %v3193
  %v3490 = vpack.c.b16 %v3198, %v3194
  %v3491 = vpack.c.b16 %v3199, %v3195
  %v3492 = vpack.c.b16 %v3204, %v3200
  %v3493 = vpack.c.b16 %v3205, %v3201
  %v3494 = vpack.c.b16 %v3206, %v3202
  %v3495 = vpack.c.b16 %v3207, %v3203
  %v3496 = vpack.c.b16 %v3212, %v3208
  %v3497 = vpack.c.b16 %v3213, %v3209
  %v3498 = vpack.c.b16 %v3214, %v3210
  %v3499 = vpack.c.b16 %v3215, %v3211
  %v3500 = vpack.c.b16 %v3220, %v3216
  %v3501 = vpack.c.b16 %v3221, %v3217
  %v3502 = vpack.c.b16 %v3222, %v3218
  %v3503 = vpack.c.b16 %v3223, %v3219
  %v3504 = vpack.c.b16 %v3228, %v3224
  %v3505 = vpack.c.b16 %v3229, %v3225
  %v3506 = vpack.c.b16 %v3230, %v3226
  %v3507 = vpack.c.b16 %v3231, %v3227
  %v3508 = vpack.c.b16 %v3236, %v3232
  %v3509 = vpack.c.b16 %v3237, %v3233
  %v3510 = vpack.c.b16 %v3238, %v3234
  %v3511 = vpack.c.b16 %v3239, %v3235
  %v3512 = vpack.c.b16 %v3244, %v3240
  %v3513 = vpack.c.b16 %v3245, %v3241
  %v3514 = vpack.c.b16 %v3246, %v3242
  %v3515 = vpack.c.b16 %v3247, %v3243
  %v3516 = vpack.c.b16 %v3252, %v3248
  %v3517 = vpack.c.b16 %v3253, %v3249
  %v3518 = vpack.c.b16 %v3254, %v3250
  %v3519 = vpack.c.b16 %v3255, %v3251
  %v3520 = vpack.c.b16 %v3260, %v3256
  %v3521 = vpack.c.b16 %v3261, %v3257
  %v3522 = vpack.c.b16 %v3262, %v3258
  %v3523 = vpack.c.b16 %v3263, %v3259
  %v3524 = vpack.c.b16 %v3268, %v3264
  %v3525 = vpack.c.b16 %v3269, %v3265
  %v3526 = vpack.c.b16 %v3270, %v3266
  %v3527 = vpack.c.b16 %v3271, %v3267
  %3784 = vmatpush.bf16.msra.mxu0 %v3300
  %3785 = vmatpush.bf16.msra.mxu0 %v3296
  %3786 = vmatpush.bf16.msra.mxu0 %v3292
  %3787 = vmatpush.bf16.msra.mxu0 %v3288
  %3788 = vmatpush.bf16.msra.mxu0 %v3284
  %3789 = vmatpush.bf16.msra.mxu0 %v3280
  %3790 = vmatpush.bf16.msra.mxu0 %v3276
  %3791 = vmatpush.bf16.msra.mxu0 %v3272
  %3792 = vmatmul.bf16.gmra.mxu0 %v2222
  %v3793 = vpop.f32.mrf.mxu0
  %v3794 = vadd.f32 %v2496, %v3793
  %v3795 = vpop.f32.mrf.mxu0
  %v3796 = vadd.f32 %v2496, %v3795
  %3797 = vmatmul.bf16.gmra.mxu0 %v2230
  %v3798 = vpop.f32.mrf.mxu0
  %v3799 = vadd.f32 %v2496, %v3798
  %v3800 = vpop.f32.mrf.mxu0
  %3801 = vdwg.mxu0
  %3802 = vmatpush.bf16.msra.mxu0 %v3332
  %3803 = vmatpush.bf16.msra.mxu0 %v3328
  %3804 = vmatpush.bf16.msra.mxu0 %v3324
  %3805 = vmatpush.bf16.msra.mxu0 %v3320
  %3806 = vmatpush.bf16.msra.mxu0 %v3316
  %3807 = vmatpush.bf16.msra.mxu0 %v3312
  %3808 = vmatpush.bf16.msra.mxu0 %v3308
  %3809 = vmatpush.bf16.msra.mxu0 %v3304
  %3810 = vmatmul.bf16.gmra.mxu0 %v2223
  %v3811 = vpop.f32.mrf.mxu0
  %v3812 = vadd.f32 %v3794, %v3811
  %v3813 = vpop.f32.mrf.mxu0
  %v3814 = vadd.f32 %v3796, %v3813
  %3815 = vmatmul.bf16.gmra.mxu0 %v2231
  %v3816 = vpop.f32.mrf.mxu0
  %v3817 = vadd.f32 %v3799, %v3816
  %v3818 = vpop.f32.mrf.mxu0
  %3819 = vdwg.mxu0
  %3820 = vmatpush.bf16.msra.mxu0 %v3364
  %3821 = vmatpush.bf16.msra.mxu0 %v3360
  %3822 = vmatpush.bf16.msra.mxu0 %v3356
  %3823 = vmatpush.bf16.msra.mxu0 %v3352
  %3824 = vmatpush.bf16.msra.mxu0 %v3348
  %3825 = vmatpush.bf16.msra.mxu0 %v3344
  %3826 = vmatpush.bf16.msra.mxu0 %v3340
  %3827 = vmatpush.bf16.msra.mxu0 %v3336
  %3828 = vmatmul.bf16.gmra.mxu0 %v2224
  %v3829 = vpop.f32.mrf.mxu0
  %v3830 = vadd.f32 %v3812, %v3829
  %v3831 = vpop.f32.mrf.mxu0
  %v3832 = vadd.f32 %v3814, %v3831
  %3833 = vmatmul.bf16.gmra.mxu0 %v2232
  %v3834 = vpop.f32.mrf.mxu0
  %v3835 = vadd.f32 %v3817, %v3834
  %v3836 = vpop.f32.mrf.mxu0
  %3837 = vdwg.mxu0
  %3838 = vmatpush.bf16.msra.mxu0 %v3396
  %3839 = vmatpush.bf16.msra.mxu0 %v3392
  %3840 = vmatpush.bf16.msra.mxu0 %v3388
  %3841 = vmatpush.bf16.msra.mxu0 %v3384
  %3842 = vmatpush.bf16.msra.mxu0 %v3380
  %3843 = vmatpush.bf16.msra.mxu0 %v3376
  %3844 = vmatpush.bf16.msra.mxu0 %v3372
  %3845 = vmatpush.bf16.msra.mxu0 %v3368
  %3846 = vmatmul.bf16.gmra.mxu0 %v2225
  %v3847 = vpop.f32.mrf.mxu0
  %v3848 = vadd.f32 %v3830, %v3847
  %v3849 = vpop.f32.mrf.mxu0
  %v3850 = vadd.f32 %v3832, %v3849
  %3851 = vmatmul.bf16.gmra.mxu0 %v2233
  %v3852 = vpop.f32.mrf.mxu0
  %v3853 = vadd.f32 %v3835, %v3852
  %v3854 = vpop.f32.mrf.mxu0
  %3855 = vdwg.mxu0
  %3856 = vmatpush.bf16.msra.mxu0 %v3428
  %3857 = vmatpush.bf16.msra.mxu0 %v3424
  %3858 = vmatpush.bf16.msra.mxu0 %v3420
  %3859 = vmatpush.bf16.msra.mxu0 %v3416
  %3860 = vmatpush.bf16.msra.mxu0 %v3412
  %3861 = vmatpush.bf16.msra.mxu0 %v3408
  %3862 = vmatpush.bf16.msra.mxu0 %v3404
  %3863 = vmatpush.bf16.msra.mxu0 %v3400
  %3864 = vmatmul.bf16.gmra.mxu0 %v2226
  %v3865 = vpop.f32.mrf.mxu0
  %v3866 = vadd.f32 %v3848, %v3865
  %v3867 = vpop.f32.mrf.mxu0
  %v3868 = vadd.f32 %v3850, %v3867
  %3869 = vmatmul.bf16.gmra.mxu0 %v2234
  %v3870 = vpop.f32.mrf.mxu0
  %v3871 = vadd.f32 %v3853, %v3870
  %v3872 = vpop.f32.mrf.mxu0
  %3873 = vdwg.mxu0
  %3874 = vmatpush.bf16.msra.mxu0 %v3460
  %3875 = vmatpush.bf16.msra.mxu0 %v3456
  %3876 = vmatpush.bf16.msra.mxu0 %v3452
  %3877 = vmatpush.bf16.msra.mxu0 %v3448
  %3878 = vmatpush.bf16.msra.mxu0 %v3444
  %3879 = vmatpush.bf16.msra.mxu0 %v3440
  %3880 = vmatpush.bf16.msra.mxu0 %v3436
  %3881 = vmatpush.bf16.msra.mxu0 %v3432
  %3882 = vmatmul.bf16.gmra.mxu0 %v2227
  %v3883 = vpop.f32.mrf.mxu0
  %v3884 = vadd.f32 %v3866, %v3883
  %v3885 = vpop.f32.mrf.mxu0
  %v3886 = vadd.f32 %v3868, %v3885
  %3887 = vmatmul.bf16.gmra.mxu0 %v2235
  %v3888 = vpop.f32.mrf.mxu0
  %v3889 = vadd.f32 %v3871, %v3888
  %v3890 = vpop.f32.mrf.mxu0
  %3891 = vdwg.mxu0
  %3892 = vmatpush.bf16.msra.mxu0 %v3492
  %3893 = vmatpush.bf16.msra.mxu0 %v3488
  %3894 = vmatpush.bf16.msra.mxu0 %v3484
  %3895 = vmatpush.bf16.msra.mxu0 %v3480
  %3896 = vmatpush.bf16.msra.mxu0 %v3476
  %3897 = vmatpush.bf16.msra.mxu0 %v3472
  %3898 = vmatpush.bf16.msra.mxu0 %v3468
  %3899 = vmatpush.bf16.msra.mxu0 %v3464
  %3900 = vmatmul.bf16.gmra.mxu0 %v2228
  %v3901 = vpop.f32.mrf.mxu0
  %v3902 = vadd.f32 %v3884, %v3901
  %v3903 = vpop.f32.mrf.mxu0
  %v3904 = vadd.f32 %v3886, %v3903
  %3905 = vmatmul.bf16.gmra.mxu0 %v2236
  %v3906 = vpop.f32.mrf.mxu0
  %v3907 = vadd.f32 %v3889, %v3906
  %v3908 = vpop.f32.mrf.mxu0
  %3909 = vdwg.mxu0
  %3910 = vmatpush.bf16.msra.mxu0 %v3524
  %3911 = vmatpush.bf16.msra.mxu0 %v3520
  %3912 = vmatpush.bf16.msra.mxu0 %v3516
  %3913 = vmatpush.bf16.msra.mxu0 %v3512
  %3914 = vmatpush.bf16.msra.mxu0 %v3508
  %3915 = vmatpush.bf16.msra.mxu0 %v3504
  %3916 = vmatpush.bf16.msra.mxu0 %v3500
  %3917 = vmatpush.bf16.msra.mxu0 %v3496
  %3918 = vmatmul.bf16.gmra.mxu0 %v2229
  %v3919 = vpop.f32.mrf.mxu0
  %v3920 = vadd.f32 %v3902, %v3919
  %v3921 = vpop.f32.mrf.mxu0
  %v3922 = vadd.f32 %v3904, %v3921
  %3923 = vmatmul.bf16.gmra.mxu0 %v2237
  %v3924 = vpop.f32.mrf.mxu0
  %v3925 = vadd.f32 %v3907, %v3924
  %v3926 = vpop.f32.mrf.mxu0
  %3927 = vdwg.mxu0
  %3928 = vmatpush.bf16.msra.mxu0 %v3301
  %3929 = vmatpush.bf16.msra.mxu0 %v3297
  %3930 = vmatpush.bf16.msra.mxu0 %v3293
  %3931 = vmatpush.bf16.msra.mxu0 %v3289
  %3932 = vmatpush.bf16.msra.mxu0 %v3285
  %3933 = vmatpush.bf16.msra.mxu0 %v3281
  %3934 = vmatpush.bf16.msra.mxu0 %v3277
  %3935 = vmatpush.bf16.msra.mxu0 %v3273
  %3936 = vmatmul.bf16.gmra.mxu0 %v2222
  %v3937 = vpop.f32.mrf.mxu0
  %v3938 = vadd.f32 %v2497, %v3937
  %v3939 = vpop.f32.mrf.mxu0
  %v3940 = vadd.f32 %v2497, %v3939
  %3941 = vmatmul.bf16.gmra.mxu0 %v2230
  %v3942 = vpop.f32.mrf.mxu0
  %v3943 = vadd.f32 %v2497, %v3942
  %v3944 = vpop.f32.mrf.mxu0
  %3945 = vdwg.mxu0
  %3946 = vmatpush.bf16.msra.mxu0 %v3333
  %3947 = vmatpush.bf16.msra.mxu0 %v3329
  %3948 = vmatpush.bf16.msra.mxu0 %v3325
  %3949 = vmatpush.bf16.msra.mxu0 %v3321
  %3950 = vmatpush.bf16.msra.mxu0 %v3317
  %3951 = vmatpush.bf16.msra.mxu0 %v3313
  %3952 = vmatpush.bf16.msra.mxu0 %v3309
  %3953 = vmatpush.bf16.msra.mxu0 %v3305
  %3954 = vmatmul.bf16.gmra.mxu0 %v2223
  %v3955 = vpop.f32.mrf.mxu0
  %v3956 = vadd.f32 %v3938, %v3955
  %v3957 = vpop.f32.mrf.mxu0
  %v3958 = vadd.f32 %v3940, %v3957
  %3959 = vmatmul.bf16.gmra.mxu0 %v2231
  %v3960 = vpop.f32.mrf.mxu0
  %v3961 = vadd.f32 %v3943, %v3960
  %v3962 = vpop.f32.mrf.mxu0
  %3963 = vdwg.mxu0
  %3964 = vmatpush.bf16.msra.mxu0 %v3365
  %3965 = vmatpush.bf16.msra.mxu0 %v3361
  %3966 = vmatpush.bf16.msra.mxu0 %v3357
  %3967 = vmatpush.bf16.msra.mxu0 %v3353
  %3968 = vmatpush.bf16.msra.mxu0 %v3349
  %3969 = vmatpush.bf16.msra.mxu0 %v3345
  %3970 = vmatpush.bf16.msra.mxu0 %v3341
  %3971 = vmatpush.bf16.msra.mxu0 %v3337
  %3972 = vmatmul.bf16.gmra.mxu0 %v2224
  %v3973 = vpop.f32.mrf.mxu0
  %v3974 = vadd.f32 %v3956, %v3973
  %v3975 = vpop.f32.mrf.mxu0
  %v3976 = vadd.f32 %v3958, %v3975
  %3977 = vmatmul.bf16.gmra.mxu0 %v2232
  %v3978 = vpop.f32.mrf.mxu0
  %v3979 = vadd.f32 %v3961, %v3978
  %v3980 = vpop.f32.mrf.mxu0
  %3981 = vdwg.mxu0
  %3982 = vmatpush.bf16.msra.mxu0 %v3397
  %3983 = vmatpush.bf16.msra.mxu0 %v3393
  %3984 = vmatpush.bf16.msra.mxu0 %v3389
  %3985 = vmatpush.bf16.msra.mxu0 %v3385
  %3986 = vmatpush.bf16.msra.mxu0 %v3381
  %3987 = vmatpush.bf16.msra.mxu0 %v3377
  %3988 = vmatpush.bf16.msra.mxu0 %v3373
  %3989 = vmatpush.bf16.msra.mxu0 %v3369
  %3990 = vmatmul.bf16.gmra.mxu0 %v2225
  %v3991 = vpop.f32.mrf.mxu0
  %v3992 = vadd.f32 %v3974, %v3991
  %v3993 = vpop.f32.mrf.mxu0
  %v3994 = vadd.f32 %v3976, %v3993
  %3995 = vmatmul.bf16.gmra.mxu0 %v2233
  %v3996 = vpop.f32.mrf.mxu0
  %v3997 = vadd.f32 %v3979, %v3996
  %v3998 = vpop.f32.mrf.mxu0
  %3999 = vdwg.mxu0
  %4000 = vmatpush.bf16.msra.mxu0 %v3429
  %4001 = vmatpush.bf16.msra.mxu0 %v3425
  %4002 = vmatpush.bf16.msra.mxu0 %v3421
  %4003 = vmatpush.bf16.msra.mxu0 %v3417
  %4004 = vmatpush.bf16.msra.mxu0 %v3413
  %4005 = vmatpush.bf16.msra.mxu0 %v3409
  %4006 = vmatpush.bf16.msra.mxu0 %v3405
  %4007 = vmatpush.bf16.msra.mxu0 %v3401
  %4008 = vmatmul.bf16.gmra.mxu0 %v2226
  %v4009 = vpop.f32.mrf.mxu0
  %v4010 = vadd.f32 %v3992, %v4009
  %v4011 = vpop.f32.mrf.mxu0
  %v4012 = vadd.f32 %v3994, %v4011
  %4013 = vmatmul.bf16.gmra.mxu0 %v2234
  %v4014 = vpop.f32.mrf.mxu0
  %v4015 = vadd.f32 %v3997, %v4014
  %v4016 = vpop.f32.mrf.mxu0
  %4017 = vdwg.mxu0
  %4018 = vmatpush.bf16.msra.mxu0 %v3461
  %4019 = vmatpush.bf16.msra.mxu0 %v3457
  %4020 = vmatpush.bf16.msra.mxu0 %v3453
  %4021 = vmatpush.bf16.msra.mxu0 %v3449
  %4022 = vmatpush.bf16.msra.mxu0 %v3445
  %4023 = vmatpush.bf16.msra.mxu0 %v3441
  %4024 = vmatpush.bf16.msra.mxu0 %v3437
  %4025 = vmatpush.bf16.msra.mxu0 %v3433
  %4026 = vmatmul.bf16.gmra.mxu0 %v2227
  %v4027 = vpop.f32.mrf.mxu0
  %v4028 = vadd.f32 %v4010, %v4027
  %v4029 = vpop.f32.mrf.mxu0
  %v4030 = vadd.f32 %v4012, %v4029
  %4031 = vmatmul.bf16.gmra.mxu0 %v2235
  %v4032 = vpop.f32.mrf.mxu0
  %v4033 = vadd.f32 %v4015, %v4032
  %v4034 = vpop.f32.mrf.mxu0
  %4035 = vdwg.mxu0
  %4036 = vmatpush.bf16.msra.mxu0 %v3493
  %4037 = vmatpush.bf16.msra.mxu0 %v3489
  %4038 = vmatpush.bf16.msra.mxu0 %v3485
  %4039 = vmatpush.bf16.msra.mxu0 %v3481
  %4040 = vmatpush.bf16.msra.mxu0 %v3477
  %4041 = vmatpush.bf16.msra.mxu0 %v3473
  %4042 = vmatpush.bf16.msra.mxu0 %v3469
  %4043 = vmatpush.bf16.msra.mxu0 %v3465
  %4044 = vmatmul.bf16.gmra.mxu0 %v2228
  %v4045 = vpop.f32.mrf.mxu0
  %v4046 = vadd.f32 %v4028, %v4045
  %v4047 = vpop.f32.mrf.mxu0
  %v4048 = vadd.f32 %v4030, %v4047
  %4049 = vmatmul.bf16.gmra.mxu0 %v2236
  %v4050 = vpop.f32.mrf.mxu0
  %v4051 = vadd.f32 %v4033, %v4050
  %v4052 = vpop.f32.mrf.mxu0
  %4053 = vdwg.mxu0
  %4054 = vmatpush.bf16.msra.mxu0 %v3525
  %4055 = vmatpush.bf16.msra.mxu0 %v3521
  %4056 = vmatpush.bf16.msra.mxu0 %v3517
  %4057 = vmatpush.bf16.msra.mxu0 %v3513
  %4058 = vmatpush.bf16.msra.mxu0 %v3509
  %4059 = vmatpush.bf16.msra.mxu0 %v3505
  %4060 = vmatpush.bf16.msra.mxu0 %v3501
  %4061 = vmatpush.bf16.msra.mxu0 %v3497
  %4062 = vmatmul.bf16.gmra.mxu0 %v2229
  %v4063 = vpop.f32.mrf.mxu0
  %v4064 = vadd.f32 %v4046, %v4063
  %v4065 = vpop.f32.mrf.mxu0
  %v4066 = vadd.f32 %v4048, %v4065
  %4067 = vmatmul.bf16.gmra.mxu0 %v2237
  %v4068 = vpop.f32.mrf.mxu0
  %v4069 = vadd.f32 %v4051, %v4068
  %v4070 = vpop.f32.mrf.mxu0
  %4071 = vdwg.mxu0
  %4072 = vmatpush.bf16.msra.mxu0 %v3302
  %4073 = vmatpush.bf16.msra.mxu0 %v3298
  %4074 = vmatpush.bf16.msra.mxu0 %v3294
  %4075 = vmatpush.bf16.msra.mxu0 %v3290
  %4076 = vmatpush.bf16.msra.mxu0 %v3286
  %4077 = vmatpush.bf16.msra.mxu0 %v3282
  %4078 = vmatpush.bf16.msra.mxu0 %v3278
  %4079 = vmatpush.bf16.msra.mxu0 %v3274
  %4080 = vmatmul.bf16.gmra.mxu0 %v2222
  %v4081 = vpop.f32.mrf.mxu0
  %v4082 = vadd.f32 %v2498, %v4081
  %v4083 = vpop.f32.mrf.mxu0
  %v4084 = vadd.f32 %v2498, %v4083
  %4085 = vmatmul.bf16.gmra.mxu0 %v2230
  %v4086 = vpop.f32.mrf.mxu0
  %v4087 = vadd.f32 %v2498, %v4086
  %v4088 = vpop.f32.mrf.mxu0
  %4089 = vdwg.mxu0
  %4090 = vmatpush.bf16.msra.mxu0 %v3334
  %4091 = vmatpush.bf16.msra.mxu0 %v3330
  %4092 = vmatpush.bf16.msra.mxu0 %v3326
  %4093 = vmatpush.bf16.msra.mxu0 %v3322
  %4094 = vmatpush.bf16.msra.mxu0 %v3318
  %4095 = vmatpush.bf16.msra.mxu0 %v3314
  %4096 = vmatpush.bf16.msra.mxu0 %v3310
  %4097 = vmatpush.bf16.msra.mxu0 %v3306
  %4098 = vmatmul.bf16.gmra.mxu0 %v2223
  %v4099 = vpop.f32.mrf.mxu0
  %v4100 = vadd.f32 %v4082, %v4099
  %v4101 = vpop.f32.mrf.mxu0
  %v4102 = vadd.f32 %v4084, %v4101
  %4103 = vmatmul.bf16.gmra.mxu0 %v2231
  %v4104 = vpop.f32.mrf.mxu0
  %v4105 = vadd.f32 %v4087, %v4104
  %v4106 = vpop.f32.mrf.mxu0
  %4107 = vdwg.mxu0
  %4108 = vmatpush.bf16.msra.mxu0 %v3366
  %4109 = vmatpush.bf16.msra.mxu0 %v3362
  %4110 = vmatpush.bf16.msra.mxu0 %v3358
  %4111 = vmatpush.bf16.msra.mxu0 %v3354
  %4112 = vmatpush.bf16.msra.mxu0 %v3350
  %4113 = vmatpush.bf16.msra.mxu0 %v3346
  %4114 = vmatpush.bf16.msra.mxu0 %v3342
  %4115 = vmatpush.bf16.msra.mxu0 %v3338
  %4116 = vmatmul.bf16.gmra.mxu0 %v2224
  %v4117 = vpop.f32.mrf.mxu0
  %v4118 = vadd.f32 %v4100, %v4117
  %v4119 = vpop.f32.mrf.mxu0
  %v4120 = vadd.f32 %v4102, %v4119
  %4121 = vmatmul.bf16.gmra.mxu0 %v2232
  %v4122 = vpop.f32.mrf.mxu0
  %v4123 = vadd.f32 %v4105, %v4122
  %v4124 = vpop.f32.mrf.mxu0
  %4125 = vdwg.mxu0
  %4126 = vmatpush.bf16.msra.mxu0 %v3398
  %4127 = vmatpush.bf16.msra.mxu0 %v3394
  %4128 = vmatpush.bf16.msra.mxu0 %v3390
  %4129 = vmatpush.bf16.msra.mxu0 %v3386
  %4130 = vmatpush.bf16.msra.mxu0 %v3382
  %4131 = vmatpush.bf16.msra.mxu0 %v3378
  %4132 = vmatpush.bf16.msra.mxu0 %v3374
  %4133 = vmatpush.bf16.msra.mxu0 %v3370
  %4134 = vmatmul.bf16.gmra.mxu0 %v2225
  %v4135 = vpop.f32.mrf.mxu0
  %v4136 = vadd.f32 %v4118, %v4135
  %v4137 = vpop.f32.mrf.mxu0
  %v4138 = vadd.f32 %v4120, %v4137
  %4139 = vmatmul.bf16.gmra.mxu0 %v2233
  %v4140 = vpop.f32.mrf.mxu0
  %v4141 = vadd.f32 %v4123, %v4140
  %v4142 = vpop.f32.mrf.mxu0
  %4143 = vdwg.mxu0
  %4144 = vmatpush.bf16.msra.mxu0 %v3430
  %4145 = vmatpush.bf16.msra.mxu0 %v3426
  %4146 = vmatpush.bf16.msra.mxu0 %v3422
  %4147 = vmatpush.bf16.msra.mxu0 %v3418
  %4148 = vmatpush.bf16.msra.mxu0 %v3414
  %4149 = vmatpush.bf16.msra.mxu0 %v3410
  %4150 = vmatpush.bf16.msra.mxu0 %v3406
  %4151 = vmatpush.bf16.msra.mxu0 %v3402
  %4152 = vmatmul.bf16.gmra.mxu0 %v2226
  %v4153 = vpop.f32.mrf.mxu0
  %v4154 = vadd.f32 %v4136, %v4153
  %v4155 = vpop.f32.mrf.mxu0
  %v4156 = vadd.f32 %v4138, %v4155
  %4157 = vmatmul.bf16.gmra.mxu0 %v2234
  %v4158 = vpop.f32.mrf.mxu0
  %v4159 = vadd.f32 %v4141, %v4158
  %v4160 = vpop.f32.mrf.mxu0
  %4161 = vdwg.mxu0
  %4162 = vmatpush.bf16.msra.mxu0 %v3462
  %4163 = vmatpush.bf16.msra.mxu0 %v3458
  %4164 = vmatpush.bf16.msra.mxu0 %v3454
  %4165 = vmatpush.bf16.msra.mxu0 %v3450
  %4166 = vmatpush.bf16.msra.mxu0 %v3446
  %4167 = vmatpush.bf16.msra.mxu0 %v3442
  %4168 = vmatpush.bf16.msra.mxu0 %v3438
  %4169 = vmatpush.bf16.msra.mxu0 %v3434
  %4170 = vmatmul.bf16.gmra.mxu0 %v2227
  %v4171 = vpop.f32.mrf.mxu0
  %v4172 = vadd.f32 %v4154, %v4171
  %v4173 = vpop.f32.mrf.mxu0
  %v4174 = vadd.f32 %v4156, %v4173
  %4175 = vmatmul.bf16.gmra.mxu0 %v2235
  %v4176 = vpop.f32.mrf.mxu0
  %v4177 = vadd.f32 %v4159, %v4176
  %v4178 = vpop.f32.mrf.mxu0
  %4179 = vdwg.mxu0
  %4180 = vmatpush.bf16.msra.mxu0 %v3494
  %4181 = vmatpush.bf16.msra.mxu0 %v3490
  %4182 = vmatpush.bf16.msra.mxu0 %v3486
  %4183 = vmatpush.bf16.msra.mxu0 %v3482
  %4184 = vmatpush.bf16.msra.mxu0 %v3478
  %4185 = vmatpush.bf16.msra.mxu0 %v3474
  %4186 = vmatpush.bf16.msra.mxu0 %v3470
  %4187 = vmatpush.bf16.msra.mxu0 %v3466
  %4188 = vmatmul.bf16.gmra.mxu0 %v2228
  %v4189 = vpop.f32.mrf.mxu0
  %v4190 = vadd.f32 %v4172, %v4189
  %v4191 = vpop.f32.mrf.mxu0
  %v4192 = vadd.f32 %v4174, %v4191
  %4193 = vmatmul.bf16.gmra.mxu0 %v2236
  %v4194 = vpop.f32.mrf.mxu0
  %v4195 = vadd.f32 %v4177, %v4194
  %v4196 = vpop.f32.mrf.mxu0
  %4197 = vdwg.mxu0
  %4198 = vmatpush.bf16.msra.mxu0 %v3526
  %4199 = vmatpush.bf16.msra.mxu0 %v3522
  %4200 = vmatpush.bf16.msra.mxu0 %v3518
  %4201 = vmatpush.bf16.msra.mxu0 %v3514
  %4202 = vmatpush.bf16.msra.mxu0 %v3510
  %4203 = vmatpush.bf16.msra.mxu0 %v3506
  %4204 = vmatpush.bf16.msra.mxu0 %v3502
  %4205 = vmatpush.bf16.msra.mxu0 %v3498
  %4206 = vmatmul.bf16.gmra.mxu0 %v2229
  %v4207 = vpop.f32.mrf.mxu0
  %v4208 = vadd.f32 %v4190, %v4207
  %v4209 = vpop.f32.mrf.mxu0
  %v4210 = vadd.f32 %v4192, %v4209
  %4211 = vmatmul.bf16.gmra.mxu0 %v2237
  %v4212 = vpop.f32.mrf.mxu0
  %v4213 = vadd.f32 %v4195, %v4212
  %v4214 = vpop.f32.mrf.mxu0
  %4215 = vdwg.mxu0
  %4216 = vmatpush.bf16.msra.mxu0 %v3303
  %4217 = vmatpush.bf16.msra.mxu0 %v3299
  %4218 = vmatpush.bf16.msra.mxu0 %v3295
  %4219 = vmatpush.bf16.msra.mxu0 %v3291
  %4220 = vmatpush.bf16.msra.mxu0 %v3287
  %4221 = vmatpush.bf16.msra.mxu0 %v3283
  %4222 = vmatpush.bf16.msra.mxu0 %v3279
  %4223 = vmatpush.bf16.msra.mxu0 %v3275
  %4224 = vmatmul.bf16.gmra.mxu0 %v2222
  %v4225 = vpop.f32.mrf.mxu0
  %v4226 = vadd.f32 %v2499, %v4225
  %v4227 = vpop.f32.mrf.mxu0
  %v4228 = vadd.f32 %v2499, %v4227
  %4229 = vmatmul.bf16.gmra.mxu0 %v2230
  %v4230 = vpop.f32.mrf.mxu0
  %v4231 = vadd.f32 %v2499, %v4230
  %v4232 = vpop.f32.mrf.mxu0
  %4233 = vdwg.mxu0
  %4234 = vmatpush.bf16.msra.mxu0 %v3335
  %4235 = vmatpush.bf16.msra.mxu0 %v3331
  %4236 = vmatpush.bf16.msra.mxu0 %v3327
  %4237 = vmatpush.bf16.msra.mxu0 %v3323
  %4238 = vmatpush.bf16.msra.mxu0 %v3319
  %4239 = vmatpush.bf16.msra.mxu0 %v3315
  %4240 = vmatpush.bf16.msra.mxu0 %v3311
  %4241 = vmatpush.bf16.msra.mxu0 %v3307
  %4242 = vmatmul.bf16.gmra.mxu0 %v2223
  %v4243 = vpop.f32.mrf.mxu0
  %v4244 = vadd.f32 %v4226, %v4243
  %v4245 = vpop.f32.mrf.mxu0
  %v4246 = vadd.f32 %v4228, %v4245
  %4247 = vmatmul.bf16.gmra.mxu0 %v2231
  %v4248 = vpop.f32.mrf.mxu0
  %v4249 = vadd.f32 %v4231, %v4248
  %v4250 = vpop.f32.mrf.mxu0
  %4251 = vdwg.mxu0
  %4252 = vmatpush.bf16.msra.mxu0 %v3367
  %4253 = vmatpush.bf16.msra.mxu0 %v3363
  %4254 = vmatpush.bf16.msra.mxu0 %v3359
  %4255 = vmatpush.bf16.msra.mxu0 %v3355
  %4256 = vmatpush.bf16.msra.mxu0 %v3351
  %4257 = vmatpush.bf16.msra.mxu0 %v3347
  %4258 = vmatpush.bf16.msra.mxu0 %v3343
  %4259 = vmatpush.bf16.msra.mxu0 %v3339
  %4260 = vmatmul.bf16.gmra.mxu0 %v2224
  %v4261 = vpop.f32.mrf.mxu0
  %v4262 = vadd.f32 %v4244, %v4261
  %v4263 = vpop.f32.mrf.mxu0
  %v4264 = vadd.f32 %v4246, %v4263
  %4265 = vmatmul.bf16.gmra.mxu0 %v2232
  %v4266 = vpop.f32.mrf.mxu0
  %v4267 = vadd.f32 %v4249, %v4266
  %v4268 = vpop.f32.mrf.mxu0
  %4269 = vdwg.mxu0
  %4270 = vmatpush.bf16.msra.mxu0 %v3399
  %4271 = vmatpush.bf16.msra.mxu0 %v3395
  %4272 = vmatpush.bf16.msra.mxu0 %v3391
  %4273 = vmatpush.bf16.msra.mxu0 %v3387
  %4274 = vmatpush.bf16.msra.mxu0 %v3383
  %4275 = vmatpush.bf16.msra.mxu0 %v3379
  %4276 = vmatpush.bf16.msra.mxu0 %v3375
  %4277 = vmatpush.bf16.msra.mxu0 %v3371
  %4278 = vmatmul.bf16.gmra.mxu0 %v2225
  %v4279 = vpop.f32.mrf.mxu0
  %v4280 = vadd.f32 %v4262, %v4279
  %v4281 = vpop.f32.mrf.mxu0
  %v4282 = vadd.f32 %v4264, %v4281
  %4283 = vmatmul.bf16.gmra.mxu0 %v2233
  %v4284 = vpop.f32.mrf.mxu0
  %v4285 = vadd.f32 %v4267, %v4284
  %v4286 = vpop.f32.mrf.mxu0
  %4287 = vdwg.mxu0
  %4288 = vmatpush.bf16.msra.mxu0 %v3431
  %4289 = vmatpush.bf16.msra.mxu0 %v3427
  %4290 = vmatpush.bf16.msra.mxu0 %v3423
  %4291 = vmatpush.bf16.msra.mxu0 %v3419
  %4292 = vmatpush.bf16.msra.mxu0 %v3415
  %4293 = vmatpush.bf16.msra.mxu0 %v3411
  %4294 = vmatpush.bf16.msra.mxu0 %v3407
  %4295 = vmatpush.bf16.msra.mxu0 %v3403
  %4296 = vmatmul.bf16.gmra.mxu0 %v2226
  %v4297 = vpop.f32.mrf.mxu0
  %v4298 = vadd.f32 %v4280, %v4297
  %v4299 = vpop.f32.mrf.mxu0
  %v4300 = vadd.f32 %v4282, %v4299
  %4301 = vmatmul.bf16.gmra.mxu0 %v2234
  %v4302 = vpop.f32.mrf.mxu0
  %v4303 = vadd.f32 %v4285, %v4302
  %v4304 = vpop.f32.mrf.mxu0
  %4305 = vdwg.mxu0
  %4306 = vmatpush.bf16.msra.mxu0 %v3463
  %4307 = vmatpush.bf16.msra.mxu0 %v3459
  %4308 = vmatpush.bf16.msra.mxu0 %v3455
  %4309 = vmatpush.bf16.msra.mxu0 %v3451
  %4310 = vmatpush.bf16.msra.mxu0 %v3447
  %4311 = vmatpush.bf16.msra.mxu0 %v3443
  %4312 = vmatpush.bf16.msra.mxu0 %v3439
  %4313 = vmatpush.bf16.msra.mxu0 %v3435
  %4314 = vmatmul.bf16.gmra.mxu0 %v2227
  %v4315 = vpop.f32.mrf.mxu0
  %v4316 = vadd.f32 %v4298, %v4315
  %v4317 = vpop.f32.mrf.mxu0
  %v4318 = vadd.f32 %v4300, %v4317
  %4319 = vmatmul.bf16.gmra.mxu0 %v2235
  %v4320 = vpop.f32.mrf.mxu0
  %v4321 = vadd.f32 %v4303, %v4320
  %v4322 = vpop.f32.mrf.mxu0
  %4323 = vdwg.mxu0
  %4324 = vmatpush.bf16.msra.mxu0 %v3495
  %4325 = vmatpush.bf16.msra.mxu0 %v3491
  %4326 = vmatpush.bf16.msra.mxu0 %v3487
  %4327 = vmatpush.bf16.msra.mxu0 %v3483
  %4328 = vmatpush.bf16.msra.mxu0 %v3479
  %4329 = vmatpush.bf16.msra.mxu0 %v3475
  %4330 = vmatpush.bf16.msra.mxu0 %v3471
  %4331 = vmatpush.bf16.msra.mxu0 %v3467
  %4332 = vmatmul.bf16.gmra.mxu0 %v2228
  %v4333 = vpop.f32.mrf.mxu0
  %v4334 = vadd.f32 %v4316, %v4333
  %v4335 = vpop.f32.mrf.mxu0
  %v4336 = vadd.f32 %v4318, %v4335
  %4337 = vmatmul.bf16.gmra.mxu0 %v2236
  %v4338 = vpop.f32.mrf.mxu0
  %v4339 = vadd.f32 %v4321, %v4338
  %v4340 = vpop.f32.mrf.mxu0
  %4341 = vdwg.mxu0
  %4342 = vmatpush.bf16.msra.mxu0 %v3527
  %4343 = vmatpush.bf16.msra.mxu0 %v3523
  %4344 = vmatpush.bf16.msra.mxu0 %v3519
  %4345 = vmatpush.bf16.msra.mxu0 %v3515
  %4346 = vmatpush.bf16.msra.mxu0 %v3511
  %4347 = vmatpush.bf16.msra.mxu0 %v3507
  %4348 = vmatpush.bf16.msra.mxu0 %v3503
  %4349 = vmatpush.bf16.msra.mxu0 %v3499
  %4350 = vmatmul.bf16.gmra.mxu0 %v2229
  %v4351 = vpop.f32.mrf.mxu0
  %v4352 = vadd.f32 %v4334, %v4351
  %v4353 = vpop.f32.mrf.mxu0
  %v4354 = vadd.f32 %v4336, %v4353
  %4355 = vmatmul.bf16.gmra.mxu0 %v2237
  %v4356 = vpop.f32.mrf.mxu0
  %v4357 = vadd.f32 %v4339, %v4356
  %v4358 = vpop.f32.mrf.mxu0
  %4359 = vdwg.mxu0
  %v4360 = vmax.f32 %v3920, 0.0
  %v4361 = vmax.f32 %v4064, 0.0
  %v4362 = vmax.f32 %v4208, 0.0
  %v4363 = vmax.f32 %v4352, 0.0
  %v4364 = vmax.f32 %v3922, 0.0
  %v4365 = vmax.f32 %v4066, 0.0
  %v4366 = vmax.f32 %v4210, 0.0
  %v4367 = vmax.f32 %v4354, 0.0
  %v4368 = vmax.f32 %v3925, 0.0
  %v4369 = vmax.f32 %v4069, 0.0
  %v4370 = vmax.f32 %v4213, 0.0
  %v4371 = vmax.f32 %v4357, 0.0
  %4372 = vst [vmem:[%s8] sm:$0xff] %v4360
  %4373 = vst [vmem:[%s8 + $0x8] sm:$0xff] %v4361
  %4374 = vst [vmem:[%s8 + $0x10] sm:$0xff] %v4362
  %4375 = vst [vmem:[%s8 + $0x18] sm:$0xff] %v4363
  %4376 = vst [vmem:[%s8 + $0x20] sm:$0xff] %v4364
  %4377 = vst [vmem:[%s8 + $0x28] sm:$0xff] %v4365
  %4378 = vst [vmem:[%s8 + $0x30] sm:$0xff] %v4366
  %4379 = vst [vmem:[%s8 + $0x38] sm:$0xff] %v4367
  %4380 = vst [vmem:[%s8 + $0x40] sm:$0xff] %v4368
  %4381 = vst [vmem:[%s8 + $0x48] sm:$0xff] %v4369
  %4382 = vst [vmem:[%s8 + $0x50] sm:$0xff] %v4370
  %4383 = vst [vmem:[%s8 + $0x58] sm:$0xff] %v4371
  %v4384 = vpack.c.bf16 %v4364, %v4360
  %v4385 = vpack.c.bf16 %v4365, %v4361
  %v4386 = vpack.c.bf16 %v4366, %v4362
  %v4387 = vpack.c.bf16 %v4367, %v4363
  %v4388 = vpack.c.bf16 %v4368, %v4368
  %v4389 = vpack.c.bf16 %v4369, %v4369
  %v4390 = vpack.c.bf16 %v4370, %v4370
  %v4391 = vpack.c.bf16 %v4371, %v4371
  %v4392 = vld [vmem:[%s5] sm:$0xf]
  %v4393 = vld [vmem:[%s5 + $0x4] sm:$0xf]
  %v4394 = vld [vmem:[%s5 + $0x8] sm:$0xf]
  %v4395 = vld [vmem:[%s5 + $0xc] sm:$0xf]
  %v4396 = vld [vmem:[%s5 + $0x10] sm:$0xf]
  %v4397 = vld [vmem:[%s5 + $0x14] sm:$0xf]
  %v4398 = vld [vmem:[%s5 + $0x18] sm:$0xf]
  %v4399 = vld [vmem:[%s5 + $0x1c] sm:$0xf]
  %v4400 = vld [vmem:[%s5 + $0x20] sm:$0xf]
  %v4401 = vld [vmem:[%s5 + $0x24] sm:$0xf]
  %v4402 = vld [vmem:[%s5 + $0x28] sm:$0xf]
  %v4403 = vld [vmem:[%s5 + $0x2c] sm:$0xf]
  %v4404 = vld [vmem:[%s5 + $0x30] sm:$0xf]
  %v4405 = vld [vmem:[%s5 + $0x34] sm:$0xf]
  %v4406 = vld [vmem:[%s5 + $0x38] sm:$0xf]
  %v4407 = vld [vmem:[%s5 + $0x3c] sm:$0xf]
  %v4408 = vld [vmem:[%s5 + $0x40] sm:$0xf]
  %v4409 = vld [vmem:[%s5 + $0x44] sm:$0xf]
  %v4410 = vld [vmem:[%s5 + $0x48] sm:$0xf]
  %v4411 = vld [vmem:[%s5 + $0x4c] sm:$0xf]
  %v4412 = vld [vmem:[%s5 + $0x50] sm:$0xf]
  %v4413 = vld [vmem:[%s5 + $0x54] sm:$0xf]
  %v4414 = vld [vmem:[%s5 + $0x58] sm:$0xf]
  %v4415 = vld [vmem:[%s5 + $0x5c] sm:$0xf]
  %v4416 = vld [vmem:[%s5 + $0x60] sm:$0xf]
  %v4417 = vld [vmem:[%s5 + $0x64] sm:$0xf]
  %v4418 = vld [vmem:[%s5 + $0x68] sm:$0xf]
  %v4419 = vld [vmem:[%s5 + $0x6c] sm:$0xf]
  %v4420 = vld [vmem:[%s5 + $0x70] sm:$0xf]
  %v4421 = vld [vmem:[%s5 + $0x74] sm:$0xf]
  %v4422 = vld [vmem:[%s5 + $0x78] sm:$0xf]
  %v4423 = vld [vmem:[%s5 + $0x7c] sm:$0xf]
  %v4424 = vld [vmem:[%s5 + $0x80] sm:$0xf]
  %v4425 = vld [vmem:[%s5 + $0x84] sm:$0xf]
  %v4426 = vld [vmem:[%s5 + $0x88] sm:$0xf]
  %v4427 = vld [vmem:[%s5 + $0x8c] sm:$0xf]
  %v4428 = vld [vmem:[%s5 + $0x90] sm:$0xf]
  %v4429 = vld [vmem:[%s5 + $0x94] sm:$0xf]
  %v4430 = vld [vmem:[%s5 + $0x98] sm:$0xf]
  %v4431 = vld [vmem:[%s5 + $0x9c] sm:$0xf]
  %v4432 = vld [vmem:[%s5 + $0xa0] sm:$0xf]
  %v4433 = vld [vmem:[%s5 + $0xa4] sm:$0xf]
  %v4434 = vld [vmem:[%s5 + $0xa8] sm:$0xf]
  %v4435 = vld [vmem:[%s5 + $0xac] sm:$0xf]
  %v4436 = vld [vmem:[%s5 + $0xb0] sm:$0xf]
  %v4437 = vld [vmem:[%s5 + $0xb4] sm:$0xf]
  %v4438 = vld [vmem:[%s5 + $0xb8] sm:$0xf]
  %v4439 = vld [vmem:[%s5 + $0xbc] sm:$0xf]
  %v4440 = vld [vmem:[%s5 + $0xc0] sm:$0xf]
  %v4441 = vld [vmem:[%s5 + $0xc4] sm:$0xf]
  %v4442 = vld [vmem:[%s5 + $0xc8] sm:$0xf]
  %v4443 = vld [vmem:[%s5 + $0xcc] sm:$0xf]
  %v4444 = vld [vmem:[%s5 + $0xd0] sm:$0xf]
  %v4445 = vld [vmem:[%s5 + $0xd4] sm:$0xf]
  %v4446 = vld [vmem:[%s5 + $0xd8] sm:$0xf]
  %v4447 = vld [vmem:[%s5 + $0xdc] sm:$0xf]
  %v4448 = vld [vmem:[%s5 + $0xe0] sm:$0xf]
  %v4449 = vld [vmem:[%s5 + $0xe4] sm:$0xf]
  %v4450 = vld [vmem:[%s5 + $0xe8] sm:$0xf]
  %v4451 = vld [vmem:[%s5 + $0xec] sm:$0xf]
  %v4452 = vld [vmem:[%s5 + $0xf0] sm:$0xf]
  %v4453 = vld [vmem:[%s5 + $0xf4] sm:$0xf]
  %v4454 = vld [vmem:[%s5 + $0xf8] sm:$0xf]
  %v4455 = vld [vmem:[%s5 + $0xfc] sm:$0xf]
  %v4456 = vld [vmem:[%s6] sm:$0x1]
  %v4458 = vperm.slane %v4456, 0
  %v4524 = vunpack.c.l.b16 %v4392
  %v4525 = vunpack.c.l.b16 %v4393
  %v4526 = vunpack.c.l.b16 %v4394
  %v4527 = vunpack.c.l.b16 %v4395
  %v4528 = vunpack.c.l.b16 %v4396
  %v4529 = vunpack.c.l.b16 %v4397
  %v4530 = vunpack.c.l.b16 %v4398
  %v4531 = vunpack.c.l.b16 %v4399
  %v4532 = vunpack.c.l.b16 %v4400
  %v4533 = vunpack.c.l.b16 %v4401
  %v4534 = vunpack.c.l.b16 %v4402
  %v4535 = vunpack.c.l.b16 %v4403
  %v4536 = vunpack.c.l.b16 %v4404
  %v4537 = vunpack.c.l.b16 %v4405
  %v4538 = vunpack.c.l.b16 %v4406
  %v4539 = vunpack.c.l.b16 %v4407
  %v4540 = vunpack.c.l.b16 %v4408
  %v4541 = vunpack.c.l.b16 %v4409
  %v4542 = vunpack.c.l.b16 %v4410
  %v4543 = vunpack.c.l.b16 %v4411
  %v4544 = vunpack.c.l.b16 %v4412
  %v4545 = vunpack.c.l.b16 %v4413
  %v4546 = vunpack.c.l.b16 %v4414
  %v4547 = vunpack.c.l.b16 %v4415
  %v4548 = vunpack.c.l.b16 %v4416
  %v4549 = vunpack.c.l.b16 %v4417
  %v4550 = vunpack.c.l.b16 %v4418
  %v4551 = vunpack.c.l.b16 %v4419
  %v4552 = vunpack.c.l.b16 %v4420
  %v4553 = vunpack.c.l.b16 %v4421
  %v4554 = vunpack.c.l.b16 %v4422
  %v4555 = vunpack.c.l.b16 %v4423
  %v4556 = vunpack.c.l.b16 %v4424
  %v4557 = vunpack.c.l.b16 %v4425
  %v4558 = vunpack.c.l.b16 %v4426
  %v4559 = vunpack.c.l.b16 %v4427
  %v4560 = vunpack.c.l.b16 %v4428
  %v4561 = vunpack.c.l.b16 %v4429
  %v4562 = vunpack.c.l.b16 %v4430
  %v4563 = vunpack.c.l.b16 %v4431
  %v4564 = vunpack.c.l.b16 %v4432
  %v4565 = vunpack.c.l.b16 %v4433
  %v4566 = vunpack.c.l.b16 %v4434
  %v4567 = vunpack.c.l.b16 %v4435
  %v4568 = vunpack.c.l.b16 %v4436
  %v4569 = vunpack.c.l.b16 %v4437
  %v4570 = vunpack.c.l.b16 %v4438
  %v4571 = vunpack.c.l.b16 %v4439
  %v4572 = vunpack.c.l.b16 %v4440
  %v4573 = vunpack.c.l.b16 %v4441
  %v4574 = vunpack.c.l.b16 %v4442
  %v4575 = vunpack.c.l.b16 %v4443
  %v4576 = vunpack.c.l.b16 %v4444
  %v4577 = vunpack.c.l.b16 %v4445
  %v4578 = vunpack.c.l.b16 %v4446
  %v4579 = vunpack.c.l.b16 %v4447
  %v4580 = vunpack.c.l.b16 %v4448
  %v4581 = vunpack.c.l.b16 %v4449
  %v4582 = vunpack.c.l.b16 %v4450
  %v4583 = vunpack.c.l.b16 %v4451
  %v4584 = vunpack.c.l.b16 %v4452
  %v4585 = vunpack.c.l.b16 %v4453
  %v4586 = vunpack.c.l.b16 %v4454
  %v4587 = vunpack.c.l.b16 %v4455
  %v4588 = vpack.c.b16 %v4525, %v4524
  %v4589 = vpack.c.b16 %v4527, %v4526
  %v4590 = vpack.c.b16 %v4529, %v4528
  %v4591 = vpack.c.b16 %v4531, %v4530
  %v4592 = vpack.c.b16 %v4533, %v4532
  %v4593 = vpack.c.b16 %v4535, %v4534
  %v4594 = vpack.c.b16 %v4537, %v4536
  %v4595 = vpack.c.b16 %v4539, %v4538
  %v4596 = vpack.c.b16 %v4541, %v4540
  %v4597 = vpack.c.b16 %v4543, %v4542
  %v4598 = vpack.c.b16 %v4545, %v4544
  %v4599 = vpack.c.b16 %v4547, %v4546
  %v4600 = vpack.c.b16 %v4549, %v4548
  %v4601 = vpack.c.b16 %v4551, %v4550
  %v4602 = vpack.c.b16 %v4553, %v4552
  %v4603 = vpack.c.b16 %v4555, %v4554
  %v4604 = vpack.c.b16 %v4557, %v4556
  %v4605 = vpack.c.b16 %v4559, %v4558
  %v4606 = vpack.c.b16 %v4561, %v4560
  %v4607 = vpack.c.b16 %v4563, %v4562
  %v4608 = vpack.c.b16 %v4565, %v4564
  %v4609 = vpack.c.b16 %v4567, %v4566
  %v4610 = vpack.c.b16 %v4569, %v4568
  %v4611 = vpack.c.b16 %v4571, %v4570
  %v4612 = vpack.c.b16 %v4573, %v4572
  %v4613 = vpack.c.b16 %v4575, %v4574
  %v4614 = vpack.c.b16 %v4577, %v4576
  %v4615 = vpack.c.b16 %v4579, %v4578
  %v4616 = vpack.c.b16 %v4581, %v4580
  %v4617 = vpack.c.b16 %v4583, %v4582
  %v4618 = vpack.c.b16 %v4585, %v4584
  %v4619 = vpack.c.b16 %v4587, %v4586
  %4652 = vmatpush.bf16.msra.mxu0 %v4595
  %4653 = vmatpush.bf16.msra.mxu0 %v4594
  %4654 = vmatpush.bf16.msra.mxu0 %v4593
  %4655 = vmatpush.bf16.msra.mxu0 %v4592
  %4656 = vmatpush.bf16.msra.mxu0 %v4591
  %4657 = vmatpush.bf16.msra.mxu0 %v4590
  %4658 = vmatpush.bf16.msra.mxu0 %v4589
  %4659 = vmatpush.bf16.msra.mxu0 %v4588
  %4660 = vmatmul.bf16.gmra.mxu0 %v4384
  %v4661 = vpop.f32.mrf.mxu0
  %v4662 = vadd.f32 %v4458, %v4661
  %v4663 = vpop.f32.mrf.mxu0
  %v4664 = vadd.f32 %v4458, %v4663
  %4665 = vmatmul.bf16.gmra.mxu0 %v4388
  %v4666 = vpop.f32.mrf.mxu0
  %v4667 = vadd.f32 %v4458, %v4666
  %v4668 = vpop.f32.mrf.mxu0
  %4669 = vdwg.mxu0
  %4670 = vmatpush.bf16.msra.mxu0 %v4603
  %4671 = vmatpush.bf16.msra.mxu0 %v4602
  %4672 = vmatpush.bf16.msra.mxu0 %v4601
  %4673 = vmatpush.bf16.msra.mxu0 %v4600
  %4674 = vmatpush.bf16.msra.mxu0 %v4599
  %4675 = vmatpush.bf16.msra.mxu0 %v4598
  %4676 = vmatpush.bf16.msra.mxu0 %v4597
  %4677 = vmatpush.bf16.msra.mxu0 %v4596
  %4678 = vmatmul.bf16.gmra.mxu0 %v4385
  %v4679 = vpop.f32.mrf.mxu0
  %v4680 = vadd.f32 %v4662, %v4679
  %v4681 = vpop.f32.mrf.mxu0
  %v4682 = vadd.f32 %v4664, %v4681
  %4683 = vmatmul.bf16.gmra.mxu0 %v4389
  %v4684 = vpop.f32.mrf.mxu0
  %v4685 = vadd.f32 %v4667, %v4684
  %v4686 = vpop.f32.mrf.mxu0
  %4687 = vdwg.mxu0
  %4688 = vmatpush.bf16.msra.mxu0 %v4611
  %4689 = vmatpush.bf16.msra.mxu0 %v4610
  %4690 = vmatpush.bf16.msra.mxu0 %v4609
  %4691 = vmatpush.bf16.msra.mxu0 %v4608
  %4692 = vmatpush.bf16.msra.mxu0 %v4607
  %4693 = vmatpush.bf16.msra.mxu0 %v4606
  %4694 = vmatpush.bf16.msra.mxu0 %v4605
  %4695 = vmatpush.bf16.msra.mxu0 %v4604
  %4696 = vmatmul.bf16.gmra.mxu0 %v4386
  %v4697 = vpop.f32.mrf.mxu0
  %v4698 = vadd.f32 %v4680, %v4697
  %v4699 = vpop.f32.mrf.mxu0
  %v4700 = vadd.f32 %v4682, %v4699
  %4701 = vmatmul.bf16.gmra.mxu0 %v4390
  %v4702 = vpop.f32.mrf.mxu0
  %v4703 = vadd.f32 %v4685, %v4702
  %v4704 = vpop.f32.mrf.mxu0
  %4705 = vdwg.mxu0
  %4706 = vmatpush.bf16.msra.mxu0 %v4619
  %4707 = vmatpush.bf16.msra.mxu0 %v4618
  %4708 = vmatpush.bf16.msra.mxu0 %v4617
  %4709 = vmatpush.bf16.msra.mxu0 %v4616
  %4710 = vmatpush.bf16.msra.mxu0 %v4615
  %4711 = vmatpush.bf16.msra.mxu0 %v4614
  %4712 = vmatpush.bf16.msra.mxu0 %v4613
  %4713 = vmatpush.bf16.msra.mxu0 %v4612
  %4714 = vmatmul.bf16.gmra.mxu0 %v4387
  %v4715 = vpop.f32.mrf.mxu0
  %v4716 = vadd.f32 %v4698, %v4715
  %v4717 = vpop.f32.mrf.mxu0
  %v4718 = vadd.f32 %v4700, %v4717
  %4719 = vmatmul.bf16.gmra.mxu0 %v4391
  %v4720 = vpop.f32.mrf.mxu0
  %v4721 = vadd.f32 %v4703, %v4720
  %v4722 = vpop.f32.mrf.mxu0
  %4723 = vdwg.mxu0
  %4724 = vst [vmem:[%s7] sm:$0xff] %v4716
  %4725 = vst [vmem:[%s7 + $0x8] sm:$0xff] %v4718
  %4726 = vst [vmem:[%s7 + $0x10] sm:$0xff] %v4721
  // Predicated region
  $region30: #{gnn_forward.1} parent=0 // pred_check
    _
  $region31: #{gnn_forward.1} parent=0 // pred_check_branch
    %4728 = sbr.rel (0) target = $region33
  $region32: #{gnn_forward.1} parent=0 // pred_region
    _
  $region33: #{gnn_forward.1} parent=0 // pred_fallthru
    _
  // Predicated region
  $region34: #{gnn_forward.1} parent=0 // pred_check
    _
  $region35: #{gnn_forward.1} parent=0 // pred_check_branch
    %4730 = sbr.rel (0) target = $region37
  $region36: #{gnn_forward.1} parent=0 // pred_region
    _
  $region37: #{gnn_forward.1} parent=0 // pred_fallthru
    _
  // Predicated region
  $region38: #{gnn_forward.1} parent=0 // pred_check
    _
  $region39: #{gnn_forward.1} parent=0 // pred_check_branch
    %4732 = sbr.rel (0) target = $region41
  $region40: #{gnn_forward.1} parent=0 // pred_region
    _
  $region41: #{gnn_forward.1} parent=0 // pred_fallthru
    _
  // Predicated region
  $region42: #{gnn_forward.1} parent=0 // pred_check
    _
  $region43: #{gnn_forward.1} parent=0 // pred_check_branch
    %4734 = sbr.rel (0) target = $region45
  $region44: #{gnn_forward.1} parent=0 // pred_region
    _
  $region45: #{gnn_forward.1} parent=0 // pred_fallthru
    _

</llo_original>
